<compile_context>
chip_gen: v6e
topology: v6e:2x2x1
jax: 0.10.0
libtpu: 0.0.40
codegen_flags: <defaults>
</compile_context>

<pallas_src>
import functools
import math

import jax
import jax.numpy as jnp
from jax.experimental import pallas as pl
from jax.experimental.pallas import tpu as pltpu

LN_EPS = 1e-12

PARAM_ORDER = [
    "wq", "bq", "wk", "bk", "wv", "bv",   # self-attention projections
    "wo", "bo", "g1", "b1",               # attention output dense + LN
    "wi", "bi",                           # intermediate dense (GELU)
    "w2", "b2", "g2", "b2b",              # output dense + LN
]
_BF16_WEIGHTS = frozenset({"wq", "wk", "wv", "wo", "wi", "w2"})


def _layer_norm(x, gamma, beta, eps=LN_EPS):
    mu = jnp.mean(x, axis=-1, keepdims=True)
    var = jnp.mean(jnp.square(x - mu), axis=-1, keepdims=True)
    return (x - mu) * jax.lax.rsqrt(var + eps) * gamma + beta


def _gelu(x, exact):
    if exact:
        # Original BERT gelu: x * 0.5 * (1 + erf(x / sqrt(2)))
        return 0.5 * x * (1.0 + jax.scipy.special.erf(x * (1.0 / math.sqrt(2.0))))
    # tanh approximation fallback (if erf has no Mosaic lowering)
    return 0.5 * x * (1.0 + jnp.tanh(
        math.sqrt(2.0 / math.pi) * (x + 0.044715 * x * x * x)))


def bert_layer_kernel(x_ref, mask_ref,
                      wq_ref, bq_ref, wk_ref, bk_ref, wv_ref, bv_ref,
                      wo_ref, bo_ref, g1_ref, b1_ref,
                      wi_ref, bi_ref, w2_ref, b2_ref, g2_ref, b2b_ref,
                      out_ref, k_scr, v_scr,
                      *, num_heads, head_dim, q_tile, diagonal_mask, exact_gelu):
    """One BERT layer. grid = (batch, num_query_tiles)."""
    nh, d, tq = num_heads, head_dim, q_tile
    S = x_ref.shape[1]
    qi = pl.program_id(1)

    def split_heads(t):
        # (rows, H) -> (nh, rows, d) via static lane slices (no 3-D transpose).
        return jnp.stack([t[:, h * d:(h + 1) * d] for h in range(nh)], axis=0)

    # --- K/V projections for the full sequence, once per batch element -------
    @pl.when(qi == 0)
    def _():
        xb = x_ref[0].astype(jnp.bfloat16)                         # (S, H)
        k2 = jnp.dot(xb, wk_ref[...],
                     preferred_element_type=jnp.float32) + bk_ref[...]
        v2 = jnp.dot(xb, wv_ref[...],
                     preferred_element_type=jnp.float32) + bv_ref[...]
        k_scr[...] = split_heads(k2).astype(jnp.bfloat16)          # (nh, S, d)
        v_scr[...] = split_heads(v2).astype(jnp.bfloat16)

    # --- Q projection for this query tile (1/sqrt(d) folded in once) ---------
    q0 = pl.multiple_of(qi * tq, tq)
    xq_f32 = x_ref[0, pl.ds(q0, tq), :].astype(jnp.float32)        # residual in
    xq = xq_f32.astype(jnp.bfloat16)
    scale = 1.0 / math.sqrt(d)
    q2 = (jnp.dot(xq, wq_ref[...],
                  preferred_element_type=jnp.float32) + bq_ref[...]) * scale
    q3 = split_heads(q2).astype(jnp.bfloat16)                      # (nh, tq, d)

    # --- batched-head attention scores + in-kernel mask bias, softmax in f32 -
    s = jnp.einsum('hqd,hkd->hqk', q3, k_scr[...],
                   preferred_element_type=jnp.float32)             # (nh, tq, S)
    keep = mask_ref[0]                                             # (1, S) {0,1}
    if diagonal_mask:
        rows = jax.lax.broadcasted_iota(jnp.int32, (tq, S), 0) + q0
        cols = jax.lax.broadcasted_iota(jnp.int32, (tq, S), 1)
        keep = jnp.where(cols <= rows, keep, 0.0)                  # (tq, S)
    bias = (1.0 - keep) * (-10000.0)
    s = s + bias[None]
    s = s - jnp.max(s, axis=-1, keepdims=True)                     # stable softmax
    p = jnp.exp(s)
    p = p * pl.reciprocal(jnp.sum(p, axis=-1, keepdims=True), approx=True)

    ctx = jnp.einsum('hqk,hkd->hqd', p.astype(jnp.bfloat16), v_scr[...],
                     preferred_element_type=jnp.float32)           # (nh, tq, d)
    ctx = jnp.concatenate([ctx[h] for h in range(nh)], axis=-1)    # (tq, H)

    # --- attention output dense + residual + LayerNorm (f32) -----------------
    attn = jnp.dot(ctx.astype(jnp.bfloat16), wo_ref[...],
                   preferred_element_type=jnp.float32) + bo_ref[...]
    attn = _layer_norm(attn + xq_f32, g1_ref[...], b1_ref[...])

    # --- hidden_intermediate: dense + GELU ------------------------------------
    inter = jnp.dot(attn.astype(jnp.bfloat16), wi_ref[...],
                    preferred_element_type=jnp.float32) + bi_ref[...]
    inter = _gelu(inter, exact_gelu)

    # --- output: dense + residual + LayerNorm ---------------------------------
    ffn = jnp.dot(inter.astype(jnp.bfloat16), w2_ref[...],
                  preferred_element_type=jnp.float32) + b2_ref[...]
    out = _layer_norm(ffn + attn, g2_ref[...], b2b_ref[...])
    out_ref[0] = out.astype(out_ref.dtype)


def bert_layer(x, mask_b1s, layer_params, *, num_heads, diagonal_mask,
               exact_gelu):
    B, S, H = x.shape
    assert H % num_heads == 0
    d = H // num_heads
    tq = 128 if S % 128 == 0 else S          # query tile (full S for short seqs)
    nq = S // tq

    def prep(name):
        p = layer_params[name]
        if name in _BF16_WEIGHTS:
            return p.astype(jnp.bfloat16)    # bf16 weights: MXU rate + half VMEM
        return p.astype(jnp.float32)

    params = [prep(n) for n in PARAM_ORDER]  # all 2-D arrays

    kernel = functools.partial(
        bert_layer_kernel, num_heads=num_heads, head_dim=d, q_tile=tq,
        diagonal_mask=diagonal_mask, exact_gelu=exact_gelu)

    def weight_spec(p):
        return pl.BlockSpec(p.shape, lambda b, qi: (0, 0))  # grid-invariant

    return pl.pallas_call(
        kernel,
        out_shape=jax.ShapeDtypeStruct((B, S, H), x.dtype),
        grid=(B, nq),
        in_specs=[pl.BlockSpec((1, S, H), lambda b, qi: (b, 0, 0)),
                  pl.BlockSpec((1, 1, S), lambda b, qi: (b, 0, 0))]
                 + [weight_spec(p) for p in params],
        out_specs=pl.BlockSpec((1, tq, H), lambda b, qi: (b, qi, 0)),
        scratch_shapes=[pltpu.VMEM((num_heads, S, d), jnp.bfloat16),
                        pltpu.VMEM((num_heads, S, d), jnp.bfloat16)],
        compiler_params=pltpu.CompilerParams(
            dimension_semantics=("parallel", "arbitrary"),
            vmem_limit_bytes=48 * 1024 * 1024),
    )(x, mask_b1s, *params)


def bert_encoder_untied(hidden_states, attention_mask, params, *,
                        num_heads, diagonal_mask=False,
                        output_all_encoded_layers=False, exact_gelu=True):
    """JAX wrapper matching BertEncoderUntied.forward.

    hidden_states: (B, S, H) float32
    attention_mask: (B, S) float {0, 1}
    """
    mask = attention_mask[:, None, :].astype(jnp.float32)   # (B, 1, S)
    all_encoder_layers = []
    h = hidden_states
    for layer_params in params:
        h = bert_layer(h, mask, layer_params, num_heads=num_heads,
                       diagonal_mask=diagonal_mask, exact_gelu=exact_gelu)
        if output_all_encoded_layers:
            all_encoder_layers.append(h)
    if not output_all_encoded_layers:
        all_encoder_layers.append(h)
    return all_encoder_layers


def init_params(key, num_layers, hidden, intermediate):
    """Deterministic synthetic parameters (weights ~ N(0, 0.02), zero biases)."""
    params = []
    for _ in range(num_layers):
        key, *ks = jax.random.split(key, 8)

        def w(k, shape):
            return jax.random.normal(k, shape, jnp.float32) * 0.02

        lp = {
            "wq": w(ks[0], (hidden, hidden)), "bq": jnp.zeros((1, hidden), jnp.float32),
            "wk": w(ks[1], (hidden, hidden)), "bk": jnp.zeros((1, hidden), jnp.float32),
            "wv": w(ks[2], (hidden, hidden)), "bv": jnp.zeros((1, hidden), jnp.float32),
            "wo": w(ks[3], (hidden, hidden)), "bo": jnp.zeros((1, hidden), jnp.float32),
            "g1": jnp.ones((1, hidden), jnp.float32), "b1": jnp.zeros((1, hidden), jnp.float32),
            "wi": w(ks[4], (hidden, intermediate)), "bi": jnp.zeros((1, intermediate), jnp.float32),
            "w2": w(ks[5], (intermediate, hidden)), "b2": jnp.zeros((1, hidden), jnp.float32),
            "g2": jnp.ones((1, hidden), jnp.float32), "b2b": jnp.zeros((1, hidden), jnp.float32),
        }
        params.append(lp)
    return params


if __name__ == "__main__":
    B, S, H, NUM_HEADS, INTER, NUM_LAYERS = 2, 8, 32, 4, 64, 2

    key = jax.random.PRNGKey(0)
    kx, kp = jax.random.split(key, 2)
    x = jax.random.normal(kx, (B, S, H), jnp.float32)
    # batch 1 has its last two tokens padded out
    attention_mask = jnp.ones((B, S), jnp.float32).at[1, S - 2:].set(0.0)
    params = init_params(kp, NUM_LAYERS, H, INTER)

    def run(exact):
        outs = bert_encoder_untied(x, attention_mask, params,
                                   num_heads=NUM_HEADS, diagonal_mask=False,
                                   output_all_encoded_layers=False,
                                   exact_gelu=exact)
        jax.block_until_ready(outs[-1])
        return outs

    try:
        outs = run(True)
    except Exception:
        # TODO(synk): exact erf-based GELU may lack a Mosaic lowering on some
        # JAX versions; fall back (once) to the tanh approximation of GELU.
        outs = run(False)

    out = outs[-1]
    assert out.shape == (B, S, H) and out.dtype == x.dtype
    assert bool(jnp.all(jnp.isfinite(out)))
    print("KERNEL_OK")
</pallas_src>

<mosaic_0001>
module attributes {stable_mosaic.version = 11 : i64} {
  func.func @bert_layer_kernel(%arg0: i32, %arg1: i32, %arg2: memref<1x8x32xf32, #tpu.memory_space<vmem>>, %arg3: memref<1x1x8xf32, #tpu.memory_space<vmem>>, %arg4: memref<32x32xbf16, #tpu.memory_space<vmem>>, %arg5: memref<1x32xf32, #tpu.memory_space<vmem>>, %arg6: memref<32x32xbf16, #tpu.memory_space<vmem>>, %arg7: memref<1x32xf32, #tpu.memory_space<vmem>>, %arg8: memref<32x32xbf16, #tpu.memory_space<vmem>>, %arg9: memref<1x32xf32, #tpu.memory_space<vmem>>, %arg10: memref<32x32xbf16, #tpu.memory_space<vmem>>, %arg11: memref<1x32xf32, #tpu.memory_space<vmem>>, %arg12: memref<1x32xf32, #tpu.memory_space<vmem>>, %arg13: memref<1x32xf32, #tpu.memory_space<vmem>>, %arg14: memref<32x64xbf16, #tpu.memory_space<vmem>>, %arg15: memref<1x64xf32, #tpu.memory_space<vmem>>, %arg16: memref<64x32xbf16, #tpu.memory_space<vmem>>, %arg17: memref<1x32xf32, #tpu.memory_space<vmem>>, %arg18: memref<1x32xf32, #tpu.memory_space<vmem>>, %arg19: memref<1x32xf32, #tpu.memory_space<vmem>>, %arg20: memref<1x8x32xf32, #tpu.memory_space<vmem>>, %arg21: memref<4x8x8xbf16, #tpu.memory_space<vmem>>, %arg22: memref<4x8x8xbf16, #tpu.memory_space<vmem>>) attributes {dimension_semantics = [#tpu.dimension_semantics<parallel>, #tpu.dimension_semantics<arbitrary>], iteration_bounds = array<i64: 2, 1>, scalar_prefetch = 0 : i64, scratch_operands = 2 : i64, tpu.core_type = #tpu.core_type<tc>, window_params = [{transform_indices = @transform_0, window_bounds = array<i64: 1, 8, 32>}, {transform_indices = @transform_1, window_bounds = array<i64: 1, 1, 8>}, {pipeline_mode = #tpu.pipeline_mode<synchronous>, transform_indices = @transform_2, window_bounds = array<i64: 32, 32>}, {pipeline_mode = #tpu.pipeline_mode<synchronous>, transform_indices = @transform_3, window_bounds = array<i64: 1, 32>}, {pipeline_mode = #tpu.pipeline_mode<synchronous>, transform_indices = @transform_4, window_bounds = array<i64: 32, 32>}, {pipeline_mode = #tpu.pipeline_mode<synchronous>, transform_indices = @transform_5, window_bounds = array<i64: 1, 32>}, {pipeline_mode = #tpu.pipeline_mode<synchronous>, transform_indices = @transform_6, window_bounds = array<i64: 32, 32>}, {pipeline_mode = #tpu.pipeline_mode<synchronous>, transform_indices = @transform_7, window_bounds = array<i64: 1, 32>}, {pipeline_mode = #tpu.pipeline_mode<synchronous>, transform_indices = @transform_8, window_bounds = array<i64: 32, 32>}, {pipeline_mode = #tpu.pipeline_mode<synchronous>, transform_indices = @transform_9, window_bounds = array<i64: 1, 32>}, {pipeline_mode = #tpu.pipeline_mode<synchronous>, transform_indices = @transform_10, window_bounds = array<i64: 1, 32>}, {pipeline_mode = #tpu.pipeline_mode<synchronous>, transform_indices = @transform_11, window_bounds = array<i64: 1, 32>}, {pipeline_mode = #tpu.pipeline_mode<synchronous>, transform_indices = @transform_12, window_bounds = array<i64: 32, 64>}, {pipeline_mode = #tpu.pipeline_mode<synchronous>, transform_indices = @transform_13, window_bounds = array<i64: 1, 64>}, {pipeline_mode = #tpu.pipeline_mode<synchronous>, transform_indices = @transform_14, window_bounds = array<i64: 64, 32>}, {pipeline_mode = #tpu.pipeline_mode<synchronous>, transform_indices = @transform_15, window_bounds = array<i64: 1, 32>}, {pipeline_mode = #tpu.pipeline_mode<synchronous>, transform_indices = @transform_16, window_bounds = array<i64: 1, 32>}, {pipeline_mode = #tpu.pipeline_mode<synchronous>, transform_indices = @transform_17, window_bounds = array<i64: 1, 32>}, {transform_indices = @transform_18, window_bounds = array<i64: 1, 8, 32>}]} {
    %c0_i32 = arith.constant 0 : i32
    %0 = arith.cmpi eq, %arg1, %c0_i32 : i32
    %1 = arith.extui %0 : i1 to i32
    %c0_i32_0 = arith.constant 0 : i32
    %2 = arith.cmpi ne, %1, %c0_i32_0 : i32
    scf.if %2 {
      %c0_61 = arith.constant 0 : index
      %c0_62 = arith.constant 0 : index
      %c0_63 = arith.constant 0 : index
      %138 = vector.load %arg2[%c0_61, %c0_62, %c0_63] : memref<1x8x32xf32, #tpu.memory_space<vmem>>, vector<1x8x32xf32>
      %139 = vector.shape_cast %138 : vector<1x8x32xf32> to vector<8x32xf32>
      %140 = arith.truncf %139 : vector<8x32xf32> to vector<8x32xbf16>
      %c0_64 = arith.constant 0 : index
      %c0_65 = arith.constant 0 : index
      %141 = vector.load %arg6[%c0_64, %c0_65] : memref<32x32xbf16, #tpu.memory_space<vmem>>, vector<32x32xbf16>
      %cst_66 = arith.constant dense<0.000000e+00> : vector<8x32xf32>
      %142 = tpu.matmul %140, %141, %cst_66 {dimension_numbers = #tpu.dot_dimension_numbers<[1], [0], [0], [1], [0, 0, 1, 1], [], []>} : vector<8x32xbf16>, vector<32x32xbf16>, vector<8x32xf32> -> vector<8x32xf32>
      %c0_67 = arith.constant 0 : index
      %c0_68 = arith.constant 0 : index
      %143 = vector.load %arg7[%c0_67, %c0_68] : memref<1x32xf32, #tpu.memory_space<vmem>>, vector<1x32xf32>
      %144 = vector.broadcast %143 : vector<1x32xf32> to vector<8x32xf32>
      %145 = arith.addf %142, %144 : vector<8x32xf32>
      %c0_69 = arith.constant 0 : index
      %c0_70 = arith.constant 0 : index
      %146 = vector.load %arg8[%c0_69, %c0_70] : memref<32x32xbf16, #tpu.memory_space<vmem>>, vector<32x32xbf16>
      %cst_71 = arith.constant dense<0.000000e+00> : vector<8x32xf32>
      %147 = tpu.matmul %140, %146, %cst_71 {dimension_numbers = #tpu.dot_dimension_numbers<[1], [0], [0], [1], [0, 0, 1, 1], [], []>} : vector<8x32xbf16>, vector<32x32xbf16>, vector<8x32xf32> -> vector<8x32xf32>
      %c0_72 = arith.constant 0 : index
      %c0_73 = arith.constant 0 : index
      %148 = vector.load %arg9[%c0_72, %c0_73] : memref<1x32xf32, #tpu.memory_space<vmem>>, vector<1x32xf32>
      %149 = vector.broadcast %148 : vector<1x32xf32> to vector<8x32xf32>
      %150 = arith.addf %147, %149 : vector<8x32xf32>
      %151 = vector.extract_strided_slice %145 {offsets = [0, 0], sizes = [8, 8], strides = [1, 1]} : vector<8x32xf32> to vector<8x8xf32>
      %152 = vector.extract_strided_slice %145 {offsets = [0, 8], sizes = [8, 8], strides = [1, 1]} : vector<8x32xf32> to vector<8x8xf32>
      %153 = vector.extract_strided_slice %145 {offsets = [0, 16], sizes = [8, 8], strides = [1, 1]} : vector<8x32xf32> to vector<8x8xf32>
      %154 = vector.extract_strided_slice %145 {offsets = [0, 24], sizes = [8, 8], strides = [1, 1]} : vector<8x32xf32> to vector<8x8xf32>
      %155 = vector.shape_cast %151 : vector<8x8xf32> to vector<1x8x8xf32>
      %156 = vector.shape_cast %152 : vector<8x8xf32> to vector<1x8x8xf32>
      %157 = vector.shape_cast %153 : vector<8x8xf32> to vector<1x8x8xf32>
      %158 = vector.shape_cast %154 : vector<8x8xf32> to vector<1x8x8xf32>
      %159 = tpu.concatenate %155, %156, %157, %158 in 0 : vector<1x8x8xf32>, vector<1x8x8xf32>, vector<1x8x8xf32>, vector<1x8x8xf32> -> vector<4x8x8xf32>
      %160 = arith.truncf %159 : vector<4x8x8xf32> to vector<4x8x8xbf16>
      %c0_74 = arith.constant 0 : index
      %c0_75 = arith.constant 0 : index
      %c0_76 = arith.constant 0 : index
      %161 = vector.load %arg21[%c0_74, %c0_75, %c0_76] : memref<4x8x8xbf16, #tpu.memory_space<vmem>>, vector<4x8x8xbf16>
      tpu.vector_store %arg21[%c0_74, %c0_75, %c0_76], %160 {strides = array<i32>} : memref<4x8x8xbf16, #tpu.memory_space<vmem>>, vector<4x8x8xbf16>,
      %162 = vector.extract_strided_slice %150 {offsets = [0, 0], sizes = [8, 8], strides = [1, 1]} : vector<8x32xf32> to vector<8x8xf32>
      %163 = vector.extract_strided_slice %150 {offsets = [0, 8], sizes = [8, 8], strides = [1, 1]} : vector<8x32xf32> to vector<8x8xf32>
      %164 = vector.extract_strided_slice %150 {offsets = [0, 16], sizes = [8, 8], strides = [1, 1]} : vector<8x32xf32> to vector<8x8xf32>
      %165 = vector.extract_strided_slice %150 {offsets = [0, 24], sizes = [8, 8], strides = [1, 1]} : vector<8x32xf32> to vector<8x8xf32>
      %166 = vector.shape_cast %162 : vector<8x8xf32> to vector<1x8x8xf32>
      %167 = vector.shape_cast %163 : vector<8x8xf32> to vector<1x8x8xf32>
      %168 = vector.shape_cast %164 : vector<8x8xf32> to vector<1x8x8xf32>
      %169 = vector.shape_cast %165 : vector<8x8xf32> to vector<1x8x8xf32>
      %170 = tpu.concatenate %166, %167, %168, %169 in 0 : vector<1x8x8xf32>, vector<1x8x8xf32>, vector<1x8x8xf32>, vector<1x8x8xf32> -> vector<4x8x8xf32>
      %171 = arith.truncf %170 : vector<4x8x8xf32> to vector<4x8x8xbf16>
      %c0_77 = arith.constant 0 : index
      %c0_78 = arith.constant 0 : index
      %c0_79 = arith.constant 0 : index
      %172 = vector.load %arg22[%c0_77, %c0_78, %c0_79] : memref<4x8x8xbf16, #tpu.memory_space<vmem>>, vector<4x8x8xbf16>
      tpu.vector_store %arg22[%c0_77, %c0_78, %c0_79], %171 {strides = array<i32>} : memref<4x8x8xbf16, #tpu.memory_space<vmem>>, vector<4x8x8xbf16>,
    } else {
    }
    %c8_i32 = arith.constant 8 : i32
    %3 = arith.muli %arg1, %c8_i32 : i32
    %4 = tpu.assume_multiple %3, 8 : i32
    %c0 = arith.constant 0 : index
    %5 = arith.index_cast %4 : i32 to index
    %c0_1 = arith.constant 0 : index
    %6 = vector.load %arg2[%c0, %5, %c0_1] : memref<1x8x32xf32, #tpu.memory_space<vmem>>, vector<1x8x32xf32>
    %7 = vector.shape_cast %6 : vector<1x8x32xf32> to vector<8x32xf32>
    %8 = arith.truncf %7 : vector<8x32xf32> to vector<8x32xbf16>
    %c0_2 = arith.constant 0 : index
    %c0_3 = arith.constant 0 : index
    %9 = vector.load %arg4[%c0_2, %c0_3] : memref<32x32xbf16, #tpu.memory_space<vmem>>, vector<32x32xbf16>
    %cst = arith.constant dense<0.000000e+00> : vector<8x32xf32>
    %10 = tpu.matmul %8, %9, %cst {dimension_numbers = #tpu.dot_dimension_numbers<[1], [0], [0], [1], [0, 0, 1, 1], [], []>} : vector<8x32xbf16>, vector<32x32xbf16>, vector<8x32xf32> -> vector<8x32xf32>
    %c0_4 = arith.constant 0 : index
    %c0_5 = arith.constant 0 : index
    %11 = vector.load %arg5[%c0_4, %c0_5] : memref<1x32xf32, #tpu.memory_space<vmem>>, vector<1x32xf32>
    %12 = vector.broadcast %11 : vector<1x32xf32> to vector<8x32xf32>
    %13 = arith.addf %10, %12 : vector<8x32xf32>
    %cst_6 = arith.constant 0.353553385 : f32
    %14 = vector.broadcast %cst_6 : f32 to vector<8x32xf32>
    %15 = arith.mulf %13, %14 : vector<8x32xf32>
    %16 = vector.extract_strided_slice %15 {offsets = [0, 0], sizes = [8, 8], strides = [1, 1]} : vector<8x32xf32> to vector<8x8xf32>
    %17 = vector.extract_strided_slice %15 {offsets = [0, 8], sizes = [8, 8], strides = [1, 1]} : vector<8x32xf32> to vector<8x8xf32>
    %18 = vector.extract_strided_slice %15 {offsets = [0, 16], sizes = [8, 8], strides = [1, 1]} : vector<8x32xf32> to vector<8x8xf32>
    %19 = vector.extract_strided_slice %15 {offsets = [0, 24], sizes = [8, 8], strides = [1, 1]} : vector<8x32xf32> to vector<8x8xf32>
    %20 = vector.shape_cast %16 : vector<8x8xf32> to vector<1x8x8xf32>
    %21 = vector.shape_cast %17 : vector<8x8xf32> to vector<1x8x8xf32>
    %22 = vector.shape_cast %18 : vector<8x8xf32> to vector<1x8x8xf32>
    %23 = vector.shape_cast %19 : vector<8x8xf32> to vector<1x8x8xf32>
    %24 = tpu.concatenate %20, %21, %22, %23 in 0 : vector<1x8x8xf32>, vector<1x8x8xf32>, vector<1x8x8xf32>, vector<1x8x8xf32> -> vector<4x8x8xf32>
    %25 = arith.truncf %24 : vector<4x8x8xf32> to vector<4x8x8xbf16>
    %c0_7 = arith.constant 0 : index
    %c0_8 = arith.constant 0 : index
    %c0_9 = arith.constant 0 : index
    %26 = vector.load %arg21[%c0_7, %c0_8, %c0_9] : memref<4x8x8xbf16, #tpu.memory_space<vmem>>, vector<4x8x8xbf16>
    "tpu.trace_start"() <{level = 10 : i32, message = "hqd,hkd->hqk"}> : () -> ()
    %cst_10 = arith.constant dense<0.000000e+00> : vector<4x8x8xf32>
    %27 = tpu.matmul %25, %26, %cst_10 {dimension_numbers = #tpu.dot_dimension_numbers<[2], [2], [1], [1], [0, 0, 0, 1, 1, 1], [0], [0]>} : vector<4x8x8xbf16>, vector<4x8x8xbf16>, vector<4x8x8xf32> -> vector<4x8x8xf32>
    "tpu.trace_stop"() : () -> ()
    %c0_11 = arith.constant 0 : index
    %c0_12 = arith.constant 0 : index
    %c0_13 = arith.constant 0 : index
    %28 = vector.load %arg3[%c0_11, %c0_12, %c0_13] : memref<1x1x8xf32, #tpu.memory_space<vmem>>, vector<1x1x8xf32>
    %29 = vector.shape_cast %28 : vector<1x1x8xf32> to vector<1x8xf32>
    %cst_14 = arith.constant 1.000000e+00 : f32
    %30 = vector.broadcast %cst_14 : f32 to vector<1x8xf32>
    %31 = arith.subf %30, %29 : vector<1x8xf32>
    %cst_15 = arith.constant -1.000000e+04 : f32
    %32 = vector.broadcast %cst_15 : f32 to vector<1x8xf32>
    %33 = arith.mulf %31, %32 : vector<1x8xf32>
    %34 = vector.shape_cast %33 : vector<1x8xf32> to vector<1x1x8xf32>
    %35 = vector.broadcast %34 : vector<1x1x8xf32> to vector<4x8x8xf32>
    %36 = arith.addf %27, %35 : vector<4x8x8xf32>
    %cst_16 = arith.constant dense<0xFF800000> : vector<4x8xf32>
    %37 = vector.multi_reduction <maximumf>, %36, %cst_16 [2] : vector<4x8x8xf32> to vector<4x8xf32>
    %38 = vector.shape_cast %37 : vector<4x8xf32> to vector<4x8x1xf32>
    %39 = vector.broadcast %38 : vector<4x8x1xf32> to vector<4x8x8xf32>
    %40 = arith.subf %36, %39 : vector<4x8x8xf32>
    %41 = math.exp %40 : vector<4x8x8xf32>
    %cst_17 = arith.constant dense<0.000000e+00> : vector<4x8xf32>
    %42 = vector.multi_reduction <add>, %41, %cst_17 [2] : vector<4x8x8xf32> to vector<4x8xf32>
    %43 = vector.shape_cast %42 : vector<4x8xf32> to vector<4x8x1xf32>
    %44 = tpu.reciprocal %43 {approx = true} : vector<4x8x1xf32> -> vector<4x8x1xf32>
    %45 = vector.broadcast %44 : vector<4x8x1xf32> to vector<4x8x8xf32>
    %46 = arith.mulf %41, %45 : vector<4x8x8xf32>
    %47 = arith.truncf %46 : vector<4x8x8xf32> to vector<4x8x8xbf16>
    %c0_18 = arith.constant 0 : index
    %c0_19 = arith.constant 0 : index
    %c0_20 = arith.constant 0 : index
    %48 = vector.load %arg22[%c0_18, %c0_19, %c0_20] : memref<4x8x8xbf16, #tpu.memory_space<vmem>>, vector<4x8x8xbf16>
    "tpu.trace_start"() <{level = 10 : i32, message = "hqk,hkd->hqd"}> : () -> ()
    %cst_21 = arith.constant dense<0.000000e+00> : vector<4x8x8xf32>
    %49 = tpu.matmul %47, %48, %cst_21 {dimension_numbers = #tpu.dot_dimension_numbers<[2], [1], [1], [2], [0, 0, 0, 1, 1, 2], [0], [0]>} : vector<4x8x8xbf16>, vector<4x8x8xbf16>, vector<4x8x8xf32> -> vector<4x8x8xf32>
    "tpu.trace_stop"() : () -> ()
    %50 = vector.extract_strided_slice %49 {offsets = [0, 0, 0], sizes = [1, 8, 8], strides = [1, 1, 1]} : vector<4x8x8xf32> to vector<1x8x8xf32>
    %51 = vector.shape_cast %50 : vector<1x8x8xf32> to vector<8x8xf32>
    %52 = vector.extract_strided_slice %49 {offsets = [1, 0, 0], sizes = [1, 8, 8], strides = [1, 1, 1]} : vector<4x8x8xf32> to vector<1x8x8xf32>
    %53 = vector.shape_cast %52 : vector<1x8x8xf32> to vector<8x8xf32>
    %54 = vector.extract_strided_slice %49 {offsets = [2, 0, 0], sizes = [1, 8, 8], strides = [1, 1, 1]} : vector<4x8x8xf32> to vector<1x8x8xf32>
    %55 = vector.shape_cast %54 : vector<1x8x8xf32> to vector<8x8xf32>
    %56 = vector.extract_strided_slice %49 {offsets = [3, 0, 0], sizes = [1, 8, 8], strides = [1, 1, 1]} : vector<4x8x8xf32> to vector<1x8x8xf32>
    %57 = vector.shape_cast %56 : vector<1x8x8xf32> to vector<8x8xf32>
    %58 = tpu.concatenate %51, %53, %55, %57 in 1 : vector<8x8xf32>, vector<8x8xf32>, vector<8x8xf32>, vector<8x8xf32> -> vector<8x32xf32>
    %59 = arith.truncf %58 : vector<8x32xf32> to vector<8x32xbf16>
    %c0_22 = arith.constant 0 : index
    %c0_23 = arith.constant 0 : index
    %60 = vector.load %arg10[%c0_22, %c0_23] : memref<32x32xbf16, #tpu.memory_space<vmem>>, vector<32x32xbf16>
    %cst_24 = arith.constant dense<0.000000e+00> : vector<8x32xf32>
    %61 = tpu.matmul %59, %60, %cst_24 {dimension_numbers = #tpu.dot_dimension_numbers<[1], [0], [0], [1], [0, 0, 1, 1], [], []>} : vector<8x32xbf16>, vector<32x32xbf16>, vector<8x32xf32> -> vector<8x32xf32>
    %c0_25 = arith.constant 0 : index
    %c0_26 = arith.constant 0 : index
    %62 = vector.load %arg11[%c0_25, %c0_26] : memref<1x32xf32, #tpu.memory_space<vmem>>, vector<1x32xf32>
    %63 = vector.broadcast %62 : vector<1x32xf32> to vector<8x32xf32>
    %64 = arith.addf %61, %63 : vector<8x32xf32>
    %65 = arith.addf %64, %7 : vector<8x32xf32>
    %c0_27 = arith.constant 0 : index
    %c0_28 = arith.constant 0 : index
    %66 = vector.load %arg12[%c0_27, %c0_28] : memref<1x32xf32, #tpu.memory_space<vmem>>, vector<1x32xf32>
    %c0_29 = arith.constant 0 : index
    %c0_30 = arith.constant 0 : index
    %67 = vector.load %arg13[%c0_29, %c0_30] : memref<1x32xf32, #tpu.memory_space<vmem>>, vector<1x32xf32>
    %cst_31 = arith.constant dense<0.000000e+00> : vector<8xf32>
    %68 = vector.multi_reduction <add>, %65, %cst_31 [1] : vector<8x32xf32> to vector<8xf32>
    %69 = vector.shape_cast %68 : vector<8xf32> to vector<8x1xf32>
    %cst_32 = arith.constant 3.200000e+01 : f32
    %70 = vector.broadcast %cst_32 : f32 to vector<8x1xf32>
    %71 = arith.divf %69, %70 : vector<8x1xf32>
    %72 = vector.broadcast %71 : vector<8x1xf32> to vector<8x32xf32>
    %73 = arith.subf %65, %72 : vector<8x32xf32>
    %74 = arith.mulf %73, %73 : vector<8x32xf32>
    %cst_33 = arith.constant dense<0.000000e+00> : vector<8xf32>
    %75 = vector.multi_reduction <add>, %74, %cst_33 [1] : vector<8x32xf32> to vector<8xf32>
    %76 = vector.shape_cast %75 : vector<8xf32> to vector<8x1xf32>
    %cst_34 = arith.constant 3.200000e+01 : f32
    %77 = vector.broadcast %cst_34 : f32 to vector<8x1xf32>
    %78 = arith.divf %76, %77 : vector<8x1xf32>
    %79 = vector.broadcast %71 : vector<8x1xf32> to vector<8x32xf32>
    %80 = arith.subf %65, %79 : vector<8x32xf32>
    %cst_35 = arith.constant 9.99999996E-13 : f32
    %81 = vector.broadcast %cst_35 : f32 to vector<8x1xf32>
    %82 = arith.addf %78, %81 : vector<8x1xf32>
    %83 = math.rsqrt %82 : vector<8x1xf32>
    %84 = vector.broadcast %83 : vector<8x1xf32> to vector<8x32xf32>
    %85 = arith.mulf %80, %84 : vector<8x32xf32>
    %86 = vector.broadcast %66 : vector<1x32xf32> to vector<8x32xf32>
    %87 = arith.mulf %85, %86 : vector<8x32xf32>
    %88 = vector.broadcast %67 : vector<1x32xf32> to vector<8x32xf32>
    %89 = arith.addf %87, %88 : vector<8x32xf32>
    %90 = arith.truncf %89 : vector<8x32xf32> to vector<8x32xbf16>
    %c0_36 = arith.constant 0 : index
    %c0_37 = arith.constant 0 : index
    %91 = vector.load %arg14[%c0_36, %c0_37] : memref<32x64xbf16, #tpu.memory_space<vmem>>, vector<32x64xbf16>
    %cst_38 = arith.constant dense<0.000000e+00> : vector<8x64xf32>
    %92 = tpu.matmul %90, %91, %cst_38 {dimension_numbers = #tpu.dot_dimension_numbers<[1], [0], [0], [1], [0, 0, 1, 1], [], []>} : vector<8x32xbf16>, vector<32x64xbf16>, vector<8x64xf32> -> vector<8x64xf32>
    %c0_39 = arith.constant 0 : index
    %c0_40 = arith.constant 0 : index
    %93 = vector.load %arg15[%c0_39, %c0_40] : memref<1x64xf32, #tpu.memory_space<vmem>>, vector<1x64xf32>
    %94 = vector.broadcast %93 : vector<1x64xf32> to vector<8x64xf32>
    %95 = arith.addf %92, %94 : vector<8x64xf32>
    %cst_41 = arith.constant 5.000000e-01 : f32
    %96 = vector.broadcast %cst_41 : f32 to vector<8x64xf32>
    %97 = arith.mulf %96, %95 : vector<8x64xf32>
    %cst_42 = arith.constant 0.707106769 : f32
    %98 = vector.broadcast %cst_42 : f32 to vector<8x64xf32>
    %99 = arith.mulf %95, %98 : vector<8x64xf32>
    %100 = math.erf %99 : vector<8x64xf32>
    %cst_43 = arith.constant 1.000000e+00 : f32
    %101 = vector.broadcast %cst_43 : f32 to vector<8x64xf32>
    %102 = arith.addf %101, %100 : vector<8x64xf32>
    %103 = arith.mulf %97, %102 : vector<8x64xf32>
    %104 = arith.truncf %103 : vector<8x64xf32> to vector<8x64xbf16>
    %c0_44 = arith.constant 0 : index
    %c0_45 = arith.constant 0 : index
    %105 = vector.load %arg16[%c0_44, %c0_45] : memref<64x32xbf16, #tpu.memory_space<vmem>>, vector<64x32xbf16>
    %cst_46 = arith.constant dense<0.000000e+00> : vector<8x32xf32>
    %106 = tpu.matmul %104, %105, %cst_46 {dimension_numbers = #tpu.dot_dimension_numbers<[1], [0], [0], [1], [0, 0, 1, 1], [], []>} : vector<8x64xbf16>, vector<64x32xbf16>, vector<8x32xf32> -> vector<8x32xf32>
    %c0_47 = arith.constant 0 : index
    %c0_48 = arith.constant 0 : index
    %107 = vector.load %arg17[%c0_47, %c0_48] : memref<1x32xf32, #tpu.memory_space<vmem>>, vector<1x32xf32>
    %108 = vector.broadcast %107 : vector<1x32xf32> to vector<8x32xf32>
    %109 = arith.addf %106, %108 : vector<8x32xf32>
    %110 = arith.addf %109, %89 : vector<8x32xf32>
    %c0_49 = arith.constant 0 : index
    %c0_50 = arith.constant 0 : index
    %111 = vector.load %arg18[%c0_49, %c0_50] : memref<1x32xf32, #tpu.memory_space<vmem>>, vector<1x32xf32>
    %c0_51 = arith.constant 0 : index
    %c0_52 = arith.constant 0 : index
    %112 = vector.load %arg19[%c0_51, %c0_52] : memref<1x32xf32, #tpu.memory_space<vmem>>, vector<1x32xf32>
    %cst_53 = arith.constant dense<0.000000e+00> : vector<8xf32>
    %113 = vector.multi_reduction <add>, %110, %cst_53 [1] : vector<8x32xf32> to vector<8xf32>
    %114 = vector.shape_cast %113 : vector<8xf32> to vector<8x1xf32>
    %cst_54 = arith.constant 3.200000e+01 : f32
    %115 = vector.broadcast %cst_54 : f32 to vector<8x1xf32>
    %116 = arith.divf %114, %115 : vector<8x1xf32>
    %117 = vector.broadcast %116 : vector<8x1xf32> to vector<8x32xf32>
    %118 = arith.subf %110, %117 : vector<8x32xf32>
    %119 = arith.mulf %118, %118 : vector<8x32xf32>
    %cst_55 = arith.constant dense<0.000000e+00> : vector<8xf32>
    %120 = vector.multi_reduction <add>, %119, %cst_55 [1] : vector<8x32xf32> to vector<8xf32>
    %121 = vector.shape_cast %120 : vector<8xf32> to vector<8x1xf32>
    %cst_56 = arith.constant 3.200000e+01 : f32
    %122 = vector.broadcast %cst_56 : f32 to vector<8x1xf32>
    %123 = arith.divf %121, %122 : vector<8x1xf32>
    %124 = vector.broadcast %116 : vector<8x1xf32> to vector<8x32xf32>
    %125 = arith.subf %110, %124 : vector<8x32xf32>
    %cst_57 = arith.constant 9.99999996E-13 : f32
    %126 = vector.broadcast %cst_57 : f32 to vector<8x1xf32>
    %127 = arith.addf %123, %126 : vector<8x1xf32>
    %128 = math.rsqrt %127 : vector<8x1xf32>
    %129 = vector.broadcast %128 : vector<8x1xf32> to vector<8x32xf32>
    %130 = arith.mulf %125, %129 : vector<8x32xf32>
    %131 = vector.broadcast %111 : vector<1x32xf32> to vector<8x32xf32>
    %132 = arith.mulf %130, %131 : vector<8x32xf32>
    %133 = vector.broadcast %112 : vector<1x32xf32> to vector<8x32xf32>
    %134 = arith.addf %132, %133 : vector<8x32xf32>
    %c0_58 = arith.constant 0 : index
    %c0_59 = arith.constant 0 : index
    %c0_60 = arith.constant 0 : index
    %135 = vector.load %arg20[%c0_58, %c0_59, %c0_60] : memref<1x8x32xf32, #tpu.memory_space<vmem>>, vector<1x8x32xf32>
    %136 = vector.shape_cast %135 : vector<1x8x32xf32> to vector<8x32xf32>
    %137 = vector.shape_cast %134 : vector<8x32xf32> to vector<1x8x32xf32>
    tpu.vector_store %arg20[%c0_58, %c0_59, %c0_60], %137 {strides = array<i32>} : memref<1x8x32xf32, #tpu.memory_space<vmem>>, vector<1x8x32xf32>,
    return
  }
  func.func @transform_0(%arg0: i32, %arg1: i32) -> (i32, i32, i32) {
    %c0_i32 = arith.constant 0 : i32
    %c0_i32_0 = arith.constant 0 : i32
    %c0_i32_1 = arith.constant 0 : i32
    return %arg0, %c0_i32, %c0_i32_0 : i32, i32, i32
  }
  func.func @transform_1(%arg0: i32, %arg1: i32) -> (i32, i32, i32) {
    %c0_i32 = arith.constant 0 : i32
    %c0_i32_0 = arith.constant 0 : i32
    %c0_i32_1 = arith.constant 0 : i32
    return %arg0, %c0_i32, %c0_i32_0 : i32, i32, i32
  }
  func.func @transform_2(%arg0: i32, %arg1: i32) -> (i32, i32) {
    %c0_i32 = arith.constant 0 : i32
    %c0_i32_0 = arith.constant 0 : i32
    %c0_i32_1 = arith.constant 0 : i32
    return %c0_i32, %c0_i32_0 : i32, i32
  }
  func.func @transform_3(%arg0: i32, %arg1: i32) -> (i32, i32) {
    %c0_i32 = arith.constant 0 : i32
    %c0_i32_0 = arith.constant 0 : i32
    %c0_i32_1 = arith.constant 0 : i32
    return %c0_i32, %c0_i32_0 : i32, i32
  }
  func.func @transform_4(%arg0: i32, %arg1: i32) -> (i32, i32) {
    %c0_i32 = arith.constant 0 : i32
    %c0_i32_0 = arith.constant 0 : i32
    %c0_i32_1 = arith.constant 0 : i32
    return %c0_i32, %c0_i32_0 : i32, i32
  }
  func.func @transform_5(%arg0: i32, %arg1: i32) -> (i32, i32) {
    %c0_i32 = arith.constant 0 : i32
    %c0_i32_0 = arith.constant 0 : i32
    %c0_i32_1 = arith.constant 0 : i32
    return %c0_i32, %c0_i32_0 : i32, i32
  }
  func.func @transform_6(%arg0: i32, %arg1: i32) -> (i32, i32) {
    %c0_i32 = arith.constant 0 : i32
    %c0_i32_0 = arith.constant 0 : i32
    %c0_i32_1 = arith.constant 0 : i32
    return %c0_i32, %c0_i32_0 : i32, i32
  }
  func.func @transform_7(%arg0: i32, %arg1: i32) -> (i32, i32) {
    %c0_i32 = arith.constant 0 : i32
    %c0_i32_0 = arith.constant 0 : i32
    %c0_i32_1 = arith.constant 0 : i32
    return %c0_i32, %c0_i32_0 : i32, i32
  }
  func.func @transform_8(%arg0: i32, %arg1: i32) -> (i32, i32) {
    %c0_i32 = arith.constant 0 : i32
    %c0_i32_0 = arith.constant 0 : i32
    %c0_i32_1 = arith.constant 0 : i32
    return %c0_i32, %c0_i32_0 : i32, i32
  }
  func.func @transform_9(%arg0: i32, %arg1: i32) -> (i32, i32) {
    %c0_i32 = arith.constant 0 : i32
    %c0_i32_0 = arith.constant 0 : i32
    %c0_i32_1 = arith.constant 0 : i32
    return %c0_i32, %c0_i32_0 : i32, i32
  }
  func.func @transform_10(%arg0: i32, %arg1: i32) -> (i32, i32) {
    %c0_i32 = arith.constant 0 : i32
    %c0_i32_0 = arith.constant 0 : i32
    %c0_i32_1 = arith.constant 0 : i32
    return %c0_i32, %c0_i32_0 : i32, i32
  }
  func.func @transform_11(%arg0: i32, %arg1: i32) -> (i32, i32) {
    %c0_i32 = arith.constant 0 : i32
    %c0_i32_0 = arith.constant 0 : i32
    %c0_i32_1 = arith.constant 0 : i32
    return %c0_i32, %c0_i32_0 : i32, i32
  }
  func.func @transform_12(%arg0: i32, %arg1: i32) -> (i32, i32) {
    %c0_i32 = arith.constant 0 : i32
    %c0_i32_0 = arith.constant 0 : i32
    %c0_i32_1 = arith.constant 0 : i32
    return %c0_i32, %c0_i32_0 : i32, i32
  }
  func.func @transform_13(%arg0: i32, %arg1: i32) -> (i32, i32) {
    %c0_i32 = arith.constant 0 : i32
    %c0_i32_0 = arith.constant 0 : i32
    %c0_i32_1 = arith.constant 0 : i32
    return %c0_i32, %c0_i32_0 : i32, i32
  }
  func.func @transform_14(%arg0: i32, %arg1: i32) -> (i32, i32) {
    %c0_i32 = arith.constant 0 : i32
    %c0_i32_0 = arith.constant 0 : i32
    %c0_i32_1 = arith.constant 0 : i32
    return %c0_i32, %c0_i32_0 : i32, i32
  }
  func.func @transform_15(%arg0: i32, %arg1: i32) -> (i32, i32) {
    %c0_i32 = arith.constant 0 : i32
    %c0_i32_0 = arith.constant 0 : i32
    %c0_i32_1 = arith.constant 0 : i32
    return %c0_i32, %c0_i32_0 : i32, i32
  }
  func.func @transform_16(%arg0: i32, %arg1: i32) -> (i32, i32) {
    %c0_i32 = arith.constant 0 : i32
    %c0_i32_0 = arith.constant 0 : i32
    %c0_i32_1 = arith.constant 0 : i32
    return %c0_i32, %c0_i32_0 : i32, i32
  }
  func.func @transform_17(%arg0: i32, %arg1: i32) -> (i32, i32) {
    %c0_i32 = arith.constant 0 : i32
    %c0_i32_0 = arith.constant 0 : i32
    %c0_i32_1 = arith.constant 0 : i32
    return %c0_i32, %c0_i32_0 : i32, i32
  }
  func.func @transform_18(%arg0: i32, %arg1: i32) -> (i32, i32, i32) {
    %c0_i32 = arith.constant 0 : i32
    %c0_i32_0 = arith.constant 0 : i32
    return %arg0, %arg1, %c0_i32 : i32, i32, i32
  }
}

module attributes {stable_mosaic.version = 11 : i64} {
  func.func @bert_layer_kernel(%arg0: i32, %arg1: i32, %arg2: memref<1x8x32xf32, #tpu.memory_space<vmem>>, %arg3: memref<1x1x8xf32, #tpu.memory_space<vmem>>, %arg4: memref<32x32xbf16, #tpu.memory_space<vmem>>, %arg5: memref<1x32xf32, #tpu.memory_space<vmem>>, %arg6: memref<32x32xbf16, #tpu.memory_space<vmem>>, %arg7: memref<1x32xf32, #tpu.memory_space<vmem>>, %arg8: memref<32x32xbf16, #tpu.memory_space<vmem>>, %arg9: memref<1x32xf32, #tpu.memory_space<vmem>>, %arg10: memref<32x32xbf16, #tpu.memory_space<vmem>>, %arg11: memref<1x32xf32, #tpu.memory_space<vmem>>, %arg12: memref<1x32xf32, #tpu.memory_space<vmem>>, %arg13: memref<1x32xf32, #tpu.memory_space<vmem>>, %arg14: memref<32x64xbf16, #tpu.memory_space<vmem>>, %arg15: memref<1x64xf32, #tpu.memory_space<vmem>>, %arg16: memref<64x32xbf16, #tpu.memory_space<vmem>>, %arg17: memref<1x32xf32, #tpu.memory_space<vmem>>, %arg18: memref<1x32xf32, #tpu.memory_space<vmem>>, %arg19: memref<1x32xf32, #tpu.memory_space<vmem>>, %arg20: memref<1x8x32xf32, #tpu.memory_space<vmem>>, %arg21: memref<4x8x8xbf16, #tpu.memory_space<vmem>>, %arg22: memref<4x8x8xbf16, #tpu.memory_space<vmem>>) attributes {dimension_semantics = [#tpu.dimension_semantics<parallel>, #tpu.dimension_semantics<arbitrary>], iteration_bounds = array<i64: 2, 1>, scalar_prefetch = 0 : i64, scratch_operands = 2 : i64, tpu.core_type = #tpu.core_type<tc>, window_params = [{transform_indices = @transform_0, window_bounds = array<i64: 1, 8, 32>}, {transform_indices = @transform_1, window_bounds = array<i64: 1, 1, 8>}, {pipeline_mode = #tpu.pipeline_mode<synchronous>, transform_indices = @transform_2, window_bounds = array<i64: 32, 32>}, {pipeline_mode = #tpu.pipeline_mode<synchronous>, transform_indices = @transform_3, window_bounds = array<i64: 1, 32>}, {pipeline_mode = #tpu.pipeline_mode<synchronous>, transform_indices = @transform_4, window_bounds = array<i64: 32, 32>}, {pipeline_mode = #tpu.pipeline_mode<synchronous>, transform_indices = @transform_5, window_bounds = array<i64: 1, 32>}, {pipeline_mode = #tpu.pipeline_mode<synchronous>, transform_indices = @transform_6, window_bounds = array<i64: 32, 32>}, {pipeline_mode = #tpu.pipeline_mode<synchronous>, transform_indices = @transform_7, window_bounds = array<i64: 1, 32>}, {pipeline_mode = #tpu.pipeline_mode<synchronous>, transform_indices = @transform_8, window_bounds = array<i64: 32, 32>}, {pipeline_mode = #tpu.pipeline_mode<synchronous>, transform_indices = @transform_9, window_bounds = array<i64: 1, 32>}, {pipeline_mode = #tpu.pipeline_mode<synchronous>, transform_indices = @transform_10, window_bounds = array<i64: 1, 32>}, {pipeline_mode = #tpu.pipeline_mode<synchronous>, transform_indices = @transform_11, window_bounds = array<i64: 1, 32>}, {pipeline_mode = #tpu.pipeline_mode<synchronous>, transform_indices = @transform_12, window_bounds = array<i64: 32, 64>}, {pipeline_mode = #tpu.pipeline_mode<synchronous>, transform_indices = @transform_13, window_bounds = array<i64: 1, 64>}, {pipeline_mode = #tpu.pipeline_mode<synchronous>, transform_indices = @transform_14, window_bounds = array<i64: 64, 32>}, {pipeline_mode = #tpu.pipeline_mode<synchronous>, transform_indices = @transform_15, window_bounds = array<i64: 1, 32>}, {pipeline_mode = #tpu.pipeline_mode<synchronous>, transform_indices = @transform_16, window_bounds = array<i64: 1, 32>}, {pipeline_mode = #tpu.pipeline_mode<synchronous>, transform_indices = @transform_17, window_bounds = array<i64: 1, 32>}, {transform_indices = @transform_18, window_bounds = array<i64: 1, 8, 32>}]} {
    %c0_i32 = arith.constant 0 : i32
    %0 = arith.cmpi eq, %arg1, %c0_i32 : i32
    %1 = arith.extui %0 : i1 to i32
    %c0_i32_0 = arith.constant 0 : i32
    %2 = arith.cmpi ne, %1, %c0_i32_0 : i32
    scf.if %2 {
      %c0_62 = arith.constant 0 : index
      %c0_63 = arith.constant 0 : index
      %c0_64 = arith.constant 0 : index
      %143 = vector.load %arg2[%c0_62, %c0_63, %c0_64] : memref<1x8x32xf32, #tpu.memory_space<vmem>>, vector<1x8x32xf32>
      %144 = vector.shape_cast %143 : vector<1x8x32xf32> to vector<8x32xf32>
      %145 = arith.truncf %144 : vector<8x32xf32> to vector<8x32xbf16>
      %c0_65 = arith.constant 0 : index
      %c0_66 = arith.constant 0 : index
      %146 = vector.load %arg6[%c0_65, %c0_66] : memref<32x32xbf16, #tpu.memory_space<vmem>>, vector<32x32xbf16>
      %cst_67 = arith.constant dense<0.000000e+00> : vector<8x32xf32>
      %147 = tpu.matmul %145, %146, %cst_67 {dimension_numbers = #tpu.dot_dimension_numbers<[1], [0], [0], [1], [0, 0, 1, 1], [], []>} : vector<8x32xbf16>, vector<32x32xbf16>, vector<8x32xf32> -> vector<8x32xf32>
      %c0_68 = arith.constant 0 : index
      %c0_69 = arith.constant 0 : index
      %148 = vector.load %arg7[%c0_68, %c0_69] : memref<1x32xf32, #tpu.memory_space<vmem>>, vector<1x32xf32>
      %149 = vector.broadcast %148 : vector<1x32xf32> to vector<8x32xf32>
      %150 = arith.addf %147, %149 : vector<8x32xf32>
      %c0_70 = arith.constant 0 : index
      %c0_71 = arith.constant 0 : index
      %151 = vector.load %arg8[%c0_70, %c0_71] : memref<32x32xbf16, #tpu.memory_space<vmem>>, vector<32x32xbf16>
      %cst_72 = arith.constant dense<0.000000e+00> : vector<8x32xf32>
      %152 = tpu.matmul %145, %151, %cst_72 {dimension_numbers = #tpu.dot_dimension_numbers<[1], [0], [0], [1], [0, 0, 1, 1], [], []>} : vector<8x32xbf16>, vector<32x32xbf16>, vector<8x32xf32> -> vector<8x32xf32>
      %c0_73 = arith.constant 0 : index
      %c0_74 = arith.constant 0 : index
      %153 = vector.load %arg9[%c0_73, %c0_74] : memref<1x32xf32, #tpu.memory_space<vmem>>, vector<1x32xf32>
      %154 = vector.broadcast %153 : vector<1x32xf32> to vector<8x32xf32>
      %155 = arith.addf %152, %154 : vector<8x32xf32>
      %156 = vector.extract_strided_slice %150 {offsets = [0, 0], sizes = [8, 8], strides = [1, 1]} : vector<8x32xf32> to vector<8x8xf32>
      %157 = vector.extract_strided_slice %150 {offsets = [0, 8], sizes = [8, 8], strides = [1, 1]} : vector<8x32xf32> to vector<8x8xf32>
      %158 = vector.extract_strided_slice %150 {offsets = [0, 16], sizes = [8, 8], strides = [1, 1]} : vector<8x32xf32> to vector<8x8xf32>
      %159 = vector.extract_strided_slice %150 {offsets = [0, 24], sizes = [8, 8], strides = [1, 1]} : vector<8x32xf32> to vector<8x8xf32>
      %160 = vector.shape_cast %156 : vector<8x8xf32> to vector<1x8x8xf32>
      %161 = vector.shape_cast %157 : vector<8x8xf32> to vector<1x8x8xf32>
      %162 = vector.shape_cast %158 : vector<8x8xf32> to vector<1x8x8xf32>
      %163 = vector.shape_cast %159 : vector<8x8xf32> to vector<1x8x8xf32>
      %164 = tpu.concatenate %160, %161, %162, %163 in 0 : vector<1x8x8xf32>, vector<1x8x8xf32>, vector<1x8x8xf32>, vector<1x8x8xf32> -> vector<4x8x8xf32>
      %165 = arith.truncf %164 : vector<4x8x8xf32> to vector<4x8x8xbf16>
      %c0_75 = arith.constant 0 : index
      %c0_76 = arith.constant 0 : index
      %c0_77 = arith.constant 0 : index
      %166 = vector.load %arg21[%c0_75, %c0_76, %c0_77] : memref<4x8x8xbf16, #tpu.memory_space<vmem>>, vector<4x8x8xbf16>
      tpu.vector_store %arg21[%c0_75, %c0_76, %c0_77], %165 {strides = array<i32>} : memref<4x8x8xbf16, #tpu.memory_space<vmem>>, vector<4x8x8xbf16>,
      %167 = vector.extract_strided_slice %155 {offsets = [0, 0], sizes = [8, 8], strides = [1, 1]} : vector<8x32xf32> to vector<8x8xf32>
      %168 = vector.extract_strided_slice %155 {offsets = [0, 8], sizes = [8, 8], strides = [1, 1]} : vector<8x32xf32> to vector<8x8xf32>
      %169 = vector.extract_strided_slice %155 {offsets = [0, 16], sizes = [8, 8], strides = [1, 1]} : vector<8x32xf32> to vector<8x8xf32>
      %170 = vector.extract_strided_slice %155 {offsets = [0, 24], sizes = [8, 8], strides = [1, 1]} : vector<8x32xf32> to vector<8x8xf32>
      %171 = vector.shape_cast %167 : vector<8x8xf32> to vector<1x8x8xf32>
      %172 = vector.shape_cast %168 : vector<8x8xf32> to vector<1x8x8xf32>
      %173 = vector.shape_cast %169 : vector<8x8xf32> to vector<1x8x8xf32>
      %174 = vector.shape_cast %170 : vector<8x8xf32> to vector<1x8x8xf32>
      %175 = tpu.concatenate %171, %172, %173, %174 in 0 : vector<1x8x8xf32>, vector<1x8x8xf32>, vector<1x8x8xf32>, vector<1x8x8xf32> -> vector<4x8x8xf32>
      %176 = arith.truncf %175 : vector<4x8x8xf32> to vector<4x8x8xbf16>
      %c0_78 = arith.constant 0 : index
      %c0_79 = arith.constant 0 : index
      %c0_80 = arith.constant 0 : index
      %177 = vector.load %arg22[%c0_78, %c0_79, %c0_80] : memref<4x8x8xbf16, #tpu.memory_space<vmem>>, vector<4x8x8xbf16>
      tpu.vector_store %arg22[%c0_78, %c0_79, %c0_80], %176 {strides = array<i32>} : memref<4x8x8xbf16, #tpu.memory_space<vmem>>, vector<4x8x8xbf16>,
    } else {
    }
    %c8_i32 = arith.constant 8 : i32
    %3 = arith.muli %arg1, %c8_i32 : i32
    %4 = tpu.assume_multiple %3, 8 : i32
    %c0 = arith.constant 0 : index
    %5 = arith.index_cast %4 : i32 to index
    %c0_1 = arith.constant 0 : index
    %6 = vector.load %arg2[%c0, %5, %c0_1] : memref<1x8x32xf32, #tpu.memory_space<vmem>>, vector<1x8x32xf32>
    %7 = vector.shape_cast %6 : vector<1x8x32xf32> to vector<8x32xf32>
    %8 = arith.truncf %7 : vector<8x32xf32> to vector<8x32xbf16>
    %c0_2 = arith.constant 0 : index
    %c0_3 = arith.constant 0 : index
    %9 = vector.load %arg4[%c0_2, %c0_3] : memref<32x32xbf16, #tpu.memory_space<vmem>>, vector<32x32xbf16>
    %cst = arith.constant dense<0.000000e+00> : vector<8x32xf32>
    %10 = tpu.matmul %8, %9, %cst {dimension_numbers = #tpu.dot_dimension_numbers<[1], [0], [0], [1], [0, 0, 1, 1], [], []>} : vector<8x32xbf16>, vector<32x32xbf16>, vector<8x32xf32> -> vector<8x32xf32>
    %c0_4 = arith.constant 0 : index
    %c0_5 = arith.constant 0 : index
    %11 = vector.load %arg5[%c0_4, %c0_5] : memref<1x32xf32, #tpu.memory_space<vmem>>, vector<1x32xf32>
    %12 = vector.broadcast %11 : vector<1x32xf32> to vector<8x32xf32>
    %13 = arith.addf %10, %12 : vector<8x32xf32>
    %cst_6 = arith.constant 0.353553385 : f32
    %14 = vector.broadcast %cst_6 : f32 to vector<8x32xf32>
    %15 = arith.mulf %13, %14 : vector<8x32xf32>
    %16 = vector.extract_strided_slice %15 {offsets = [0, 0], sizes = [8, 8], strides = [1, 1]} : vector<8x32xf32> to vector<8x8xf32>
    %17 = vector.extract_strided_slice %15 {offsets = [0, 8], sizes = [8, 8], strides = [1, 1]} : vector<8x32xf32> to vector<8x8xf32>
    %18 = vector.extract_strided_slice %15 {offsets = [0, 16], sizes = [8, 8], strides = [1, 1]} : vector<8x32xf32> to vector<8x8xf32>
    %19 = vector.extract_strided_slice %15 {offsets = [0, 24], sizes = [8, 8], strides = [1, 1]} : vector<8x32xf32> to vector<8x8xf32>
    %20 = vector.shape_cast %16 : vector<8x8xf32> to vector<1x8x8xf32>
    %21 = vector.shape_cast %17 : vector<8x8xf32> to vector<1x8x8xf32>
    %22 = vector.shape_cast %18 : vector<8x8xf32> to vector<1x8x8xf32>
    %23 = vector.shape_cast %19 : vector<8x8xf32> to vector<1x8x8xf32>
    %24 = tpu.concatenate %20, %21, %22, %23 in 0 : vector<1x8x8xf32>, vector<1x8x8xf32>, vector<1x8x8xf32>, vector<1x8x8xf32> -> vector<4x8x8xf32>
    %25 = arith.truncf %24 : vector<4x8x8xf32> to vector<4x8x8xbf16>
    %c0_7 = arith.constant 0 : index
    %c0_8 = arith.constant 0 : index
    %c0_9 = arith.constant 0 : index
    %26 = vector.load %arg21[%c0_7, %c0_8, %c0_9] : memref<4x8x8xbf16, #tpu.memory_space<vmem>>, vector<4x8x8xbf16>
    "tpu.trace_start"() <{level = 10 : i32, message = "hqd,hkd->hqk"}> : () -> ()
    %cst_10 = arith.constant dense<0.000000e+00> : vector<4x8x8xf32>
    %27 = tpu.matmul %25, %26, %cst_10 {dimension_numbers = #tpu.dot_dimension_numbers<[2], [2], [1], [1], [0, 0, 0, 1, 1, 1], [0], [0]>} : vector<4x8x8xbf16>, vector<4x8x8xbf16>, vector<4x8x8xf32> -> vector<4x8x8xf32>
    "tpu.trace_stop"() : () -> ()
    %c0_11 = arith.constant 0 : index
    %c0_12 = arith.constant 0 : index
    %c0_13 = arith.constant 0 : index
    %28 = vector.load %arg3[%c0_11, %c0_12, %c0_13] : memref<1x1x8xf32, #tpu.memory_space<vmem>>, vector<1x1x8xf32>
    %29 = vector.shape_cast %28 : vector<1x1x8xf32> to vector<1x8xf32>
    %cst_14 = arith.constant 1.000000e+00 : f32
    %30 = vector.broadcast %cst_14 : f32 to vector<1x8xf32>
    %31 = arith.subf %30, %29 : vector<1x8xf32>
    %cst_15 = arith.constant -1.000000e+04 : f32
    %32 = vector.broadcast %cst_15 : f32 to vector<1x8xf32>
    %33 = arith.mulf %31, %32 : vector<1x8xf32>
    %34 = vector.shape_cast %33 : vector<1x8xf32> to vector<1x1x8xf32>
    %35 = vector.broadcast %34 : vector<1x1x8xf32> to vector<4x8x8xf32>
    %36 = arith.addf %27, %35 : vector<4x8x8xf32>
    %cst_16 = arith.constant dense<0xFF800000> : vector<4x8xf32>
    %37 = vector.multi_reduction <maximumf>, %36, %cst_16 [2] : vector<4x8x8xf32> to vector<4x8xf32>
    %38 = vector.shape_cast %37 : vector<4x8xf32> to vector<4x8x1xf32>
    %39 = vector.broadcast %38 : vector<4x8x1xf32> to vector<4x8x8xf32>
    %40 = arith.subf %36, %39 : vector<4x8x8xf32>
    %41 = math.exp %40 : vector<4x8x8xf32>
    %cst_17 = arith.constant dense<0.000000e+00> : vector<4x8xf32>
    %42 = vector.multi_reduction <add>, %41, %cst_17 [2] : vector<4x8x8xf32> to vector<4x8xf32>
    %43 = vector.shape_cast %42 : vector<4x8xf32> to vector<4x8x1xf32>
    %44 = tpu.reciprocal %43 {approx = true} : vector<4x8x1xf32> -> vector<4x8x1xf32>
    %45 = vector.broadcast %44 : vector<4x8x1xf32> to vector<4x8x8xf32>
    %46 = arith.mulf %41, %45 : vector<4x8x8xf32>
    %47 = arith.truncf %46 : vector<4x8x8xf32> to vector<4x8x8xbf16>
    %c0_18 = arith.constant 0 : index
    %c0_19 = arith.constant 0 : index
    %c0_20 = arith.constant 0 : index
    %48 = vector.load %arg22[%c0_18, %c0_19, %c0_20] : memref<4x8x8xbf16, #tpu.memory_space<vmem>>, vector<4x8x8xbf16>
    "tpu.trace_start"() <{level = 10 : i32, message = "hqk,hkd->hqd"}> : () -> ()
    %cst_21 = arith.constant dense<0.000000e+00> : vector<4x8x8xf32>
    %49 = tpu.matmul %47, %48, %cst_21 {dimension_numbers = #tpu.dot_dimension_numbers<[2], [1], [1], [2], [0, 0, 0, 1, 1, 2], [0], [0]>} : vector<4x8x8xbf16>, vector<4x8x8xbf16>, vector<4x8x8xf32> -> vector<4x8x8xf32>
    "tpu.trace_stop"() : () -> ()
    %50 = vector.extract_strided_slice %49 {offsets = [0, 0, 0], sizes = [1, 8, 8], strides = [1, 1, 1]} : vector<4x8x8xf32> to vector<1x8x8xf32>
    %51 = vector.shape_cast %50 : vector<1x8x8xf32> to vector<8x8xf32>
    %52 = vector.extract_strided_slice %49 {offsets = [1, 0, 0], sizes = [1, 8, 8], strides = [1, 1, 1]} : vector<4x8x8xf32> to vector<1x8x8xf32>
    %53 = vector.shape_cast %52 : vector<1x8x8xf32> to vector<8x8xf32>
    %54 = vector.extract_strided_slice %49 {offsets = [2, 0, 0], sizes = [1, 8, 8], strides = [1, 1, 1]} : vector<4x8x8xf32> to vector<1x8x8xf32>
    %55 = vector.shape_cast %54 : vector<1x8x8xf32> to vector<8x8xf32>
    %56 = vector.extract_strided_slice %49 {offsets = [3, 0, 0], sizes = [1, 8, 8], strides = [1, 1, 1]} : vector<4x8x8xf32> to vector<1x8x8xf32>
    %57 = vector.shape_cast %56 : vector<1x8x8xf32> to vector<8x8xf32>
    %58 = tpu.concatenate %51, %53, %55, %57 in 1 : vector<8x8xf32>, vector<8x8xf32>, vector<8x8xf32>, vector<8x8xf32> -> vector<8x32xf32>
    %59 = arith.truncf %58 : vector<8x32xf32> to vector<8x32xbf16>
    %c0_22 = arith.constant 0 : index
    %c0_23 = arith.constant 0 : index
    %60 = vector.load %arg10[%c0_22, %c0_23] : memref<32x32xbf16, #tpu.memory_space<vmem>>, vector<32x32xbf16>
    %cst_24 = arith.constant dense<0.000000e+00> : vector<8x32xf32>
    %61 = tpu.matmul %59, %60, %cst_24 {dimension_numbers = #tpu.dot_dimension_numbers<[1], [0], [0], [1], [0, 0, 1, 1], [], []>} : vector<8x32xbf16>, vector<32x32xbf16>, vector<8x32xf32> -> vector<8x32xf32>
    %c0_25 = arith.constant 0 : index
    %c0_26 = arith.constant 0 : index
    %62 = vector.load %arg11[%c0_25, %c0_26] : memref<1x32xf32, #tpu.memory_space<vmem>>, vector<1x32xf32>
    %63 = vector.broadcast %62 : vector<1x32xf32> to vector<8x32xf32>
    %64 = arith.addf %61, %63 : vector<8x32xf32>
    %65 = arith.addf %64, %7 : vector<8x32xf32>
    %c0_27 = arith.constant 0 : index
    %c0_28 = arith.constant 0 : index
    %66 = vector.load %arg12[%c0_27, %c0_28] : memref<1x32xf32, #tpu.memory_space<vmem>>, vector<1x32xf32>
    %c0_29 = arith.constant 0 : index
    %c0_30 = arith.constant 0 : index
    %67 = vector.load %arg13[%c0_29, %c0_30] : memref<1x32xf32, #tpu.memory_space<vmem>>, vector<1x32xf32>
    %cst_31 = arith.constant dense<0.000000e+00> : vector<8xf32>
    %68 = vector.multi_reduction <add>, %65, %cst_31 [1] : vector<8x32xf32> to vector<8xf32>
    %69 = vector.shape_cast %68 : vector<8xf32> to vector<8x1xf32>
    %cst_32 = arith.constant 3.200000e+01 : f32
    %70 = vector.broadcast %cst_32 : f32 to vector<8x1xf32>
    %71 = arith.divf %69, %70 : vector<8x1xf32>
    %72 = vector.broadcast %71 : vector<8x1xf32> to vector<8x32xf32>
    %73 = arith.subf %65, %72 : vector<8x32xf32>
    %74 = arith.mulf %73, %73 : vector<8x32xf32>
    %cst_33 = arith.constant dense<0.000000e+00> : vector<8xf32>
    %75 = vector.multi_reduction <add>, %74, %cst_33 [1] : vector<8x32xf32> to vector<8xf32>
    %76 = vector.shape_cast %75 : vector<8xf32> to vector<8x1xf32>
    %cst_34 = arith.constant 3.200000e+01 : f32
    %77 = vector.broadcast %cst_34 : f32 to vector<8x1xf32>
    %78 = arith.divf %76, %77 : vector<8x1xf32>
    %79 = vector.broadcast %71 : vector<8x1xf32> to vector<8x32xf32>
    %80 = arith.subf %65, %79 : vector<8x32xf32>
    %cst_35 = arith.constant 9.99999996E-13 : f32
    %81 = vector.broadcast %cst_35 : f32 to vector<8x1xf32>
    %82 = arith.addf %78, %81 : vector<8x1xf32>
    %83 = math.rsqrt %82 : vector<8x1xf32>
    %84 = vector.broadcast %83 : vector<8x1xf32> to vector<8x32xf32>
    %85 = arith.mulf %80, %84 : vector<8x32xf32>
    %86 = vector.broadcast %66 : vector<1x32xf32> to vector<8x32xf32>
    %87 = arith.mulf %85, %86 : vector<8x32xf32>
    %88 = vector.broadcast %67 : vector<1x32xf32> to vector<8x32xf32>
    %89 = arith.addf %87, %88 : vector<8x32xf32>
    %90 = arith.truncf %89 : vector<8x32xf32> to vector<8x32xbf16>
    %c0_36 = arith.constant 0 : index
    %c0_37 = arith.constant 0 : index
    %91 = vector.load %arg14[%c0_36, %c0_37] : memref<32x64xbf16, #tpu.memory_space<vmem>>, vector<32x64xbf16>
    %cst_38 = arith.constant dense<0.000000e+00> : vector<8x64xf32>
    %92 = tpu.matmul %90, %91, %cst_38 {dimension_numbers = #tpu.dot_dimension_numbers<[1], [0], [0], [1], [0, 0, 1, 1], [], []>} : vector<8x32xbf16>, vector<32x64xbf16>, vector<8x64xf32> -> vector<8x64xf32>
    %c0_39 = arith.constant 0 : index
    %c0_40 = arith.constant 0 : index
    %93 = vector.load %arg15[%c0_39, %c0_40] : memref<1x64xf32, #tpu.memory_space<vmem>>, vector<1x64xf32>
    %94 = vector.broadcast %93 : vector<1x64xf32> to vector<8x64xf32>
    %95 = arith.addf %92, %94 : vector<8x64xf32>
    %cst_41 = arith.constant 5.000000e-01 : f32
    %96 = vector.broadcast %cst_41 : f32 to vector<8x64xf32>
    %97 = arith.mulf %96, %95 : vector<8x64xf32>
    %cst_42 = arith.constant 4.471500e-02 : f32
    %98 = vector.broadcast %cst_42 : f32 to vector<8x64xf32>
    %99 = arith.mulf %98, %95 : vector<8x64xf32>
    %100 = arith.mulf %99, %95 : vector<8x64xf32>
    %101 = arith.mulf %100, %95 : vector<8x64xf32>
    %102 = arith.addf %95, %101 : vector<8x64xf32>
    %cst_43 = arith.constant 0.797884583 : f32
    %103 = vector.broadcast %cst_43 : f32 to vector<8x64xf32>
    %104 = arith.mulf %103, %102 : vector<8x64xf32>
    %105 = math.tanh %104 : vector<8x64xf32>
    %cst_44 = arith.constant 1.000000e+00 : f32
    %106 = vector.broadcast %cst_44 : f32 to vector<8x64xf32>
    %107 = arith.addf %106, %105 : vector<8x64xf32>
    %108 = arith.mulf %97, %107 : vector<8x64xf32>
    %109 = arith.truncf %108 : vector<8x64xf32> to vector<8x64xbf16>
    %c0_45 = arith.constant 0 : index
    %c0_46 = arith.constant 0 : index
    %110 = vector.load %arg16[%c0_45, %c0_46] : memref<64x32xbf16, #tpu.memory_space<vmem>>, vector<64x32xbf16>
    %cst_47 = arith.constant dense<0.000000e+00> : vector<8x32xf32>
    %111 = tpu.matmul %109, %110, %cst_47 {dimension_numbers = #tpu.dot_dimension_numbers<[1], [0], [0], [1], [0, 0, 1, 1], [], []>} : vector<8x64xbf16>, vector<64x32xbf16>, vector<8x32xf32> -> vector<8x32xf32>
    %c0_48 = arith.constant 0 : index
    %c0_49 = arith.constant 0 : index
    %112 = vector.load %arg17[%c0_48, %c0_49] : memref<1x32xf32, #tpu.memory_space<vmem>>, vector<1x32xf32>
    %113 = vector.broadcast %112 : vector<1x32xf32> to vector<8x32xf32>
    %114 = arith.addf %111, %113 : vector<8x32xf32>
    %115 = arith.addf %114, %89 : vector<8x32xf32>
    %c0_50 = arith.constant 0 : index
    %c0_51 = arith.constant 0 : index
    %116 = vector.load %arg18[%c0_50, %c0_51] : memref<1x32xf32, #tpu.memory_space<vmem>>, vector<1x32xf32>
    %c0_52 = arith.constant 0 : index
    %c0_53 = arith.constant 0 : index
    %117 = vector.load %arg19[%c0_52, %c0_53] : memref<1x32xf32, #tpu.memory_space<vmem>>, vector<1x32xf32>
    %cst_54 = arith.constant dense<0.000000e+00> : vector<8xf32>
    %118 = vector.multi_reduction <add>, %115, %cst_54 [1] : vector<8x32xf32> to vector<8xf32>
    %119 = vector.shape_cast %118 : vector<8xf32> to vector<8x1xf32>
    %cst_55 = arith.constant 3.200000e+01 : f32
    %120 = vector.broadcast %cst_55 : f32 to vector<8x1xf32>
    %121 = arith.divf %119, %120 : vector<8x1xf32>
    %122 = vector.broadcast %121 : vector<8x1xf32> to vector<8x32xf32>
    %123 = arith.subf %115, %122 : vector<8x32xf32>
    %124 = arith.mulf %123, %123 : vector<8x32xf32>
    %cst_56 = arith.constant dense<0.000000e+00> : vector<8xf32>
    %125 = vector.multi_reduction <add>, %124, %cst_56 [1] : vector<8x32xf32> to vector<8xf32>
    %126 = vector.shape_cast %125 : vector<8xf32> to vector<8x1xf32>
    %cst_57 = arith.constant 3.200000e+01 : f32
    %127 = vector.broadcast %cst_57 : f32 to vector<8x1xf32>
    %128 = arith.divf %126, %127 : vector<8x1xf32>
    %129 = vector.broadcast %121 : vector<8x1xf32> to vector<8x32xf32>
    %130 = arith.subf %115, %129 : vector<8x32xf32>
    %cst_58 = arith.constant 9.99999996E-13 : f32
    %131 = vector.broadcast %cst_58 : f32 to vector<8x1xf32>
    %132 = arith.addf %128, %131 : vector<8x1xf32>
    %133 = math.rsqrt %132 : vector<8x1xf32>
    %134 = vector.broadcast %133 : vector<8x1xf32> to vector<8x32xf32>
    %135 = arith.mulf %130, %134 : vector<8x32xf32>
    %136 = vector.broadcast %116 : vector<1x32xf32> to vector<8x32xf32>
    %137 = arith.mulf %135, %136 : vector<8x32xf32>
    %138 = vector.broadcast %117 : vector<1x32xf32> to vector<8x32xf32>
    %139 = arith.addf %137, %138 : vector<8x32xf32>
    %c0_59 = arith.constant 0 : index
    %c0_60 = arith.constant 0 : index
    %c0_61 = arith.constant 0 : index
    %140 = vector.load %arg20[%c0_59, %c0_60, %c0_61] : memref<1x8x32xf32, #tpu.memory_space<vmem>>, vector<1x8x32xf32>
    %141 = vector.shape_cast %140 : vector<1x8x32xf32> to vector<8x32xf32>
    %142 = vector.shape_cast %139 : vector<8x32xf32> to vector<1x8x32xf32>
    tpu.vector_store %arg20[%c0_59, %c0_60, %c0_61], %142 {strides = array<i32>} : memref<1x8x32xf32, #tpu.memory_space<vmem>>, vector<1x8x32xf32>,
    return
  }
  func.func @transform_0(%arg0: i32, %arg1: i32) -> (i32, i32, i32) {
    %c0_i32 = arith.constant 0 : i32
    %c0_i32_0 = arith.constant 0 : i32
    %c0_i32_1 = arith.constant 0 : i32
    return %arg0, %c0_i32, %c0_i32_0 : i32, i32, i32
  }
  func.func @transform_1(%arg0: i32, %arg1: i32) -> (i32, i32, i32) {
    %c0_i32 = arith.constant 0 : i32
    %c0_i32_0 = arith.constant 0 : i32
    %c0_i32_1 = arith.constant 0 : i32
    return %arg0, %c0_i32, %c0_i32_0 : i32, i32, i32
  }
  func.func @transform_2(%arg0: i32, %arg1: i32) -> (i32, i32) {
    %c0_i32 = arith.constant 0 : i32
    %c0_i32_0 = arith.constant 0 : i32
    %c0_i32_1 = arith.constant 0 : i32
    return %c0_i32, %c0_i32_0 : i32, i32
  }
  func.func @transform_3(%arg0: i32, %arg1: i32) -> (i32, i32) {
    %c0_i32 = arith.constant 0 : i32
    %c0_i32_0 = arith.constant 0 : i32
    %c0_i32_1 = arith.constant 0 : i32
    return %c0_i32, %c0_i32_0 : i32, i32
  }
  func.func @transform_4(%arg0: i32, %arg1: i32) -> (i32, i32) {
    %c0_i32 = arith.constant 0 : i32
    %c0_i32_0 = arith.constant 0 : i32
    %c0_i32_1 = arith.constant 0 : i32
    return %c0_i32, %c0_i32_0 : i32, i32
  }
  func.func @transform_5(%arg0: i32, %arg1: i32) -> (i32, i32) {
    %c0_i32 = arith.constant 0 : i32
    %c0_i32_0 = arith.constant 0 : i32
    %c0_i32_1 = arith.constant 0 : i32
    return %c0_i32, %c0_i32_0 : i32, i32
  }
  func.func @transform_6(%arg0: i32, %arg1: i32) -> (i32, i32) {
    %c0_i32 = arith.constant 0 : i32
    %c0_i32_0 = arith.constant 0 : i32
    %c0_i32_1 = arith.constant 0 : i32
    return %c0_i32, %c0_i32_0 : i32, i32
  }
  func.func @transform_7(%arg0: i32, %arg1: i32) -> (i32, i32) {
    %c0_i32 = arith.constant 0 : i32
    %c0_i32_0 = arith.constant 0 : i32
    %c0_i32_1 = arith.constant 0 : i32
    return %c0_i32, %c0_i32_0 : i32, i32
  }
  func.func @transform_8(%arg0: i32, %arg1: i32) -> (i32, i32) {
    %c0_i32 = arith.constant 0 : i32
    %c0_i32_0 = arith.constant 0 : i32
    %c0_i32_1 = arith.constant 0 : i32
    return %c0_i32, %c0_i32_0 : i32, i32
  }
  func.func @transform_9(%arg0: i32, %arg1: i32) -> (i32, i32) {
    %c0_i32 = arith.constant 0 : i32
    %c0_i32_0 = arith.constant 0 : i32
    %c0_i32_1 = arith.constant 0 : i32
    return %c0_i32, %c0_i32_0 : i32, i32
  }
  func.func @transform_10(%arg0: i32, %arg1: i32) -> (i32, i32) {
    %c0_i32 = arith.constant 0 : i32
    %c0_i32_0 = arith.constant 0 : i32
    %c0_i32_1 = arith.constant 0 : i32
    return %c0_i32, %c0_i32_0 : i32, i32
  }
  func.func @transform_11(%arg0: i32, %arg1: i32) -> (i32, i32) {
    %c0_i32 = arith.constant 0 : i32
    %c0_i32_0 = arith.constant 0 : i32
    %c0_i32_1 = arith.constant 0 : i32
    return %c0_i32, %c0_i32_0 : i32, i32
  }
  func.func @transform_12(%arg0: i32, %arg1: i32) -> (i32, i32) {
    %c0_i32 = arith.constant 0 : i32
    %c0_i32_0 = arith.constant 0 : i32
    %c0_i32_1 = arith.constant 0 : i32
    return %c0_i32, %c0_i32_0 : i32, i32
  }
  func.func @transform_13(%arg0: i32, %arg1: i32) -> (i32, i32) {
    %c0_i32 = arith.constant 0 : i32
    %c0_i32_0 = arith.constant 0 : i32
    %c0_i32_1 = arith.constant 0 : i32
    return %c0_i32, %c0_i32_0 : i32, i32
  }
  func.func @transform_14(%arg0: i32, %arg1: i32) -> (i32, i32) {
    %c0_i32 = arith.constant 0 : i32
    %c0_i32_0 = arith.constant 0 : i32
    %c0_i32_1 = arith.constant 0 : i32
    return %c0_i32, %c0_i32_0 : i32, i32
  }
  func.func @transform_15(%arg0: i32, %arg1: i32) -> (i32, i32) {
    %c0_i32 = arith.constant 0 : i32
    %c0_i32_0 = arith.constant 0 : i32
    %c0_i32_1 = arith.constant 0 : i32
    return %c0_i32, %c0_i32_0 : i32, i32
  }
  func.func @transform_16(%arg0: i32, %arg1: i32) -> (i32, i32) {
    %c0_i32 = arith.constant 0 : i32
    %c0_i32_0 = arith.constant 0 : i32
    %c0_i32_1 = arith.constant 0 : i32
    return %c0_i32, %c0_i32_0 : i32, i32
  }
  func.func @transform_17(%arg0: i32, %arg1: i32) -> (i32, i32) {
    %c0_i32 = arith.constant 0 : i32
    %c0_i32_0 = arith.constant 0 : i32
    %c0_i32_1 = arith.constant 0 : i32
    return %c0_i32, %c0_i32_0 : i32, i32
  }
  func.func @transform_18(%arg0: i32, %arg1: i32) -> (i32, i32, i32) {
    %c0_i32 = arith.constant 0 : i32
    %c0_i32_0 = arith.constant 0 : i32
    return %arg0, %arg1, %c0_i32 : i32, i32, i32
  }
}

</mosaic_0001>

<llo_original>
// kernel: tpu_custom_call.1
$region0: #{tpu_custom_call.1}
  #allocation0 [shape = 'u32[]', space=smem, size = 0x4, offset = 0x4, fixed_abs, tag = 'smem constant byte address 0x4 - core index']
  #allocation1 [shape = 'u32[144,128]{1,0:T(1,128)}', space=vmem, size = 0x12000, scoped, tag = 'internal scratch']
  #allocation2 [shape = 'bf16[4,8,8]{2,1,0:T(8,128)(2,1)}', space=vmem, size = 0x2000, scoped, tag = 'scratch operand']
  #allocation3 [shape = 'bf16[4,8,8]{2,1,0:T(8,128)(2,1)}', space=vmem, size = 0x2000, scoped, tag = 'scratch operand']
  %s0 = inlined_call_operand.vmem [shape: f32[2,8,32], index: 0, kind: input, shape index: {}]
  %s1 = inlined_call_operand.hbm [shape: f32[2,1,8], index: 1, kind: input, shape index: {}]
  %s2 = inlined_call_operand.vmem [shape: bf16[32,32], index: 2, kind: input, shape index: {}]
  %s3 = inlined_call_operand.hbm [shape: f32[1,32], index: 3, kind: input, shape index: {}]
  %s4 = inlined_call_operand.vmem [shape: bf16[32,32], index: 4, kind: input, shape index: {}]
  %s5 = inlined_call_operand.hbm [shape: f32[1,32], index: 5, kind: input, shape index: {}]
  %s6 = inlined_call_operand.hbm [shape: bf16[32,32], index: 6, kind: input, shape index: {}]
  %s7 = inlined_call_operand.hbm [shape: f32[1,32], index: 7, kind: input, shape index: {}]
  %s8 = inlined_call_operand.hbm [shape: bf16[32,32], index: 8, kind: input, shape index: {}]
  %s9 = inlined_call_operand.hbm [shape: f32[1,32], index: 9, kind: input, shape index: {}]
  %s10 = inlined_call_operand.vmem [shape: f32[1,32], index: 10, kind: input, shape index: {}]
  %s11 = inlined_call_operand.vmem [shape: f32[1,32], index: 11, kind: input, shape index: {}]
  %s12 = inlined_call_operand.vmem [shape: bf16[32,64], index: 12, kind: input, shape index: {}]
  %s13 = inlined_call_operand.vmem [shape: f32[1,64], index: 13, kind: input, shape index: {}]
  %s14 = inlined_call_operand.vmem [shape: bf16[64,32], index: 14, kind: input, shape index: {}]
  %s15 = inlined_call_operand.vmem [shape: f32[1,32], index: 15, kind: input, shape index: {}]
  %s16 = inlined_call_operand.vmem [shape: f32[1,32], index: 16, kind: input, shape index: {}]
  %s17 = inlined_call_operand.vmem [shape: f32[1,32], index: 17, kind: input, shape index: {}]
  %s18 = inlined_call_operand.hbm [shape: f32[2,8,32], index: 18, kind: output, shape index: {}]
  %s19 = sld [smem:[#allocation0]]
  $region137: #{tpu_custom_call.1} parent=0
    _
  %s21 = ssub.s32 1, %s19
  %s22 = scalar_select 0, %s21, %s19
  $region1: #{tpu_custom_call.1} parent=0
    #allocation4 [shape = 'u8[1024]{0}', space=vmem, size = 0x400, scoped, tag = 'input window, operand 1']
    #allocation5 [shape = 's32[2]{0}', space=sflag, size = 0x8, scoped, tag = 'scoped memory for tpu_custom_call.1']
    #allocation6 [shape = 's32[2]{0}', space=sflag, size = 0x8, scoped, tag = 'scoped memory for tpu_custom_call.1']
    #allocation7 [shape = 'u8[512]{0}', space=vmem, size = 0x400, scoped, tag = 'input window, operand 3, single buffered']
    #allocation8 [shape = 's32[1]{0}', space=sflag, size = 0x4, scoped, tag = 'scoped memory for tpu_custom_call.1']
    #allocation9 [shape = 'u8[512]{0}', space=vmem, size = 0x400, scoped, tag = 'input window, operand 5, single buffered']
    #allocation10 [shape = 'u8[8192]{0}', space=vmem, size = 0x2000, scoped, tag = 'input window, operand 6, single buffered']
    #allocation11 [shape = 's32[1]{0}', space=sflag, size = 0x4, scoped, tag = 'scoped memory for tpu_custom_call.1']
    #allocation12 [shape = 'u8[512]{0}', space=vmem, size = 0x400, scoped, tag = 'input window, operand 7, single buffered']
    #allocation13 [shape = 'u8[8192]{0}', space=vmem, size = 0x2000, scoped, tag = 'input window, operand 8, single buffered']
    #allocation14 [shape = 's32[1]{0}', space=sflag, size = 0x4, scoped, tag = 'scoped memory for tpu_custom_call.1']
    #allocation15 [shape = 'u8[512]{0}', space=vmem, size = 0x400, scoped, tag = 'input window, operand 9, single buffered']
    #allocation16 [shape = 'u8[8192]{0}', space=vmem, size = 0x2000, scoped, tag = 'output window, operand 0']
    %23 = vsyncpa [#allocation5], 0
    %s24 = scalar_lea.sflag [#allocation5], 1
    %25 = vsyncpa %s24, 0
    %26 = vsyncpa [#allocation8], 0
    %27 = vsyncpa [#allocation11], 0
    %28 = vsyncpa [#allocation14], 0
    %29 = vsyncpa [#allocation6], 0
    %s30 = scalar_lea.sflag [#allocation6], 1
    %31 = vsyncpa %s30, 0
    loop: start=0, step=1, limit=4
    $region2: #{tpu_custom_call.1} parent=1 // loop_pre_header
      _
    $region3: #{tpu_custom_call.1} parent=1 // loop_header
      %s33 = sphi 0, %s37
      %p34 = scmp.ge.s32.totalorder %s33, 4
      %s40 = sphi 0, %s52
      %s41 = sphi 0, %s48
      %s42 = sphi 0, %s40
      %s43 = sphi 0, %s41
      %s44 = sphi 0, %s42
      %s45 = sphi 0, %s43
      %s55 = sphi 0, %s57
      %s58 = sphi 0, %s55
      %s59 = sphi 0, %s58
      %s75 = sphi 0, %s59
      %s81 = sphi 0, %s83
      %s84 = sphi 0, %s81
      %s85 = sphi 0, %s84
      %s101 = sphi 0, %s85
      %s105 = sphi 0, %s105
      %s107 = sphi 0, %s105
      %s108 = sphi 0, %s107
      %s122 = sphi 0, %s108
      %s126 = sphi 0, %s126
      %s128 = sphi 0, %s126
      %s129 = sphi 0, %s128
      %s143 = sphi 0, %s129
      %s147 = sphi 0, %s147
      %s149 = sphi 0, %s147
      %s150 = sphi 0, %s149
      %s164 = sphi 0, %s150
      %s168 = sphi 0, %s168
      %s170 = sphi 0, %s168
      %s171 = sphi 0, %s170
      %s185 = sphi 0, %s171
      %s189 = sphi 0, %s189
      %s191 = sphi 0, %s189
      %s192 = sphi 0, %s191
      %s206 = sphi 0, %s192
      %s210 = sphi 0, %s210
      %s212 = sphi 0, %s210
      %s213 = sphi 0, %s212
      %s227 = sphi 0, %s213
      %s231 = sphi 0, %s231
      %s233 = sphi 0, %s231
      %s234 = sphi 0, %s233
      %s248 = sphi 0, %s234
      %s252 = sphi 0, %s252
      %s254 = sphi 0, %s252
      %s255 = sphi 0, %s254
      %s269 = sphi 0, %s255
      %s273 = sphi 0, %s273
      %s275 = sphi 0, %s273
      %s276 = sphi 0, %s275
      %s290 = sphi 0, %s276
      %s294 = sphi 0, %s294
      %s296 = sphi 0, %s294
      %s297 = sphi 0, %s296
      %s311 = sphi 0, %s297
      %s315 = sphi 0, %s315
      %s317 = sphi 0, %s315
      %s318 = sphi 0, %s317
      %s332 = sphi 0, %s318
      %s336 = sphi 0, %s336
      %s338 = sphi 0, %s336
      %s339 = sphi 0, %s338
      %s353 = sphi 0, %s339
      %s357 = sphi 0, %s357
      %s359 = sphi 0, %s357
      %s360 = sphi 0, %s359
      %s374 = sphi 0, %s360
      %s378 = sphi 0, %s378
      %s380 = sphi 0, %s378
      %s381 = sphi 0, %s380
      %s395 = sphi 0, %s381
      %s399 = sphi 0, %s399
      %s401 = sphi 0, %s399
      %s402 = sphi 0, %s401
      %s416 = sphi 0, %s402
      %s420 = sphi 0, %s420
      %s422 = sphi 0, %s420
      %s423 = sphi 0, %s422
      %s437 = sphi 0, %s423
      %s445 = sphi 0, %s447
      %s448 = sphi 0, %s445
      %s449 = sphi 0, %s448
      %s465 = sphi 0, %s449
    $region4: #{tpu_custom_call.1} parent=1 // loop_header_branch
      %36 = sbr.rel (%p34) target = $region8
    $region5: #{tpu_custom_call.1} parent=1 // loop_body
      %s38 = ssub.s32 %s33, 1
      %s39 = ssub.s32 %s33, 2
      %s46 = sadd.s32 1, %s41
      %p47 = scmp.ge.s32.totalorder %s46, 1
      %s48 = scalar_select %p47, 0, %s46
      %s49 = sadd.s32 1, %s40
      %s50 = scalar_select %p47, %s49, %s40
      %p51 = scmp.ge.s32.totalorder %s50, 2
      %s52 = scalar_select %p51, 0, %s50
      %s53 = ssub.s32 %s40, %s52
      %p54 = scmp.eq.s32.totalorder %s53, 0
      %s56 = sadd.s32 %s55, 1
      %s57 = scalar_select %p54, %s55, %s56
      %p60 = pneg %p54
      %p61 = scmp.eq.s32.totalorder %s33, 1
      %p62 = por %p60, %p61
      %p63 = scmp.ne.s32.totalorder %s55, %s58
      %p64 = scmp.eq.s32.totalorder %s33, 0
      %p65 = por %p63, %p64
      %p66 = scmp.ne.s32.totalorder %s55, %s58
      %p67 = scmp.eq.s32.totalorder %s38, 1
      %p68 = por %p66, %p67
      %p69 = scmp.ne.s32.totalorder %s58, %s59
      %p70 = scmp.eq.s32.totalorder %s38, 0
      %p71 = por %p69, %p70
      %p72 = scmp.ne.s32.totalorder %s58, %s59
      %p73 = scmp.eq.s32.totalorder %s39, 1
      %p74 = por %p72, %p73
      %p76 = scmp.ne.s32.totalorder %s59, %s75
      %p77 = scmp.eq.s32.totalorder %s39, 0
      %p78 = por %p76, %p77
      %s79 = ssub.s32 %s40, %s52
      %p80 = scmp.eq.s32.totalorder %s79, 0
      %s82 = sadd.s32 %s81, 1
      %s83 = scalar_select %p80, %s81, %s82
      %p86 = pneg %p80
      %p87 = scmp.eq.s32.totalorder %s33, 1
      %p88 = por %p86, %p87
      %p89 = scmp.ne.s32.totalorder %s81, %s84
      %p90 = scmp.eq.s32.totalorder %s33, 0
      %p91 = por %p89, %p90
      %p92 = scmp.ne.s32.totalorder %s81, %s84
      %p93 = scmp.eq.s32.totalorder %s38, 1
      %p94 = por %p92, %p93
      %p95 = scmp.ne.s32.totalorder %s84, %s85
      %p96 = scmp.eq.s32.totalorder %s38, 0
      %p97 = por %p95, %p96
      %p98 = scmp.ne.s32.totalorder %s84, %s85
      %p99 = scmp.eq.s32.totalorder %s39, 1
      %p100 = por %p98, %p99
      %p102 = scmp.ne.s32.totalorder %s85, %s101
      %p103 = scmp.eq.s32.totalorder %s39, 0
      %p104 = por %p102, %p103
      %s106 = sadd.s32 %s105, 1
      %p109 = scmp.eq.s32.totalorder %s33, 1
      %p110 = scmp.ne.s32.totalorder %s105, %s107
      %p111 = scmp.eq.s32.totalorder %s33, 0
      %p112 = por %p110, %p111
      %p113 = scmp.ne.s32.totalorder %s105, %s107
      %p114 = scmp.eq.s32.totalorder %s38, 1
      %p115 = por %p113, %p114
      %p116 = scmp.ne.s32.totalorder %s107, %s108
      %p117 = scmp.eq.s32.totalorder %s38, 0
      %p118 = por %p116, %p117
      %p119 = scmp.ne.s32.totalorder %s107, %s108
      %p120 = scmp.eq.s32.totalorder %s39, 1
      %p121 = por %p119, %p120
      %p123 = scmp.ne.s32.totalorder %s108, %s122
      %p124 = scmp.eq.s32.totalorder %s39, 0
      %p125 = por %p123, %p124
      %s127 = sadd.s32 %s126, 1
      %p130 = scmp.eq.s32.totalorder %s33, 1
      %p131 = scmp.ne.s32.totalorder %s126, %s128
      %p132 = scmp.eq.s32.totalorder %s33, 0
      %p133 = por %p131, %p132
      %p134 = scmp.ne.s32.totalorder %s126, %s128
      %p135 = scmp.eq.s32.totalorder %s38, 1
      %p136 = por %p134, %p135
      %p137 = scmp.ne.s32.totalorder %s128, %s129
      %p138 = scmp.eq.s32.totalorder %s38, 0
      %p139 = por %p137, %p138
      %p140 = scmp.ne.s32.totalorder %s128, %s129
      %p141 = scmp.eq.s32.totalorder %s39, 1
      %p142 = por %p140, %p141
      %p144 = scmp.ne.s32.totalorder %s129, %s143
      %p145 = scmp.eq.s32.totalorder %s39, 0
      %p146 = por %p144, %p145
      %s148 = sadd.s32 %s147, 1
      %p151 = scmp.eq.s32.totalorder %s33, 1
      %p152 = scmp.ne.s32.totalorder %s147, %s149
      %p153 = scmp.eq.s32.totalorder %s33, 0
      %p154 = por %p152, %p153
      %p155 = scmp.ne.s32.totalorder %s147, %s149
      %p156 = scmp.eq.s32.totalorder %s38, 1
      %p157 = por %p155, %p156
      %p158 = scmp.ne.s32.totalorder %s149, %s150
      %p159 = scmp.eq.s32.totalorder %s38, 0
      %p160 = por %p158, %p159
      %p161 = scmp.ne.s32.totalorder %s149, %s150
      %p162 = scmp.eq.s32.totalorder %s39, 1
      %p163 = por %p161, %p162
      %p165 = scmp.ne.s32.totalorder %s150, %s164
      %p166 = scmp.eq.s32.totalorder %s39, 0
      %p167 = por %p165, %p166
      %s169 = sadd.s32 %s168, 1
      %p172 = scmp.eq.s32.totalorder %s33, 1
      %p173 = scmp.ne.s32.totalorder %s168, %s170
      %p174 = scmp.eq.s32.totalorder %s33, 0
      %p175 = por %p173, %p174
      %p176 = scmp.ne.s32.totalorder %s168, %s170
      %p177 = scmp.eq.s32.totalorder %s38, 1
      %p178 = por %p176, %p177
      %p179 = scmp.ne.s32.totalorder %s170, %s171
      %p180 = scmp.eq.s32.totalorder %s38, 0
      %p181 = por %p179, %p180
      %p182 = scmp.ne.s32.totalorder %s170, %s171
      %p183 = scmp.eq.s32.totalorder %s39, 1
      %p184 = por %p182, %p183
      %p186 = scmp.ne.s32.totalorder %s171, %s185
      %p187 = scmp.eq.s32.totalorder %s39, 0
      %p188 = por %p186, %p187
      %s190 = sadd.s32 %s189, 1
      %p193 = scmp.eq.s32.totalorder %s33, 1
      %p194 = scmp.ne.s32.totalorder %s189, %s191
      %p195 = scmp.eq.s32.totalorder %s33, 0
      %p196 = por %p194, %p195
      %p197 = scmp.ne.s32.totalorder %s189, %s191
      %p198 = scmp.eq.s32.totalorder %s38, 1
      %p199 = por %p197, %p198
      %p200 = scmp.ne.s32.totalorder %s191, %s192
      %p201 = scmp.eq.s32.totalorder %s38, 0
      %p202 = por %p200, %p201
      %p203 = scmp.ne.s32.totalorder %s191, %s192
      %p204 = scmp.eq.s32.totalorder %s39, 1
      %p205 = por %p203, %p204
      %p207 = scmp.ne.s32.totalorder %s192, %s206
      %p208 = scmp.eq.s32.totalorder %s39, 0
      %p209 = por %p207, %p208
      %s211 = sadd.s32 %s210, 1
      %p214 = scmp.eq.s32.totalorder %s33, 1
      %p215 = scmp.ne.s32.totalorder %s210, %s212
      %p216 = scmp.eq.s32.totalorder %s33, 0
      %p217 = por %p215, %p216
      %p218 = scmp.ne.s32.totalorder %s210, %s212
      %p219 = scmp.eq.s32.totalorder %s38, 1
      %p220 = por %p218, %p219
      %p221 = scmp.ne.s32.totalorder %s212, %s213
      %p222 = scmp.eq.s32.totalorder %s38, 0
      %p223 = por %p221, %p222
      %p224 = scmp.ne.s32.totalorder %s212, %s213
      %p225 = scmp.eq.s32.totalorder %s39, 1
      %p226 = por %p224, %p225
      %p228 = scmp.ne.s32.totalorder %s213, %s227
      %p229 = scmp.eq.s32.totalorder %s39, 0
      %p230 = por %p228, %p229
      %s232 = sadd.s32 %s231, 1
      %p235 = scmp.eq.s32.totalorder %s33, 1
      %p236 = scmp.ne.s32.totalorder %s231, %s233
      %p237 = scmp.eq.s32.totalorder %s33, 0
      %p238 = por %p236, %p237
      %p239 = scmp.ne.s32.totalorder %s231, %s233
      %p240 = scmp.eq.s32.totalorder %s38, 1
      %p241 = por %p239, %p240
      %p242 = scmp.ne.s32.totalorder %s233, %s234
      %p243 = scmp.eq.s32.totalorder %s38, 0
      %p244 = por %p242, %p243
      %p245 = scmp.ne.s32.totalorder %s233, %s234
      %p246 = scmp.eq.s32.totalorder %s39, 1
      %p247 = por %p245, %p246
      %p249 = scmp.ne.s32.totalorder %s234, %s248
      %p250 = scmp.eq.s32.totalorder %s39, 0
      %p251 = por %p249, %p250
      %s253 = sadd.s32 %s252, 1
      %p256 = scmp.eq.s32.totalorder %s33, 1
      %p257 = scmp.ne.s32.totalorder %s252, %s254
      %p258 = scmp.eq.s32.totalorder %s33, 0
      %p259 = por %p257, %p258
      %p260 = scmp.ne.s32.totalorder %s252, %s254
      %p261 = scmp.eq.s32.totalorder %s38, 1
      %p262 = por %p260, %p261
      %p263 = scmp.ne.s32.totalorder %s254, %s255
      %p264 = scmp.eq.s32.totalorder %s38, 0
      %p265 = por %p263, %p264
      %p266 = scmp.ne.s32.totalorder %s254, %s255
      %p267 = scmp.eq.s32.totalorder %s39, 1
      %p268 = por %p266, %p267
      %p270 = scmp.ne.s32.totalorder %s255, %s269
      %p271 = scmp.eq.s32.totalorder %s39, 0
      %p272 = por %p270, %p271
      %s274 = sadd.s32 %s273, 1
      %p277 = scmp.eq.s32.totalorder %s33, 1
      %p278 = scmp.ne.s32.totalorder %s273, %s275
      %p279 = scmp.eq.s32.totalorder %s33, 0
      %p280 = por %p278, %p279
      %p281 = scmp.ne.s32.totalorder %s273, %s275
      %p282 = scmp.eq.s32.totalorder %s38, 1
      %p283 = por %p281, %p282
      %p284 = scmp.ne.s32.totalorder %s275, %s276
      %p285 = scmp.eq.s32.totalorder %s38, 0
      %p286 = por %p284, %p285
      %p287 = scmp.ne.s32.totalorder %s275, %s276
      %p288 = scmp.eq.s32.totalorder %s39, 1
      %p289 = por %p287, %p288
      %p291 = scmp.ne.s32.totalorder %s276, %s290
      %p292 = scmp.eq.s32.totalorder %s39, 0
      %p293 = por %p291, %p292
      %s295 = sadd.s32 %s294, 1
      %p298 = scmp.eq.s32.totalorder %s33, 1
      %p299 = scmp.ne.s32.totalorder %s294, %s296
      %p300 = scmp.eq.s32.totalorder %s33, 0
      %p301 = por %p299, %p300
      %p302 = scmp.ne.s32.totalorder %s294, %s296
      %p303 = scmp.eq.s32.totalorder %s38, 1
      %p304 = por %p302, %p303
      %p305 = scmp.ne.s32.totalorder %s296, %s297
      %p306 = scmp.eq.s32.totalorder %s38, 0
      %p307 = por %p305, %p306
      %p308 = scmp.ne.s32.totalorder %s296, %s297
      %p309 = scmp.eq.s32.totalorder %s39, 1
      %p310 = por %p308, %p309
      %p312 = scmp.ne.s32.totalorder %s297, %s311
      %p313 = scmp.eq.s32.totalorder %s39, 0
      %p314 = por %p312, %p313
      %s316 = sadd.s32 %s315, 1
      %p319 = scmp.eq.s32.totalorder %s33, 1
      %p320 = scmp.ne.s32.totalorder %s315, %s317
      %p321 = scmp.eq.s32.totalorder %s33, 0
      %p322 = por %p320, %p321
      %p323 = scmp.ne.s32.totalorder %s315, %s317
      %p324 = scmp.eq.s32.totalorder %s38, 1
      %p325 = por %p323, %p324
      %p326 = scmp.ne.s32.totalorder %s317, %s318
      %p327 = scmp.eq.s32.totalorder %s38, 0
      %p328 = por %p326, %p327
      %p329 = scmp.ne.s32.totalorder %s317, %s318
      %p330 = scmp.eq.s32.totalorder %s39, 1
      %p331 = por %p329, %p330
      %p333 = scmp.ne.s32.totalorder %s318, %s332
      %p334 = scmp.eq.s32.totalorder %s39, 0
      %p335 = por %p333, %p334
      %s337 = sadd.s32 %s336, 1
      %p340 = scmp.eq.s32.totalorder %s33, 1
      %p341 = scmp.ne.s32.totalorder %s336, %s338
      %p342 = scmp.eq.s32.totalorder %s33, 0
      %p343 = por %p341, %p342
      %p344 = scmp.ne.s32.totalorder %s336, %s338
      %p345 = scmp.eq.s32.totalorder %s38, 1
      %p346 = por %p344, %p345
      %p347 = scmp.ne.s32.totalorder %s338, %s339
      %p348 = scmp.eq.s32.totalorder %s38, 0
      %p349 = por %p347, %p348
      %p350 = scmp.ne.s32.totalorder %s338, %s339
      %p351 = scmp.eq.s32.totalorder %s39, 1
      %p352 = por %p350, %p351
      %p354 = scmp.ne.s32.totalorder %s339, %s353
      %p355 = scmp.eq.s32.totalorder %s39, 0
      %p356 = por %p354, %p355
      %s358 = sadd.s32 %s357, 1
      %p361 = scmp.eq.s32.totalorder %s33, 1
      %p362 = scmp.ne.s32.totalorder %s357, %s359
      %p363 = scmp.eq.s32.totalorder %s33, 0
      %p364 = por %p362, %p363
      %p365 = scmp.ne.s32.totalorder %s357, %s359
      %p366 = scmp.eq.s32.totalorder %s38, 1
      %p367 = por %p365, %p366
      %p368 = scmp.ne.s32.totalorder %s359, %s360
      %p369 = scmp.eq.s32.totalorder %s38, 0
      %p370 = por %p368, %p369
      %p371 = scmp.ne.s32.totalorder %s359, %s360
      %p372 = scmp.eq.s32.totalorder %s39, 1
      %p373 = por %p371, %p372
      %p375 = scmp.ne.s32.totalorder %s360, %s374
      %p376 = scmp.eq.s32.totalorder %s39, 0
      %p377 = por %p375, %p376
      %s379 = sadd.s32 %s378, 1
      %p382 = scmp.eq.s32.totalorder %s33, 1
      %p383 = scmp.ne.s32.totalorder %s378, %s380
      %p384 = scmp.eq.s32.totalorder %s33, 0
      %p385 = por %p383, %p384
      %p386 = scmp.ne.s32.totalorder %s378, %s380
      %p387 = scmp.eq.s32.totalorder %s38, 1
      %p388 = por %p386, %p387
      %p389 = scmp.ne.s32.totalorder %s380, %s381
      %p390 = scmp.eq.s32.totalorder %s38, 0
      %p391 = por %p389, %p390
      %p392 = scmp.ne.s32.totalorder %s380, %s381
      %p393 = scmp.eq.s32.totalorder %s39, 1
      %p394 = por %p392, %p393
      %p396 = scmp.ne.s32.totalorder %s381, %s395
      %p397 = scmp.eq.s32.totalorder %s39, 0
      %p398 = por %p396, %p397
      %s400 = sadd.s32 %s399, 1
      %p403 = scmp.eq.s32.totalorder %s33, 1
      %p404 = scmp.ne.s32.totalorder %s399, %s401
      %p405 = scmp.eq.s32.totalorder %s33, 0
      %p406 = por %p404, %p405
      %p407 = scmp.ne.s32.totalorder %s399, %s401
      %p408 = scmp.eq.s32.totalorder %s38, 1
      %p409 = por %p407, %p408
      %p410 = scmp.ne.s32.totalorder %s401, %s402
      %p411 = scmp.eq.s32.totalorder %s38, 0
      %p412 = por %p410, %p411
      %p413 = scmp.ne.s32.totalorder %s401, %s402
      %p414 = scmp.eq.s32.totalorder %s39, 1
      %p415 = por %p413, %p414
      %p417 = scmp.ne.s32.totalorder %s402, %s416
      %p418 = scmp.eq.s32.totalorder %s39, 0
      %p419 = por %p417, %p418
      %s421 = sadd.s32 %s420, 1
      %p424 = scmp.eq.s32.totalorder %s33, 1
      %p425 = scmp.ne.s32.totalorder %s420, %s422
      %p426 = scmp.eq.s32.totalorder %s33, 0
      %p427 = por %p425, %p426
      %p428 = scmp.ne.s32.totalorder %s420, %s422
      %p429 = scmp.eq.s32.totalorder %s38, 1
      %p430 = por %p428, %p429
      %p431 = scmp.ne.s32.totalorder %s422, %s423
      %p432 = scmp.eq.s32.totalorder %s38, 0
      %p433 = por %p431, %p432
      %p434 = scmp.ne.s32.totalorder %s422, %s423
      %p435 = scmp.eq.s32.totalorder %s39, 1
      %p436 = por %p434, %p435
      %p438 = scmp.ne.s32.totalorder %s423, %s437
      %p439 = scmp.eq.s32.totalorder %s39, 0
      %p440 = por %p438, %p439
      %s441 = ssub.s32 %s40, %s52
      %s442 = ssub.s32 %s41, %s48
      %s443 = sor.u32 %s441, %s442
      %p444 = scmp.eq.s32.totalorder %s443, 0
      %s446 = sadd.s32 %s445, 1
      %s447 = scalar_select %p444, %s445, %s446
      %p450 = pneg %p444
      %p451 = scmp.eq.s32.totalorder %s33, 1
      %p452 = por %p450, %p451
      %p453 = scmp.ne.s32.totalorder %s445, %s448
      %p454 = scmp.eq.s32.totalorder %s33, 0
      %p455 = por %p453, %p454
      %p456 = scmp.ne.s32.totalorder %s445, %s448
      %p457 = scmp.eq.s32.totalorder %s38, 1
      %p458 = por %p456, %p457
      %p459 = scmp.ne.s32.totalorder %s448, %s449
      %p460 = scmp.eq.s32.totalorder %s38, 0
      %p461 = por %p459, %p460
      %p462 = scmp.ne.s32.totalorder %s448, %s449
      %p463 = scmp.eq.s32.totalorder %s39, 1
      %p464 = por %p462, %p463
      %p466 = scmp.ne.s32.totalorder %s449, %s465
      %p467 = scmp.eq.s32.totalorder %s39, 0
      %p468 = por %p466, %p467
      %p469 = scmp.le.s32.totalorder 1, %s33
      %p470 = scmp.lt.s32.totalorder %s33, 3
      %p471 = pnand %p469, %p470
      %p472 = pneg %p471
      // Predicated region
      $region9: #{tpu_custom_call.1} parent=5 // pred_check
        _
      $region10: #{tpu_custom_call.1} parent=5 // pred_check_branch
        %474 = sbr.rel (%p471) target = $region12
      $region11: #{tpu_custom_call.1} parent=5 // pred_region
        %s475 = ssub.s32 %s33, 1
        // Predicated region
        $region13: #{tpu_custom_call.1} parent=11 // pred_check
          %p476 = pneg %p118
        $region14: #{tpu_custom_call.1} parent=11 // pred_check_branch
          %478 = sbr.rel (%p476) target = $region16
        $region15: #{tpu_custom_call.1} parent=11 // pred_region
          _
        $region16: #{tpu_custom_call.1} parent=11 // pred_fallthru
          _
        // Predicated region
        $region17: #{tpu_custom_call.1} parent=11 // pred_check
          %p479 = pneg %p139
        $region18: #{tpu_custom_call.1} parent=11 // pred_check_branch
          %481 = sbr.rel (%p479) target = $region20
        $region19: #{tpu_custom_call.1} parent=11 // pred_region
          %s483 = ssub.s32 16, 16
          %484 = vsyncadd [#allocation8], %s483
          %s486 = sshll.u32 [#allocation7], 4
          %s487 = int_to_ptr.vmem [resolvable:$true] %s486
          %489 = dma.hbm_to_vmem [thread:$0]  %s3, 16, %s487, [#allocation8]
        $region20: #{tpu_custom_call.1} parent=11 // pred_fallthru
          _
        // Predicated region
        $region21: #{tpu_custom_call.1} parent=11 // pred_check
          %p490 = pneg %p160
        $region22: #{tpu_custom_call.1} parent=11 // pred_check_branch
          %492 = sbr.rel (%p490) target = $region24
        $region23: #{tpu_custom_call.1} parent=11 // pred_region
          _
        $region24: #{tpu_custom_call.1} parent=11 // pred_fallthru
          _
        // Predicated region
        $region25: #{tpu_custom_call.1} parent=11 // pred_check
          %p493 = pneg %p181
        $region26: #{tpu_custom_call.1} parent=11 // pred_check_branch
          %495 = sbr.rel (%p493) target = $region28
        $region27: #{tpu_custom_call.1} parent=11 // pred_region
          %s497 = ssub.s32 16, 16
          %498 = vsyncadd [#allocation8], %s497
          %s500 = sshll.u32 [#allocation9], 4
          %s501 = int_to_ptr.vmem [resolvable:$true] %s500
          %503 = dma.hbm_to_vmem [thread:$0]  %s5, 16, %s501, [#allocation8]
        $region28: #{tpu_custom_call.1} parent=11 // pred_fallthru
          _
        // Predicated region
        $region29: #{tpu_custom_call.1} parent=11 // pred_check
          %p504 = pneg %p202
        $region30: #{tpu_custom_call.1} parent=11 // pred_check_branch
          %506 = sbr.rel (%p504) target = $region32
        $region31: #{tpu_custom_call.1} parent=11 // pred_region
          %s508 = ssub.s32 256, 256
          %509 = vsyncadd [#allocation11], %s508
          %s510 = sshll.u32 [#allocation10], 4
          %s511 = int_to_ptr.vmem [resolvable:$true] %s510
          %516 = dma.hbm_to_vmem [thread:$0]  %s6, 256, %s511, [#allocation11], 64, 64, 4
        $region32: #{tpu_custom_call.1} parent=11 // pred_fallthru
          _
        // Predicated region
        $region33: #{tpu_custom_call.1} parent=11 // pred_check
          %p517 = pneg %p223
        $region34: #{tpu_custom_call.1} parent=11 // pred_check_branch
          %519 = sbr.rel (%p517) target = $region36
        $region35: #{tpu_custom_call.1} parent=11 // pred_region
          %s521 = ssub.s32 16, 16
          %522 = vsyncadd [#allocation11], %s521
          %s524 = sshll.u32 [#allocation12], 4
          %s525 = int_to_ptr.vmem [resolvable:$true] %s524
          %527 = dma.hbm_to_vmem [thread:$0]  %s7, 16, %s525, [#allocation11]
        $region36: #{tpu_custom_call.1} parent=11 // pred_fallthru
          _
        // Predicated region
        $region37: #{tpu_custom_call.1} parent=11 // pred_check
          %p528 = pneg %p244
        $region38: #{tpu_custom_call.1} parent=11 // pred_check_branch
          %530 = sbr.rel (%p528) target = $region40
        $region39: #{tpu_custom_call.1} parent=11 // pred_region
          %s532 = ssub.s32 256, 256
          %533 = vsyncadd [#allocation14], %s532
          %s534 = sshll.u32 [#allocation13], 4
          %s535 = int_to_ptr.vmem [resolvable:$true] %s534
          %540 = dma.hbm_to_vmem [thread:$0]  %s8, 256, %s535, [#allocation14], 64, 64, 4
        $region40: #{tpu_custom_call.1} parent=11 // pred_fallthru
          _
        // Predicated region
        $region41: #{tpu_custom_call.1} parent=11 // pred_check
          %p541 = pneg %p265
        $region42: #{tpu_custom_call.1} parent=11 // pred_check_branch
          %543 = sbr.rel (%p541) target = $region44
        $region43: #{tpu_custom_call.1} parent=11 // pred_region
          %s545 = ssub.s32 16, 16
          %546 = vsyncadd [#allocation14], %s545
          %s548 = sshll.u32 [#allocation15], 4
          %s549 = int_to_ptr.vmem [resolvable:$true] %s548
          %551 = dma.hbm_to_vmem [thread:$0]  %s9, 16, %s549, [#allocation14]
        $region44: #{tpu_custom_call.1} parent=11 // pred_fallthru
          _
        // Predicated region
        $region45: #{tpu_custom_call.1} parent=11 // pred_check
          %p552 = pneg %p286
        $region46: #{tpu_custom_call.1} parent=11 // pred_check_branch
          %554 = sbr.rel (%p552) target = $region48
        $region47: #{tpu_custom_call.1} parent=11 // pred_region
          _
        $region48: #{tpu_custom_call.1} parent=11 // pred_fallthru
          _
        // Predicated region
        $region49: #{tpu_custom_call.1} parent=11 // pred_check
          %p555 = pneg %p307
        $region50: #{tpu_custom_call.1} parent=11 // pred_check_branch
          %557 = sbr.rel (%p555) target = $region52
        $region51: #{tpu_custom_call.1} parent=11 // pred_region
          _
        $region52: #{tpu_custom_call.1} parent=11 // pred_fallthru
          _
        // Predicated region
        $region53: #{tpu_custom_call.1} parent=11 // pred_check
          %p558 = pneg %p328
        $region54: #{tpu_custom_call.1} parent=11 // pred_check_branch
          %560 = sbr.rel (%p558) target = $region56
        $region55: #{tpu_custom_call.1} parent=11 // pred_region
          _
        $region56: #{tpu_custom_call.1} parent=11 // pred_fallthru
          _
        // Predicated region
        $region57: #{tpu_custom_call.1} parent=11 // pred_check
          %p561 = pneg %p349
        $region58: #{tpu_custom_call.1} parent=11 // pred_check_branch
          %563 = sbr.rel (%p561) target = $region60
        $region59: #{tpu_custom_call.1} parent=11 // pred_region
          _
        $region60: #{tpu_custom_call.1} parent=11 // pred_fallthru
          _
        // Predicated region
        $region61: #{tpu_custom_call.1} parent=11 // pred_check
          %p564 = pneg %p370
        $region62: #{tpu_custom_call.1} parent=11 // pred_check_branch
          %566 = sbr.rel (%p564) target = $region64
        $region63: #{tpu_custom_call.1} parent=11 // pred_region
          _
        $region64: #{tpu_custom_call.1} parent=11 // pred_fallthru
          _
        // Predicated region
        $region65: #{tpu_custom_call.1} parent=11 // pred_check
          %p567 = pneg %p391
        $region66: #{tpu_custom_call.1} parent=11 // pred_check_branch
          %569 = sbr.rel (%p567) target = $region68
        $region67: #{tpu_custom_call.1} parent=11 // pred_region
          _
        $region68: #{tpu_custom_call.1} parent=11 // pred_fallthru
          _
        // Predicated region
        $region69: #{tpu_custom_call.1} parent=11 // pred_check
          %p570 = pneg %p412
        $region70: #{tpu_custom_call.1} parent=11 // pred_check_branch
          %572 = sbr.rel (%p570) target = $region72
        $region71: #{tpu_custom_call.1} parent=11 // pred_region
          _
        $region72: #{tpu_custom_call.1} parent=11 // pred_fallthru
          _
        // Predicated region
        $region73: #{tpu_custom_call.1} parent=11 // pred_check
          %p573 = pneg %p433
        $region74: #{tpu_custom_call.1} parent=11 // pred_check_branch
          %575 = sbr.rel (%p573) target = $region76
        $region75: #{tpu_custom_call.1} parent=11 // pred_region
          _
        $region76: #{tpu_custom_call.1} parent=11 // pred_fallthru
          _
      $region12: #{tpu_custom_call.1} parent=5 // pred_fallthru
        _
      %p576 = scmp.lt.s32.totalorder %s33, 2
      // Predicated region
      $region77: #{tpu_custom_call.1} parent=5 // pred_check
        %p577 = pneg %p576
      $region78: #{tpu_custom_call.1} parent=5 // pred_check_branch
        %579 = sbr.rel (%p577) target = $region80
      $region79: #{tpu_custom_call.1} parent=5 // pred_region
        // Predicated region
        $region81: #{tpu_custom_call.1} parent=79 // pred_check
          %p580 = pneg %p65
        $region82: #{tpu_custom_call.1} parent=79 // pred_check_branch
          %582 = sbr.rel (%p580) target = $region84
        $region83: #{tpu_custom_call.1} parent=79 // pred_region
          %p583 = scmp.lt.s32.totalorder %s40, 1
          %s584 = scalar_select %p583, %s40, 1
          %s585 = smul.addr %s584, 8
          %s586 = scalar_lea.vmem %s0, %s585
        $region84: #{tpu_custom_call.1} parent=79 // pred_fallthru
          _
        // Predicated region
        $region85: #{tpu_custom_call.1} parent=79 // pred_check
          %p587 = pneg %p91
        $region86: #{tpu_custom_call.1} parent=79 // pred_check_branch
          %589 = sbr.rel (%p587) target = $region88
        $region87: #{tpu_custom_call.1} parent=79 // pred_region
          %s590 = sand.u32 %s81, 1
          %s591 = scalar_lea.sflag [#allocation5], %s590
          %s592 = sand.u32 %s81, 1
          %s593 = scalar_lea.vmem [#allocation4], %s592
          %s595 = ssub.s32 16, 16
          %596 = vsyncadd %s591, %s595
          %s597 = smul.addr %s40, 16
          %s598 = scalar_lea.hbm %s1, %s597
          %s600 = sshll.u32 %s593, 4
          %s601 = int_to_ptr.vmem [resolvable:$true] %s600
          %603 = dma.hbm_to_vmem [thread:$0]  %s598, 16, %s601, %s591
        $region88: #{tpu_custom_call.1} parent=79 // pred_fallthru
          _
      $region80: #{tpu_custom_call.1} parent=5 // pred_fallthru
        _
      %p604 = scmp.le.s32.totalorder 1, %s33
      %p605 = scmp.lt.s32.totalorder %s33, 3
      %p606 = pnand %p604, %p605
      %p607 = pneg %p606
      // Predicated region
      $region89: #{tpu_custom_call.1} parent=5 // pred_check
        _
      $region90: #{tpu_custom_call.1} parent=5 // pred_check_branch
        %609 = sbr.rel (%p606) target = $region92
      $region91: #{tpu_custom_call.1} parent=5 // pred_region
        %s610 = ssub.s32 %s33, 1
        %s611 = sand.u32 %s84, 1
        %s612 = scalar_lea.sflag [#allocation5], %s611
        %s613 = sand.u32 %s84, 1
        %s614 = scalar_lea.vmem [#allocation4], %s613
        // Predicated region
        $region93: #{tpu_custom_call.1} parent=91 // pred_check
          %p615 = pneg %p97
        $region94: #{tpu_custom_call.1} parent=91 // pred_check_branch
          %617 = sbr.rel (%p615) target = $region96
        $region95: #{tpu_custom_call.1} parent=91 // pred_region
          %618 = dma.done %s612, 16
        $region96: #{tpu_custom_call.1} parent=91 // pred_fallthru
          _
        // Predicated region
        $region97: #{tpu_custom_call.1} parent=91 // pred_check
          %p619 = pneg %p139
        $region98: #{tpu_custom_call.1} parent=91 // pred_check_branch
          %621 = sbr.rel (%p619) target = $region100
        $region99: #{tpu_custom_call.1} parent=91 // pred_region
          %622 = dma.done [#allocation8], 16
        $region100: #{tpu_custom_call.1} parent=91 // pred_fallthru
          _
        // Predicated region
        $region101: #{tpu_custom_call.1} parent=91 // pred_check
          %p623 = pneg %p181
        $region102: #{tpu_custom_call.1} parent=91 // pred_check_branch
          %625 = sbr.rel (%p623) target = $region104
        $region103: #{tpu_custom_call.1} parent=91 // pred_region
          %626 = dma.done [#allocation8], 16
        $region104: #{tpu_custom_call.1} parent=91 // pred_fallthru
          _
        // Predicated region
        $region105: #{tpu_custom_call.1} parent=91 // pred_check
          %p627 = pneg %p202
        $region106: #{tpu_custom_call.1} parent=91 // pred_check_branch
          %629 = sbr.rel (%p627) target = $region108
        $region107: #{tpu_custom_call.1} parent=91 // pred_region
          %630 = dma.done [#allocation11], 256
        $region108: #{tpu_custom_call.1} parent=91 // pred_fallthru
          _
        // Predicated region
        $region109: #{tpu_custom_call.1} parent=91 // pred_check
          %p631 = pneg %p223
        $region110: #{tpu_custom_call.1} parent=91 // pred_check_branch
          %633 = sbr.rel (%p631) target = $region112
        $region111: #{tpu_custom_call.1} parent=91 // pred_region
          %634 = dma.done [#allocation11], 16
        $region112: #{tpu_custom_call.1} parent=91 // pred_fallthru
          _
        // Predicated region
        $region113: #{tpu_custom_call.1} parent=91 // pred_check
          %p635 = pneg %p244
        $region114: #{tpu_custom_call.1} parent=91 // pred_check_branch
          %637 = sbr.rel (%p635) target = $region116
        $region115: #{tpu_custom_call.1} parent=91 // pred_region
          %638 = dma.done [#allocation14], 256
        $region116: #{tpu_custom_call.1} parent=91 // pred_fallthru
          _
        // Predicated region
        $region117: #{tpu_custom_call.1} parent=91 // pred_check
          %p639 = pneg %p265
        $region118: #{tpu_custom_call.1} parent=91 // pred_check_branch
          %641 = sbr.rel (%p639) target = $region120
        $region119: #{tpu_custom_call.1} parent=91 // pred_region
          %642 = dma.done [#allocation14], 16
        $region120: #{tpu_custom_call.1} parent=91 // pred_fallthru
          _
        %p643 = scmp.lt.s32.totalorder %s42, 1
        %s644 = scalar_select %p643, %s42, 1
        %s645 = smul.addr %s644, 8
        %s646 = scalar_lea.vmem %s0, %s645
        %p647 = pneg %p71
        %p648 = pneg %p68
        %s649 = sand.u32 %s84, 1
        %s650 = scalar_lea.sflag [#allocation5], %s649
        %s651 = sand.u32 %s84, 1
        %s652 = scalar_lea.vmem [#allocation4], %s651
        %p653 = pneg %p97
        %p654 = pneg %p94
        %p655 = pneg %p118
        %p656 = pneg %p115
        %p657 = pneg %p139
        %p658 = pneg %p136
        %p659 = pneg %p160
        %p660 = pneg %p157
        %p661 = pneg %p181
        %p662 = pneg %p178
        %p663 = pneg %p202
        %p664 = pneg %p199
        %p665 = pneg %p223
        %p666 = pneg %p220
        %p667 = pneg %p244
        %p668 = pneg %p241
        %p669 = pneg %p265
        %p670 = pneg %p262
        %p671 = pneg %p286
        %p672 = pneg %p283
        %p673 = pneg %p307
        %p674 = pneg %p304
        %p675 = pneg %p328
        %p676 = pneg %p325
        %p677 = pneg %p349
        %p678 = pneg %p346
        %p679 = pneg %p370
        %p680 = pneg %p367
        %p681 = pneg %p391
        %p682 = pneg %p388
        %p683 = pneg %p412
        %p684 = pneg %p409
        %p685 = pneg %p433
        %p686 = pneg %p430
        %p687 = pneg %p461
        %p688 = pneg %p458
        %s689 = sand.u32 %s448, 1
        %s690 = scalar_lea.sflag [#allocation6], %s689
        %s691 = sand.u32 %s448, 1
        %s692 = smul.addr %s691, 8
        %s693 = scalar_lea.vmem [#allocation16], %s692
        %p694 = scmp.lt.s32.totalorder %s42, 1
        %s695 = scalar_select %p694, %s42, 1
        %s696 = smul.addr %s695, 8
        %s697 = scalar_lea.vmem %s0, %s696
        %p699 = scmp.eq.s32.totalorder %s43, 0
        // Predicated region
        $region121: #{tpu_custom_call.1} parent=91 // pred_check
          %p700 = pneg %p699
        $region122: #{tpu_custom_call.1} parent=91 // pred_check_branch
          %702 = sbr.rel (%p700) target = $region124
        $region123: #{tpu_custom_call.1} parent=91 // pred_region
          %v703 = vld [vmem:[%s697] sm:$0xff]
          %v704 = vpack.c.bf16 %v703, %v703
          %v705 = vld [vmem:[%s4] sm:$0xf]
          %v706 = vld [vmem:[%s4 + $0x4] sm:$0xf]
          %v707 = vld [vmem:[%s4 + $0x8] sm:$0xf]
          %v708 = vld [vmem:[%s4 + $0xc] sm:$0xf]
          %v709 = vld [vmem:[#allocation9] sm:$0x1]
          %v711 = vlaneseq
          %v712 = vshrl.u32 %v711, 7
          %v713 = vsub.s32 0, %v712
          %v714 = vrot.slane %v709, %v713
          %v720 = vunpack.c.l.b16 %v705
          %v721 = vunpack.c.l.b16 %v706
          %v722 = vunpack.c.l.b16 %v707
          %v723 = vunpack.c.l.b16 %v708
          %v724 = vpack.c.b16 %v721, %v720
          %v725 = vpack.c.b16 %v723, %v722
          %vm728 = vcmask 261120
          %v730 = vsel %vm728, %v704, 0
          %732 = vmatprep.subr.bf16.mxu0 0
          %733 = vmatpush1.bf16.msra.mxu0 0
          %734 = vmatprep.subr.bf16.mxu0 0
          %735 = vmatpush1.bf16.msra.mxu0 0
          %736 = vmatprep.subr.bf16.mxu0 0
          %737 = vmatpush1.bf16.msra.mxu0 0
          %738 = vmatprep.subr.bf16.mxu0 0
          %739 = vmatpush1.bf16.msra.mxu0 0
          %740 = vmatprep.subr.bf16.mxu0 0
          %741 = vmatpush1.bf16.msra.mxu0 0
          %742 = vmatprep.subr.bf16.mxu0 0
          %743 = vmatpush1.bf16.msra.mxu0 0
          %744 = vmatprep.subr.bf16.mxu0 0
          %745 = vmatpush1.bf16.msra.mxu0 %v725
          %746 = vmatprep.subr.bf16.mxu0 0
          %747 = vmatpush1.bf16.msra.mxu0 %v724
          %748 = vmatprep.subr.bf16.mxu0 0
          %749 = vmatpush2.bf16.msra.mxu0 0
          %750 = vmatprep.subr.bf16.mxu0 0
          %751 = vmatpush2.bf16.msra.mxu0 0
          %752 = vmatprep.subr.bf16.mxu0 0
          %753 = vmatpush2.bf16.msra.mxu0 0
          %754 = vmatprep.subr.bf16.mxu0 0
          %755 = vmatpush2.bf16.msra.mxu0 0
          %756 = vmatprep.subr.bf16.mxu0 0
          %757 = vmatpush2.bf16.msra.mxu0 0
          %758 = vmatprep.subr.bf16.mxu0 0
          %759 = vmatpush2.bf16.msra.mxu0 0
          %760 = vmatprep.subr.bf16.mxu0 0
          %761 = vmatpush2.bf16.msra.mxu0 0
          %762 = vmatprep.subr.bf16.mxu0 0
          %763 = vmatpush2.bf16.msra.mxu0 0
          %764 = vmatprep.mubr.bf16.mxu0 0
          %765 = vmatmul.mubr.bf16.gmra.mxu0 %v730
          %v766 = vpop.f32.mrf.mxu0
          %v767 = vadd.f32 %v714, %v766
          %v768 = vpop.f32.mrf.mxu0
          %v769 = vpop.f32.mrf.mxu0
          %v770 = vpop.f32.mrf.mxu0
          %771 = vdwg.mxu0
          %v772 = vld [vmem:[#allocation10] sm:$0xf]
          %v773 = vld [vmem:[#allocation10 + $0x4] sm:$0xf]
          %v774 = vld [vmem:[#allocation10 + $0x8] sm:$0xf]
          %v775 = vld [vmem:[#allocation10 + $0xc] sm:$0xf]
          %v776 = vld [vmem:[#allocation12] sm:$0x1]
          %v778 = vlaneseq
          %v779 = vshrl.u32 %v778, 7
          %v780 = vsub.s32 0, %v779
          %v781 = vrot.slane %v776, %v780
          %v787 = vunpack.c.l.b16 %v772
          %v788 = vunpack.c.l.b16 %v773
          %v789 = vunpack.c.l.b16 %v774
          %v790 = vunpack.c.l.b16 %v775
          %v791 = vpack.c.b16 %v788, %v787
          %v792 = vpack.c.b16 %v790, %v789
          %795 = vmatprep.subr.bf16.mxu0 0
          %796 = vmatpush1.bf16.msra.mxu0 0
          %797 = vmatprep.subr.bf16.mxu0 0
          %798 = vmatpush1.bf16.msra.mxu0 0
          %799 = vmatprep.subr.bf16.mxu0 0
          %800 = vmatpush1.bf16.msra.mxu0 0
          %801 = vmatprep.subr.bf16.mxu0 0
          %802 = vmatpush1.bf16.msra.mxu0 0
          %803 = vmatprep.subr.bf16.mxu0 0
          %804 = vmatpush1.bf16.msra.mxu0 0
          %805 = vmatprep.subr.bf16.mxu0 0
          %806 = vmatpush1.bf16.msra.mxu0 0
          %807 = vmatprep.subr.bf16.mxu0 0
          %808 = vmatpush1.bf16.msra.mxu0 %v792
          %809 = vmatprep.subr.bf16.mxu0 0
          %810 = vmatpush1.bf16.msra.mxu0 %v791
          %811 = vmatprep.subr.bf16.mxu0 0
          %812 = vmatpush2.bf16.msra.mxu0 0
          %813 = vmatprep.subr.bf16.mxu0 0
          %814 = vmatpush2.bf16.msra.mxu0 0
          %815 = vmatprep.subr.bf16.mxu0 0
          %816 = vmatpush2.bf16.msra.mxu0 0
          %817 = vmatprep.subr.bf16.mxu0 0
          %818 = vmatpush2.bf16.msra.mxu0 0
          %819 = vmatprep.subr.bf16.mxu0 0
          %820 = vmatpush2.bf16.msra.mxu0 0
          %821 = vmatprep.subr.bf16.mxu0 0
          %822 = vmatpush2.bf16.msra.mxu0 0
          %823 = vmatprep.subr.bf16.mxu0 0
          %824 = vmatpush2.bf16.msra.mxu0 0
          %825 = vmatprep.subr.bf16.mxu0 0
          %826 = vmatpush2.bf16.msra.mxu0 0
          %827 = vmatprep.mubr.bf16.mxu0 0
          %828 = vmatmul.mubr.bf16.gmra.mxu0 %v730
          %v829 = vpop.f32.mrf.mxu0
          %v830 = vadd.f32 %v781, %v829
          %v831 = vpop.f32.mrf.mxu0
          %v832 = vpop.f32.mrf.mxu0
          %v833 = vpop.f32.mrf.mxu0
          %834 = vdwg.mxu0
          %836 = vrot.lane.b32.xlu0 %v767, 120
          %v837 = vpop.permute.xlu0 %836
          %839 = vrot.lane.b32.xlu0 %v767, 112
          %v840 = vpop.permute.xlu0 %839
          %842 = vrot.lane.b32.xlu0 %v767, 104
          %v843 = vpop.permute.xlu0 %842
          %v845 = vpack.c.bf16 %v767, %v767
          %v846 = vpack.c.bf16 %v837, %v837
          %v847 = vpack.c.bf16 %v840, %v840
          %v848 = vpack.c.bf16 %v843, %v843
          %vm849 = vcmask 60416
          %850 = vst.msk [vmem:[#allocation2] sm:$0xf] %vm849, %v845
          %851 = vst.msk [vmem:[#allocation2 + $0x4] sm:$0xf] %vm849, %v846
          %852 = vst.msk [vmem:[#allocation2 + $0x8] sm:$0xf] %vm849, %v847
          %853 = vst.msk [vmem:[#allocation2 + $0xc] sm:$0xf] %vm849, %v848
          %855 = vrot.lane.b32.xlu0 %v830, 120
          %v856 = vpop.permute.xlu0 %855
          %858 = vrot.lane.b32.xlu0 %v830, 112
          %v859 = vpop.permute.xlu0 %858
          %861 = vrot.lane.b32.xlu0 %v830, 104
          %v862 = vpop.permute.xlu0 %861
          %v864 = vpack.c.bf16 %v830, %v830
          %v865 = vpack.c.bf16 %v856, %v856
          %v866 = vpack.c.bf16 %v859, %v859
          %v867 = vpack.c.bf16 %v862, %v862
          %868 = vst.msk [vmem:[#allocation3] sm:$0xf] %vm849, %v864
          %869 = vst.msk [vmem:[#allocation3 + $0x4] sm:$0xf] %vm849, %v865
          %870 = vst.msk [vmem:[#allocation3 + $0x8] sm:$0xf] %vm849, %v866
          %871 = vst.msk [vmem:[#allocation3 + $0xc] sm:$0xf] %vm849, %v867
        $region124: #{tpu_custom_call.1} parent=91 // pred_fallthru
          _
        %s872 = smul.u32 %s43, 8
        %s873 = scalar_lea.vmem %s697, %s872
        %v874 = vld [vmem:[%s873] sm:$0xff]
        %v875 = vpack.c.bf16 %v874, %v874
        %v876 = vld [vmem:[%s2] sm:$0xf]
        %v877 = vld [vmem:[%s2 + $0x4] sm:$0xf]
        %v878 = vld [vmem:[%s2 + $0x8] sm:$0xf]
        %v879 = vld [vmem:[%s2 + $0xc] sm:$0xf]
        %v880 = vld [vmem:[#allocation7] sm:$0x1]
        %v882 = vlaneseq
        %v883 = vshrl.u32 %v882, 7
        %v884 = vsub.s32 0, %v883
        %v885 = vrot.slane %v880, %v884
        %v891 = vunpack.c.l.b16 %v876
        %v892 = vunpack.c.l.b16 %v877
        %v893 = vunpack.c.l.b16 %v878
        %v894 = vunpack.c.l.b16 %v879
        %v895 = vpack.c.b16 %v892, %v891
        %v896 = vpack.c.b16 %v894, %v893
        %vm899 = vcmask 261120
        %v901 = vsel %vm899, %v875, 0
        %903 = vmatprep.subr.bf16.mxu0 0
        %904 = vmatpush1.bf16.msra.mxu0 0
        %905 = vmatprep.subr.bf16.mxu0 0
        %906 = vmatpush1.bf16.msra.mxu0 0
        %907 = vmatprep.subr.bf16.mxu0 0
        %908 = vmatpush1.bf16.msra.mxu0 0
        %909 = vmatprep.subr.bf16.mxu0 0
        %910 = vmatpush1.bf16.msra.mxu0 0
        %911 = vmatprep.subr.bf16.mxu0 0
        %912 = vmatpush1.bf16.msra.mxu0 0
        %913 = vmatprep.subr.bf16.mxu0 0
        %914 = vmatpush1.bf16.msra.mxu0 0
        %915 = vmatprep.subr.bf16.mxu0 0
        %916 = vmatpush1.bf16.msra.mxu0 %v896
        %917 = vmatprep.subr.bf16.mxu0 0
        %918 = vmatpush1.bf16.msra.mxu0 %v895
        %919 = vmatprep.subr.bf16.mxu0 0
        %920 = vmatpush2.bf16.msra.mxu0 0
        %921 = vmatprep.subr.bf16.mxu0 0
        %922 = vmatpush2.bf16.msra.mxu0 0
        %923 = vmatprep.subr.bf16.mxu0 0
        %924 = vmatpush2.bf16.msra.mxu0 0
        %925 = vmatprep.subr.bf16.mxu0 0
        %926 = vmatpush2.bf16.msra.mxu0 0
        %927 = vmatprep.subr.bf16.mxu0 0
        %928 = vmatpush2.bf16.msra.mxu0 0
        %929 = vmatprep.subr.bf16.mxu0 0
        %930 = vmatpush2.bf16.msra.mxu0 0
        %931 = vmatprep.subr.bf16.mxu0 0
        %932 = vmatpush2.bf16.msra.mxu0 0
        %933 = vmatprep.subr.bf16.mxu0 0
        %934 = vmatpush2.bf16.msra.mxu0 0
        %935 = vmatprep.mubr.bf16.mxu0 0
        %936 = vmatmul.mubr.bf16.gmra.mxu0 %v901
        %v937 = vpop.f32.mrf.mxu0
        %v938 = vadd.f32 %v885, %v937
        %v939 = vpop.f32.mrf.mxu0
        %v940 = vpop.f32.mrf.mxu0
        %v941 = vpop.f32.mrf.mxu0
        %942 = vdwg.mxu0
        %v943 = vmul.f32 %v938, 0.35355338
        %945 = vrot.lane.b32.xlu0 %v943, 120
        %v946 = vpop.permute.xlu0 %945
        %948 = vrot.lane.b32.xlu0 %v943, 112
        %v949 = vpop.permute.xlu0 %948
        %951 = vrot.lane.b32.xlu0 %v943, 104
        %v952 = vpop.permute.xlu0 %951
        %v954 = vpack.c.bf16 %v943, %v943
        %v955 = vpack.c.bf16 %v946, %v946
        %v956 = vpack.c.bf16 %v949, %v949
        %v957 = vpack.c.bf16 %v952, %v952
        %v958 = vld [vmem:[#allocation2] sm:$0xf]
        %v959 = vld [vmem:[#allocation2 + $0x4] sm:$0xf]
        %v960 = vld [vmem:[#allocation2 + $0x8] sm:$0xf]
        %v961 = vld [vmem:[#allocation2 + $0xc] sm:$0xf]
        %v962 = vld [vmem:[%s614] sm:$0x1]
        %v963 = vsub.f32 1.0, %v962
        %v964 = vmul.f32 %v963, -10000.0
        %v966 = vlaneseq
        %v967 = vshrl.u32 %v966, 7
        %v968 = vsub.s32 0, %v967
        %v969 = vrot.slane %v964, %v968
        %vm971 = vcmask 64512
        %v973 = vsel %vm971, %v954, 0
        %v976 = vsel %vm971, %v958, 0
        %978 = vmatprep.subr.bf16.mxu0 0
        %979 = vmatpush1.bf16.xpose.msra.mxu0 0
        %980 = vmatprep.subr.bf16.mxu0 0
        %981 = vmatpush1.bf16.xpose.msra.mxu0 0
        %982 = vmatprep.subr.bf16.mxu0 0
        %983 = vmatpush1.bf16.xpose.msra.mxu0 0
        %984 = vmatprep.subr.bf16.mxu0 0
        %985 = vmatpush1.bf16.xpose.msra.mxu0 0
        %986 = vmatprep.subr.bf16.mxu0 0
        %987 = vmatpush1.bf16.xpose.msra.mxu0 0
        %988 = vmatprep.subr.bf16.mxu0 0
        %989 = vmatpush1.bf16.xpose.msra.mxu0 0
        %990 = vmatprep.subr.bf16.mxu0 0
        %991 = vmatpush1.bf16.xpose.msra.mxu0 0
        %992 = vmatprep.subr.bf16.mxu0 0
        %993 = vmatpush1.bf16.xpose.msra.mxu0 %v976
        %994 = vmatprep.subr.bf16.mxu0 0
        %995 = vmatpush2.bf16.xpose.msra.mxu0 0
        %996 = vmatprep.subr.bf16.mxu0 0
        %997 = vmatpush2.bf16.xpose.msra.mxu0 0
        %998 = vmatprep.subr.bf16.mxu0 0
        %999 = vmatpush2.bf16.xpose.msra.mxu0 0
        %1000 = vmatprep.subr.bf16.mxu0 0
        %1001 = vmatpush2.bf16.xpose.msra.mxu0 0
        %1002 = vmatprep.subr.bf16.mxu0 0
        %1003 = vmatpush2.bf16.xpose.msra.mxu0 0
        %1004 = vmatprep.subr.bf16.mxu0 0
        %1005 = vmatpush2.bf16.xpose.msra.mxu0 0
        %1006 = vmatprep.subr.bf16.mxu0 0
        %1007 = vmatpush2.bf16.xpose.msra.mxu0 0
        %1008 = vmatprep.subr.bf16.mxu0 0
        %1009 = vmatpush2.bf16.xpose.msra.mxu0 0
        %1010 = vmatprep.mubr.bf16.mxu0 0
        %1011 = vmatmul.mubr.bf16.gmra.mxu0 %v973
        %v1012 = vpop.f32.mrf.mxu0
        %v1013 = vadd.f32 %v969, %v1012
        %v1014 = vpop.f32.mrf.mxu0
        %v1015 = vpop.f32.mrf.mxu0
        %v1016 = vpop.f32.mrf.mxu0
        %1017 = vdwg.mxu0
        %v1019 = vsel %vm971, %v955, 0
        %v1022 = vsel %vm971, %v959, 0
        %1024 = vmatprep.subr.bf16.mxu0 0
        %1025 = vmatpush1.bf16.xpose.msra.mxu0 0
        %1026 = vmatprep.subr.bf16.mxu0 0
        %1027 = vmatpush1.bf16.xpose.msra.mxu0 0
        %1028 = vmatprep.subr.bf16.mxu0 0
        %1029 = vmatpush1.bf16.xpose.msra.mxu0 0
        %1030 = vmatprep.subr.bf16.mxu0 0
        %1031 = vmatpush1.bf16.xpose.msra.mxu0 0
        %1032 = vmatprep.subr.bf16.mxu0 0
        %1033 = vmatpush1.bf16.xpose.msra.mxu0 0
        %1034 = vmatprep.subr.bf16.mxu0 0
        %1035 = vmatpush1.bf16.xpose.msra.mxu0 0
        %1036 = vmatprep.subr.bf16.mxu0 0
        %1037 = vmatpush1.bf16.xpose.msra.mxu0 0
        %1038 = vmatprep.subr.bf16.mxu0 0
        %1039 = vmatpush1.bf16.xpose.msra.mxu0 %v1022
        %1040 = vmatprep.subr.bf16.mxu0 0
        %1041 = vmatpush2.bf16.xpose.msra.mxu0 0
        %1042 = vmatprep.subr.bf16.mxu0 0
        %1043 = vmatpush2.bf16.xpose.msra.mxu0 0
        %1044 = vmatprep.subr.bf16.mxu0 0
        %1045 = vmatpush2.bf16.xpose.msra.mxu0 0
        %1046 = vmatprep.subr.bf16.mxu0 0
        %1047 = vmatpush2.bf16.xpose.msra.mxu0 0
        %1048 = vmatprep.subr.bf16.mxu0 0
        %1049 = vmatpush2.bf16.xpose.msra.mxu0 0
        %1050 = vmatprep.subr.bf16.mxu0 0
        %1051 = vmatpush2.bf16.xpose.msra.mxu0 0
        %1052 = vmatprep.subr.bf16.mxu0 0
        %1053 = vmatpush2.bf16.xpose.msra.mxu0 0
        %1054 = vmatprep.subr.bf16.mxu0 0
        %1055 = vmatpush2.bf16.xpose.msra.mxu0 0
        %1056 = vmatprep.mubr.bf16.mxu0 0
        %1057 = vmatmul.mubr.bf16.gmra.mxu0 %v1019
        %v1058 = vpop.f32.mrf.mxu0
        %v1059 = vadd.f32 %v969, %v1058
        %v1060 = vpop.f32.mrf.mxu0
        %v1061 = vpop.f32.mrf.mxu0
        %v1062 = vpop.f32.mrf.mxu0
        %1063 = vdwg.mxu0
        %v1065 = vsel %vm971, %v956, 0
        %v1068 = vsel %vm971, %v960, 0
        %1070 = vmatprep.subr.bf16.mxu0 0
        %1071 = vmatpush1.bf16.xpose.msra.mxu0 0
        %1072 = vmatprep.subr.bf16.mxu0 0
        %1073 = vmatpush1.bf16.xpose.msra.mxu0 0
        %1074 = vmatprep.subr.bf16.mxu0 0
        %1075 = vmatpush1.bf16.xpose.msra.mxu0 0
        %1076 = vmatprep.subr.bf16.mxu0 0
        %1077 = vmatpush1.bf16.xpose.msra.mxu0 0
        %1078 = vmatprep.subr.bf16.mxu0 0
        %1079 = vmatpush1.bf16.xpose.msra.mxu0 0
        %1080 = vmatprep.subr.bf16.mxu0 0
        %1081 = vmatpush1.bf16.xpose.msra.mxu0 0
        %1082 = vmatprep.subr.bf16.mxu0 0
        %1083 = vmatpush1.bf16.xpose.msra.mxu0 0
        %1084 = vmatprep.subr.bf16.mxu0 0
        %1085 = vmatpush1.bf16.xpose.msra.mxu0 %v1068
        %1086 = vmatprep.subr.bf16.mxu0 0
        %1087 = vmatpush2.bf16.xpose.msra.mxu0 0
        %1088 = vmatprep.subr.bf16.mxu0 0
        %1089 = vmatpush2.bf16.xpose.msra.mxu0 0
        %1090 = vmatprep.subr.bf16.mxu0 0
        %1091 = vmatpush2.bf16.xpose.msra.mxu0 0
        %1092 = vmatprep.subr.bf16.mxu0 0
        %1093 = vmatpush2.bf16.xpose.msra.mxu0 0
        %1094 = vmatprep.subr.bf16.mxu0 0
        %1095 = vmatpush2.bf16.xpose.msra.mxu0 0
        %1096 = vmatprep.subr.bf16.mxu0 0
        %1097 = vmatpush2.bf16.xpose.msra.mxu0 0
        %1098 = vmatprep.subr.bf16.mxu0 0
        %1099 = vmatpush2.bf16.xpose.msra.mxu0 0
        %1100 = vmatprep.subr.bf16.mxu0 0
        %1101 = vmatpush2.bf16.xpose.msra.mxu0 0
        %1102 = vmatprep.mubr.bf16.mxu0 0
        %1103 = vmatmul.mubr.bf16.gmra.mxu0 %v1065
        %v1104 = vpop.f32.mrf.mxu0
        %v1105 = vadd.f32 %v969, %v1104
        %v1106 = vpop.f32.mrf.mxu0
        %v1107 = vpop.f32.mrf.mxu0
        %v1108 = vpop.f32.mrf.mxu0
        %1109 = vdwg.mxu0
        %v1111 = vsel %vm971, %v957, 0
        %v1114 = vsel %vm971, %v961, 0
        %1116 = vmatprep.subr.bf16.mxu0 0
        %1117 = vmatpush1.bf16.xpose.msra.mxu0 0
        %1118 = vmatprep.subr.bf16.mxu0 0
        %1119 = vmatpush1.bf16.xpose.msra.mxu0 0
        %1120 = vmatprep.subr.bf16.mxu0 0
        %1121 = vmatpush1.bf16.xpose.msra.mxu0 0
        %1122 = vmatprep.subr.bf16.mxu0 0
        %1123 = vmatpush1.bf16.xpose.msra.mxu0 0
        %1124 = vmatprep.subr.bf16.mxu0 0
        %1125 = vmatpush1.bf16.xpose.msra.mxu0 0
        %1126 = vmatprep.subr.bf16.mxu0 0
        %1127 = vmatpush1.bf16.xpose.msra.mxu0 0
        %1128 = vmatprep.subr.bf16.mxu0 0
        %1129 = vmatpush1.bf16.xpose.msra.mxu0 0
        %1130 = vmatprep.subr.bf16.mxu0 0
        %1131 = vmatpush1.bf16.xpose.msra.mxu0 %v1114
        %1132 = vmatprep.subr.bf16.mxu0 0
        %1133 = vmatpush2.bf16.xpose.msra.mxu0 0
        %1134 = vmatprep.subr.bf16.mxu0 0
        %1135 = vmatpush2.bf16.xpose.msra.mxu0 0
        %1136 = vmatprep.subr.bf16.mxu0 0
        %1137 = vmatpush2.bf16.xpose.msra.mxu0 0
        %1138 = vmatprep.subr.bf16.mxu0 0
        %1139 = vmatpush2.bf16.xpose.msra.mxu0 0
        %1140 = vmatprep.subr.bf16.mxu0 0
        %1141 = vmatpush2.bf16.xpose.msra.mxu0 0
        %1142 = vmatprep.subr.bf16.mxu0 0
        %1143 = vmatpush2.bf16.xpose.msra.mxu0 0
        %1144 = vmatprep.subr.bf16.mxu0 0
        %1145 = vmatpush2.bf16.xpose.msra.mxu0 0
        %1146 = vmatprep.subr.bf16.mxu0 0
        %1147 = vmatpush2.bf16.xpose.msra.mxu0 0
        %1148 = vmatprep.mubr.bf16.mxu0 0
        %1149 = vmatmul.mubr.bf16.gmra.mxu0 %v1111
        %v1150 = vpop.f32.mrf.mxu0
        %v1151 = vadd.f32 %v969, %v1150
        %v1152 = vpop.f32.mrf.mxu0
        %v1153 = vpop.f32.mrf.mxu0
        %v1154 = vpop.f32.mrf.mxu0
        %1155 = vdwg.mxu0
        %v1156 = vsel %vm971, %v1013, -inf
        %1157 = vmax.xlane.f32.xlu0 %v1156
        %v1158 = vpop.xlane.xlu0 %1157
        %v1159 = vsel %vm971, %v1059, -inf
        %1160 = vmax.xlane.f32.xlu0 %v1159
        %v1161 = vpop.xlane.xlu0 %1160
        %v1162 = vsel %vm971, %v1105, -inf
        %1163 = vmax.xlane.f32.xlu0 %v1162
        %v1164 = vpop.xlane.xlu0 %1163
        %v1165 = vsel %vm971, %v1151, -inf
        %1166 = vmax.xlane.f32.xlu0 %v1165
        %v1167 = vpop.xlane.xlu0 %1166
        %v1168 = vsub.f32 %v1013, %v1158
        %v1169 = vsub.f32 %v1059, %v1161
        %v1170 = vsub.f32 %v1105, %v1164
        %v1171 = vsub.f32 %v1151, %v1167
        %v1172 = vmul.f32 %v1168, 1.442695
        %v1173 = vpow.pop %v1172
        %v1174 = vmul.f32 %v1169, 1.442695
        %v1175 = vpow.pop %v1174
        %v1176 = vmul.f32 %v1170, 1.442695
        %v1177 = vpow.pop %v1176
        %v1178 = vmul.f32 %v1171, 1.442695
        %v1179 = vpow.pop %v1178
        %v1180 = vsel %vm971, %v1173, 0.0
        %1181 = vadd.xlane.f32.xlu0 %v1180
        %v1182 = vpop.xlane.xlu0 %1181
        %v1183 = vsel %vm971, %v1175, 0.0
        %1184 = vadd.xlane.f32.xlu0 %v1183
        %v1185 = vpop.xlane.xlu0 %1184
        %v1186 = vsel %vm971, %v1177, 0.0
        %1187 = vadd.xlane.f32.xlu0 %v1186
        %v1188 = vpop.xlane.xlu0 %1187
        %v1189 = vsel %vm971, %v1179, 0.0
        %1190 = vadd.xlane.f32.xlu0 %v1189
        %v1191 = vpop.xlane.xlu0 %1190
        %v1192 = vrcp.pop %v1182
        %v1193 = vrcp.pop %v1185
        %v1194 = vrcp.pop %v1188
        %v1195 = vrcp.pop %v1191
        %v1196 = vmul.f32 %v1173, %v1192
        %v1197 = vmul.f32 %v1175, %v1193
        %v1198 = vmul.f32 %v1177, %v1194
        %v1199 = vmul.f32 %v1179, %v1195
        %v1200 = vpack.c.bf16 %v1196, %v1196
        %v1201 = vpack.c.bf16 %v1197, %v1197
        %v1202 = vpack.c.bf16 %v1198, %v1198
        %v1203 = vpack.c.bf16 %v1199, %v1199
        %v1204 = vld [vmem:[#allocation3] sm:$0xf]
        %v1205 = vld [vmem:[#allocation3 + $0x4] sm:$0xf]
        %v1206 = vld [vmem:[#allocation3 + $0x8] sm:$0xf]
        %v1207 = vld [vmem:[#allocation3 + $0xc] sm:$0xf]
        %v1209 = vsel %vm971, %v1200, 0
        %vm1211 = vcmask 1043456
        %v1213 = vsel %vm1211, %v1204, 0
        %1215 = vmatprep.subr.bf16.mxu0 0
        %1216 = vmatpush1.bf16.msra.mxu0 0
        %1217 = vmatprep.subr.bf16.mxu0 0
        %1218 = vmatpush1.bf16.msra.mxu0 0
        %1219 = vmatprep.subr.bf16.mxu0 0
        %1220 = vmatpush1.bf16.msra.mxu0 0
        %1221 = vmatprep.subr.bf16.mxu0 0
        %1222 = vmatpush1.bf16.msra.mxu0 0
        %1223 = vmatprep.subr.bf16.mxu0 0
        %1224 = vmatpush1.bf16.msra.mxu0 0
        %1225 = vmatprep.subr.bf16.mxu0 0
        %1226 = vmatpush1.bf16.msra.mxu0 0
        %1227 = vmatprep.subr.bf16.mxu0 0
        %1228 = vmatpush1.bf16.msra.mxu0 0
        %1229 = vmatprep.subr.bf16.mxu0 0
        %1230 = vmatpush1.bf16.msra.mxu0 %v1213
        %1231 = vmatprep.subr.bf16.mxu0 0
        %1232 = vmatpush2.bf16.msra.mxu0 0
        %1233 = vmatprep.subr.bf16.mxu0 0
        %1234 = vmatpush2.bf16.msra.mxu0 0
        %1235 = vmatprep.subr.bf16.mxu0 0
        %1236 = vmatpush2.bf16.msra.mxu0 0
        %1237 = vmatprep.subr.bf16.mxu0 0
        %1238 = vmatpush2.bf16.msra.mxu0 0
        %1239 = vmatprep.subr.bf16.mxu0 0
        %1240 = vmatpush2.bf16.msra.mxu0 0
        %1241 = vmatprep.subr.bf16.mxu0 0
        %1242 = vmatpush2.bf16.msra.mxu0 0
        %1243 = vmatprep.subr.bf16.mxu0 0
        %1244 = vmatpush2.bf16.msra.mxu0 0
        %1245 = vmatprep.subr.bf16.mxu0 0
        %1246 = vmatpush2.bf16.msra.mxu0 0
        %1247 = vmatprep.mubr.bf16.mxu0 0
        %1248 = vmatmul.mubr.bf16.gmra.mxu0 %v1209
        %v1249 = vpop.f32.mrf.mxu0
        %v1250 = vadd.f32 0.0, %v1249
        %v1251 = vpop.f32.mrf.mxu0
        %v1252 = vpop.f32.mrf.mxu0
        %v1253 = vpop.f32.mrf.mxu0
        %1254 = vdwg.mxu0
        %v1256 = vsel %vm971, %v1201, 0
        %v1259 = vsel %vm1211, %v1205, 0
        %1261 = vmatprep.subr.bf16.mxu0 0
        %1262 = vmatpush1.bf16.msra.mxu0 0
        %1263 = vmatprep.subr.bf16.mxu0 0
        %1264 = vmatpush1.bf16.msra.mxu0 0
        %1265 = vmatprep.subr.bf16.mxu0 0
        %1266 = vmatpush1.bf16.msra.mxu0 0
        %1267 = vmatprep.subr.bf16.mxu0 0
        %1268 = vmatpush1.bf16.msra.mxu0 0
        %1269 = vmatprep.subr.bf16.mxu0 0
        %1270 = vmatpush1.bf16.msra.mxu0 0
        %1271 = vmatprep.subr.bf16.mxu0 0
        %1272 = vmatpush1.bf16.msra.mxu0 0
        %1273 = vmatprep.subr.bf16.mxu0 0
        %1274 = vmatpush1.bf16.msra.mxu0 0
        %1275 = vmatprep.subr.bf16.mxu0 0
        %1276 = vmatpush1.bf16.msra.mxu0 %v1259
        %1277 = vmatprep.subr.bf16.mxu0 0
        %1278 = vmatpush2.bf16.msra.mxu0 0
        %1279 = vmatprep.subr.bf16.mxu0 0
        %1280 = vmatpush2.bf16.msra.mxu0 0
        %1281 = vmatprep.subr.bf16.mxu0 0
        %1282 = vmatpush2.bf16.msra.mxu0 0
        %1283 = vmatprep.subr.bf16.mxu0 0
        %1284 = vmatpush2.bf16.msra.mxu0 0
        %1285 = vmatprep.subr.bf16.mxu0 0
        %1286 = vmatpush2.bf16.msra.mxu0 0
        %1287 = vmatprep.subr.bf16.mxu0 0
        %1288 = vmatpush2.bf16.msra.mxu0 0
        %1289 = vmatprep.subr.bf16.mxu0 0
        %1290 = vmatpush2.bf16.msra.mxu0 0
        %1291 = vmatprep.subr.bf16.mxu0 0
        %1292 = vmatpush2.bf16.msra.mxu0 0
        %1293 = vmatprep.mubr.bf16.mxu0 0
        %1294 = vmatmul.mubr.bf16.gmra.mxu0 %v1256
        %v1295 = vpop.f32.mrf.mxu0
        %v1296 = vadd.f32 0.0, %v1295
        %v1297 = vpop.f32.mrf.mxu0
        %v1298 = vpop.f32.mrf.mxu0
        %v1299 = vpop.f32.mrf.mxu0
        %1300 = vdwg.mxu0
        %v1302 = vsel %vm971, %v1202, 0
        %v1305 = vsel %vm1211, %v1206, 0
        %1307 = vmatprep.subr.bf16.mxu0 0
        %1308 = vmatpush1.bf16.msra.mxu0 0
        %1309 = vmatprep.subr.bf16.mxu0 0
        %1310 = vmatpush1.bf16.msra.mxu0 0
        %1311 = vmatprep.subr.bf16.mxu0 0
        %1312 = vmatpush1.bf16.msra.mxu0 0
        %1313 = vmatprep.subr.bf16.mxu0 0
        %1314 = vmatpush1.bf16.msra.mxu0 0
        %1315 = vmatprep.subr.bf16.mxu0 0
        %1316 = vmatpush1.bf16.msra.mxu0 0
        %1317 = vmatprep.subr.bf16.mxu0 0
        %1318 = vmatpush1.bf16.msra.mxu0 0
        %1319 = vmatprep.subr.bf16.mxu0 0
        %1320 = vmatpush1.bf16.msra.mxu0 0
        %1321 = vmatprep.subr.bf16.mxu0 0
        %1322 = vmatpush1.bf16.msra.mxu0 %v1305
        %1323 = vmatprep.subr.bf16.mxu0 0
        %1324 = vmatpush2.bf16.msra.mxu0 0
        %1325 = vmatprep.subr.bf16.mxu0 0
        %1326 = vmatpush2.bf16.msra.mxu0 0
        %1327 = vmatprep.subr.bf16.mxu0 0
        %1328 = vmatpush2.bf16.msra.mxu0 0
        %1329 = vmatprep.subr.bf16.mxu0 0
        %1330 = vmatpush2.bf16.msra.mxu0 0
        %1331 = vmatprep.subr.bf16.mxu0 0
        %1332 = vmatpush2.bf16.msra.mxu0 0
        %1333 = vmatprep.subr.bf16.mxu0 0
        %1334 = vmatpush2.bf16.msra.mxu0 0
        %1335 = vmatprep.subr.bf16.mxu0 0
        %1336 = vmatpush2.bf16.msra.mxu0 0
        %1337 = vmatprep.subr.bf16.mxu0 0
        %1338 = vmatpush2.bf16.msra.mxu0 0
        %1339 = vmatprep.mubr.bf16.mxu0 0
        %1340 = vmatmul.mubr.bf16.gmra.mxu0 %v1302
        %v1341 = vpop.f32.mrf.mxu0
        %v1342 = vadd.f32 0.0, %v1341
        %v1343 = vpop.f32.mrf.mxu0
        %v1344 = vpop.f32.mrf.mxu0
        %v1345 = vpop.f32.mrf.mxu0
        %1346 = vdwg.mxu0
        %v1348 = vsel %vm971, %v1203, 0
        %v1351 = vsel %vm1211, %v1207, 0
        %1353 = vmatprep.subr.bf16.mxu0 0
        %1354 = vmatpush1.bf16.msra.mxu0 0
        %1355 = vmatprep.subr.bf16.mxu0 0
        %1356 = vmatpush1.bf16.msra.mxu0 0
        %1357 = vmatprep.subr.bf16.mxu0 0
        %1358 = vmatpush1.bf16.msra.mxu0 0
        %1359 = vmatprep.subr.bf16.mxu0 0
        %1360 = vmatpush1.bf16.msra.mxu0 0
        %1361 = vmatprep.subr.bf16.mxu0 0
        %1362 = vmatpush1.bf16.msra.mxu0 0
        %1363 = vmatprep.subr.bf16.mxu0 0
        %1364 = vmatpush1.bf16.msra.mxu0 0
        %1365 = vmatprep.subr.bf16.mxu0 0
        %1366 = vmatpush1.bf16.msra.mxu0 0
        %1367 = vmatprep.subr.bf16.mxu0 0
        %1368 = vmatpush1.bf16.msra.mxu0 %v1351
        %1369 = vmatprep.subr.bf16.mxu0 0
        %1370 = vmatpush2.bf16.msra.mxu0 0
        %1371 = vmatprep.subr.bf16.mxu0 0
        %1372 = vmatpush2.bf16.msra.mxu0 0
        %1373 = vmatprep.subr.bf16.mxu0 0
        %1374 = vmatpush2.bf16.msra.mxu0 0
        %1375 = vmatprep.subr.bf16.mxu0 0
        %1376 = vmatpush2.bf16.msra.mxu0 0
        %1377 = vmatprep.subr.bf16.mxu0 0
        %1378 = vmatpush2.bf16.msra.mxu0 0
        %1379 = vmatprep.subr.bf16.mxu0 0
        %1380 = vmatpush2.bf16.msra.mxu0 0
        %1381 = vmatprep.subr.bf16.mxu0 0
        %1382 = vmatpush2.bf16.msra.mxu0 0
        %1383 = vmatprep.subr.bf16.mxu0 0
        %1384 = vmatpush2.bf16.msra.mxu0 0
        %1385 = vmatprep.mubr.bf16.mxu0 0
        %1386 = vmatmul.mubr.bf16.gmra.mxu0 %v1348
        %v1387 = vpop.f32.mrf.mxu0
        %v1388 = vadd.f32 0.0, %v1387
        %v1389 = vpop.f32.mrf.mxu0
        %v1390 = vpop.f32.mrf.mxu0
        %v1391 = vpop.f32.mrf.mxu0
        %1392 = vdwg.mxu0
        %1394 = vrot.lane.b32.xlu0 %v1296, 8
        %v1395 = vpop.permute.xlu0 %1394
        %1398 = vrot.lane.b32.xlu0 %v1342, 16
        %v1399 = vpop.permute.xlu0 %1398
        %1402 = vrot.lane.b32.xlu0 %v1388, 24
        %v1403 = vpop.permute.xlu0 %1402
        %v1405 = vsel %vm971, %v1250, %v1395
        %vm1406 = vcmask 130048
        %v1407 = vsel %vm1406, %v1405, %v1399
        %vm1408 = vcmask 195584
        %v1409 = vsel %vm1408, %v1407, %v1403
        %v1410 = vpack.c.bf16 %v1409, %v1409
        %v1411 = vld [vmem:[#allocation13] sm:$0xf]
        %v1412 = vld [vmem:[#allocation13 + $0x4] sm:$0xf]
        %v1413 = vld [vmem:[#allocation13 + $0x8] sm:$0xf]
        %v1414 = vld [vmem:[#allocation13 + $0xc] sm:$0xf]
        %v1415 = vld [vmem:[#allocation15] sm:$0x1]
        %v1417 = vlaneseq
        %v1418 = vshrl.u32 %v1417, 7
        %v1419 = vsub.s32 0, %v1418
        %v1420 = vrot.slane %v1415, %v1419
        %v1426 = vunpack.c.l.b16 %v1411
        %v1427 = vunpack.c.l.b16 %v1412
        %v1428 = vunpack.c.l.b16 %v1413
        %v1429 = vunpack.c.l.b16 %v1414
        %v1430 = vpack.c.b16 %v1427, %v1426
        %v1431 = vpack.c.b16 %v1429, %v1428
        %v1435 = vsel %vm899, %v1410, 0
        %1437 = vmatprep.subr.bf16.mxu0 0
        %1438 = vmatpush1.bf16.msra.mxu0 0
        %1439 = vmatprep.subr.bf16.mxu0 0
        %1440 = vmatpush1.bf16.msra.mxu0 0
        %1441 = vmatprep.subr.bf16.mxu0 0
        %1442 = vmatpush1.bf16.msra.mxu0 0
        %1443 = vmatprep.subr.bf16.mxu0 0
        %1444 = vmatpush1.bf16.msra.mxu0 0
        %1445 = vmatprep.subr.bf16.mxu0 0
        %1446 = vmatpush1.bf16.msra.mxu0 0
        %1447 = vmatprep.subr.bf16.mxu0 0
        %1448 = vmatpush1.bf16.msra.mxu0 0
        %1449 = vmatprep.subr.bf16.mxu0 0
        %1450 = vmatpush1.bf16.msra.mxu0 %v1431
        %1451 = vmatprep.subr.bf16.mxu0 0
        %1452 = vmatpush1.bf16.msra.mxu0 %v1430
        %1453 = vmatprep.subr.bf16.mxu0 0
        %1454 = vmatpush2.bf16.msra.mxu0 0
        %1455 = vmatprep.subr.bf16.mxu0 0
        %1456 = vmatpush2.bf16.msra.mxu0 0
        %1457 = vmatprep.subr.bf16.mxu0 0
        %1458 = vmatpush2.bf16.msra.mxu0 0
        %1459 = vmatprep.subr.bf16.mxu0 0
        %1460 = vmatpush2.bf16.msra.mxu0 0
        %1461 = vmatprep.subr.bf16.mxu0 0
        %1462 = vmatpush2.bf16.msra.mxu0 0
        %1463 = vmatprep.subr.bf16.mxu0 0
        %1464 = vmatpush2.bf16.msra.mxu0 0
        %1465 = vmatprep.subr.bf16.mxu0 0
        %1466 = vmatpush2.bf16.msra.mxu0 0
        %1467 = vmatprep.subr.bf16.mxu0 0
        %1468 = vmatpush2.bf16.msra.mxu0 0
        %1469 = vmatprep.mubr.bf16.mxu0 0
        %1470 = vmatmul.mubr.bf16.gmra.mxu0 %v1435
        %v1471 = vpop.f32.mrf.mxu0
        %v1472 = vadd.f32 %v1420, %v1471
        %v1473 = vpop.f32.mrf.mxu0
        %v1474 = vpop.f32.mrf.mxu0
        %v1475 = vpop.f32.mrf.mxu0
        %1476 = vdwg.mxu0
        %v1477 = vadd.f32 %v1472, %v874
        %v1478 = vld [vmem:[%s10] sm:$0x1]
        %v1479 = vld [vmem:[%s11] sm:$0x1]
        %v1480 = vsel %vm899, %v1477, 0.0
        %1481 = vadd.xlane.f32.xlu0 %v1480
        %v1482 = vpop.xlane.xlu0 %1481
        %v1483 = vrcp.pop 32.0
        %v1484 = vmul.f32 %v1482, %v1483
        %v1485 = vsub.f32 %v1477, %v1484
        %v1486 = vmul.f32 %v1485, %v1485
        %v1487 = vsel %vm899, %v1486, 0.0
        %1488 = vadd.xlane.f32.xlu0 %v1487
        %v1489 = vpop.xlane.xlu0 %1488
        %v1490 = vmul.f32 %v1489, %v1483
        %v1491 = vadd.f32 %v1490, 1e-12
        %v1492 = vrsqrt.pop %v1491
        %v1493 = vmul.f32 %v1485, %v1492
        %v1495 = vlaneseq
        %v1496 = vshrl.u32 %v1495, 7
        %v1497 = vsub.s32 0, %v1496
        %v1498 = vrot.slane %v1478, %v1497
        %v1500 = vmul.f32 %v1493, %v1498
        %v1502 = vlaneseq
        %v1503 = vshrl.u32 %v1502, 7
        %v1504 = vsub.s32 0, %v1503
        %v1505 = vrot.slane %v1479, %v1504
        %v1507 = vadd.f32 %v1500, %v1505
        %v1508 = vpack.c.bf16 %v1507, %v1507
        %v1509 = vld [vmem:[%s12] sm:$0xf]
        %v1510 = vld [vmem:[%s12 + $0x4] sm:$0xf]
        %v1511 = vld [vmem:[%s12 + $0x8] sm:$0xf]
        %v1512 = vld [vmem:[%s12 + $0xc] sm:$0xf]
        %v1513 = vld [vmem:[%s13] sm:$0x1]
        %v1515 = vlaneseq
        %v1516 = vshrl.u32 %v1515, 7
        %v1517 = vsub.s32 0, %v1516
        %v1518 = vrot.slane %v1513, %v1517
        %v1524 = vunpack.c.l.b16 %v1509
        %v1525 = vunpack.c.l.b16 %v1510
        %v1526 = vunpack.c.l.b16 %v1511
        %v1527 = vunpack.c.l.b16 %v1512
        %v1528 = vpack.c.b16 %v1525, %v1524
        %v1529 = vpack.c.b16 %v1527, %v1526
        %v1533 = vsel %vm899, %v1508, 0
        %1535 = vmatprep.subr.bf16.mxu0 0
        %1536 = vmatpush1.bf16.msra.mxu0 0
        %1537 = vmatprep.subr.bf16.mxu0 0
        %1538 = vmatpush1.bf16.msra.mxu0 0
        %1539 = vmatprep.subr.bf16.mxu0 0
        %1540 = vmatpush1.bf16.msra.mxu0 0
        %1541 = vmatprep.subr.bf16.mxu0 0
        %1542 = vmatpush1.bf16.msra.mxu0 0
        %1543 = vmatprep.subr.bf16.mxu0 0
        %1544 = vmatpush1.bf16.msra.mxu0 0
        %1545 = vmatprep.subr.bf16.mxu0 0
        %1546 = vmatpush1.bf16.msra.mxu0 0
        %1547 = vmatprep.subr.bf16.mxu0 0
        %1548 = vmatpush1.bf16.msra.mxu0 %v1529
        %1549 = vmatprep.subr.bf16.mxu0 0
        %1550 = vmatpush1.bf16.msra.mxu0 %v1528
        %1551 = vmatprep.subr.bf16.mxu0 0
        %1552 = vmatpush2.bf16.msra.mxu0 0
        %1553 = vmatprep.subr.bf16.mxu0 0
        %1554 = vmatpush2.bf16.msra.mxu0 0
        %1555 = vmatprep.subr.bf16.mxu0 0
        %1556 = vmatpush2.bf16.msra.mxu0 0
        %1557 = vmatprep.subr.bf16.mxu0 0
        %1558 = vmatpush2.bf16.msra.mxu0 0
        %1559 = vmatprep.subr.bf16.mxu0 0
        %1560 = vmatpush2.bf16.msra.mxu0 0
        %1561 = vmatprep.subr.bf16.mxu0 0
        %1562 = vmatpush2.bf16.msra.mxu0 0
        %1563 = vmatprep.subr.bf16.mxu0 0
        %1564 = vmatpush2.bf16.msra.mxu0 0
        %1565 = vmatprep.subr.bf16.mxu0 0
        %1566 = vmatpush2.bf16.msra.mxu0 0
        %1567 = vmatprep.mubr.bf16.mxu0 0
        %1568 = vmatmul.mubr.bf16.gmra.mxu0 %v1533
        %v1569 = vpop.f32.mrf.mxu0
        %v1570 = vadd.f32 %v1518, %v1569
        %v1571 = vpop.f32.mrf.mxu0
        %v1572 = vpop.f32.mrf.mxu0
        %v1573 = vpop.f32.mrf.mxu0
        %1574 = vdwg.mxu0
        %v1575 = vmul.f32 %v1570, 0.5
        %v1576 = vmul.f32 %v1570, 0.70710677
        %v1577 = verf.f32.pop %v1576
        %v1578 = vadd.f32 %v1577, 1.0
        %v1579 = vmul.f32 %v1575, %v1578
        %v1580 = vpack.c.bf16 %v1579, %v1579
        %v1581 = vld [vmem:[%s14] sm:$0xf]
        %v1582 = vld [vmem:[%s14 + $0x4] sm:$0xf]
        %v1583 = vld [vmem:[%s14 + $0x8] sm:$0xf]
        %v1584 = vld [vmem:[%s14 + $0xc] sm:$0xf]
        %v1585 = vld [vmem:[%s14 + $0x10] sm:$0xf]
        %v1586 = vld [vmem:[%s14 + $0x14] sm:$0xf]
        %v1587 = vld [vmem:[%s14 + $0x18] sm:$0xf]
        %v1588 = vld [vmem:[%s14 + $0x1c] sm:$0xf]
        %v1589 = vld [vmem:[%s15] sm:$0x1]
        %v1591 = vlaneseq
        %v1592 = vshrl.u32 %v1591, 7
        %v1593 = vsub.s32 0, %v1592
        %v1594 = vrot.slane %v1589, %v1593
        %v1604 = vunpack.c.l.b16 %v1581
        %v1605 = vunpack.c.l.b16 %v1582
        %v1606 = vunpack.c.l.b16 %v1583
        %v1607 = vunpack.c.l.b16 %v1584
        %v1608 = vunpack.c.l.b16 %v1585
        %v1609 = vunpack.c.l.b16 %v1586
        %v1610 = vunpack.c.l.b16 %v1587
        %v1611 = vunpack.c.l.b16 %v1588
        %v1612 = vpack.c.b16 %v1605, %v1604
        %v1613 = vpack.c.b16 %v1607, %v1606
        %v1614 = vpack.c.b16 %v1609, %v1608
        %v1615 = vpack.c.b16 %v1611, %v1610
        %vm1620 = vcmask 523264
        %v1622 = vsel %vm1620, %v1580, 0
        %1624 = vmatprep.subr.bf16.mxu0 0
        %1625 = vmatpush1.bf16.msra.mxu0 0
        %1626 = vmatprep.subr.bf16.mxu0 0
        %1627 = vmatpush1.bf16.msra.mxu0 0
        %1628 = vmatprep.subr.bf16.mxu0 0
        %1629 = vmatpush1.bf16.msra.mxu0 0
        %1630 = vmatprep.subr.bf16.mxu0 0
        %1631 = vmatpush1.bf16.msra.mxu0 0
        %1632 = vmatprep.subr.bf16.mxu0 0
        %1633 = vmatpush1.bf16.msra.mxu0 %v1615
        %1634 = vmatprep.subr.bf16.mxu0 0
        %1635 = vmatpush1.bf16.msra.mxu0 %v1614
        %1636 = vmatprep.subr.bf16.mxu0 0
        %1637 = vmatpush1.bf16.msra.mxu0 %v1613
        %1638 = vmatprep.subr.bf16.mxu0 0
        %1639 = vmatpush1.bf16.msra.mxu0 %v1612
        %1640 = vmatprep.subr.bf16.mxu0 0
        %1641 = vmatpush2.bf16.msra.mxu0 0
        %1642 = vmatprep.subr.bf16.mxu0 0
        %1643 = vmatpush2.bf16.msra.mxu0 0
        %1644 = vmatprep.subr.bf16.mxu0 0
        %1645 = vmatpush2.bf16.msra.mxu0 0
        %1646 = vmatprep.subr.bf16.mxu0 0
        %1647 = vmatpush2.bf16.msra.mxu0 0
        %1648 = vmatprep.subr.bf16.mxu0 0
        %1649 = vmatpush2.bf16.msra.mxu0 0
        %1650 = vmatprep.subr.bf16.mxu0 0
        %1651 = vmatpush2.bf16.msra.mxu0 0
        %1652 = vmatprep.subr.bf16.mxu0 0
        %1653 = vmatpush2.bf16.msra.mxu0 0
        %1654 = vmatprep.subr.bf16.mxu0 0
        %1655 = vmatpush2.bf16.msra.mxu0 0
        %1656 = vmatprep.mubr.bf16.mxu0 0
        %1657 = vmatmul.mubr.bf16.gmra.mxu0 %v1622
        %v1658 = vpop.f32.mrf.mxu0
        %v1659 = vadd.f32 %v1594, %v1658
        %v1660 = vpop.f32.mrf.mxu0
        %v1661 = vpop.f32.mrf.mxu0
        %v1662 = vpop.f32.mrf.mxu0
        %1663 = vdwg.mxu0
        %v1664 = vadd.f32 %v1659, %v1507
        %v1665 = vld [vmem:[%s16] sm:$0x1]
        %v1666 = vld [vmem:[%s17] sm:$0x1]
        %v1667 = vsel %vm899, %v1664, 0.0
        %1668 = vadd.xlane.f32.xlu0 %v1667
        %v1669 = vpop.xlane.xlu0 %1668
        %v1670 = vmul.f32 %v1669, %v1483
        %v1671 = vsub.f32 %v1664, %v1670
        %v1672 = vmul.f32 %v1671, %v1671
        %v1673 = vsel %vm899, %v1672, 0.0
        %1674 = vadd.xlane.f32.xlu0 %v1673
        %v1675 = vpop.xlane.xlu0 %1674
        %v1676 = vmul.f32 %v1675, %v1483
        %v1677 = vadd.f32 %v1676, 1e-12
        %v1678 = vrsqrt.pop %v1677
        %v1679 = vmul.f32 %v1671, %v1678
        %v1681 = vlaneseq
        %v1682 = vshrl.u32 %v1681, 7
        %v1683 = vsub.s32 0, %v1682
        %v1684 = vrot.slane %v1665, %v1683
        %v1686 = vmul.f32 %v1679, %v1684
        %v1688 = vlaneseq
        %v1689 = vshrl.u32 %v1688, 7
        %v1690 = vsub.s32 0, %v1689
        %v1691 = vrot.slane %v1666, %v1690
        %v1693 = vadd.f32 %v1686, %v1691
        %1694 = vst.msk [vmem:[%s693] sm:$0xff] %vm899, %v1693
        %s1695 = sand.u32 %s448, 1
        %s1696 = scalar_lea.sflag [#allocation6], %s1695
        %s1697 = sand.u32 %s448, 1
        %s1698 = smul.addr %s1697, 8
        %s1699 = scalar_lea.vmem [#allocation16], %s1698
        // Predicated region
        $region125: #{tpu_custom_call.1} parent=91 // pred_check
          %p1700 = pneg %p458
        $region126: #{tpu_custom_call.1} parent=91 // pred_check_branch
          %1702 = sbr.rel (%p1700) target = $region128
        $region127: #{tpu_custom_call.1} parent=91 // pred_region
          %s1704 = ssub.s32 128, 128
          %1705 = vsyncadd %s1696, %s1704
          %s1706 = sadd.s32 %s43, %s42
          %s1707 = smul.addr %s1706, 128
          %s1708 = scalar_lea.hbm %s18, %s1707
          %s1710 = sshll.u32 %s1699, 4
          %s1711 = int_to_ptr.vmem [resolvable:$true] %s1710
          %1713 = dma.vmem_to_hbm [thread:$0]  %s1711, 128, %s1708, %s1696
        $region128: #{tpu_custom_call.1} parent=91 // pred_fallthru
          _
      $region92: #{tpu_custom_call.1} parent=5 // pred_fallthru
        _
      %p1714 = scmp.le.s32.totalorder 2, %s33
      // Predicated region
      $region129: #{tpu_custom_call.1} parent=5 // pred_check
        %p1715 = pneg %p1714
      $region130: #{tpu_custom_call.1} parent=5 // pred_check_branch
        %1717 = sbr.rel (%p1715) target = $region132
      $region131: #{tpu_custom_call.1} parent=5 // pred_region
        %s1718 = ssub.s32 %s33, 2
        // Predicated region
        $region133: #{tpu_custom_call.1} parent=131 // pred_check
          %p1719 = pneg %p464
        $region134: #{tpu_custom_call.1} parent=131 // pred_check_branch
          %1721 = sbr.rel (%p1719) target = $region136
        $region135: #{tpu_custom_call.1} parent=131 // pred_region
          %s1722 = sand.u32 %s449, 1
          %s1723 = scalar_lea.sflag [#allocation6], %s1722
          %s1724 = sand.u32 %s449, 1
          %s1725 = smul.addr %s1724, 8
          %s1726 = scalar_lea.vmem [#allocation16], %s1725
          %1727 = dma.done %s1723, 128
        $region136: #{tpu_custom_call.1} parent=131 // pred_fallthru
          _
      $region132: #{tpu_custom_call.1} parent=5 // pred_fallthru
        _
    $region6: #{tpu_custom_call.1} parent=1 // loop_footer
      %s37 = sadd.s32 1, %s33
    $region7: #{tpu_custom_call.1} parent=1 // loop_footer_branch
      %32 = sbr.rel target = $region3
    $region8: #{tpu_custom_call.1} parent=1 // loop_exit
      _
    %1728 = vsyncpa [#allocation5], 1
    %s1729 = scalar_lea.sflag [#allocation5], 1
    %1730 = vsyncpa %s1729, 1
    %1731 = vsyncpa [#allocation8], 1
    %1732 = vsyncpa [#allocation11], 1
    %1733 = vsyncpa [#allocation14], 1
    %1734 = vsyncpa [#allocation6], 1
    %s1735 = scalar_lea.sflag [#allocation6], 1
    %1736 = vsyncpa %s1735, 1

// kernel: tpu_custom_call.1
$region0: #{tpu_custom_call.1}
  #allocation0 [shape = 'u32[]', space=smem, size = 0x4, offset = 0x4, fixed_abs, tag = 'smem constant byte address 0x4 - core index']
  #allocation1 [shape = 'u32[144,128]{1,0:T(1,128)}', space=vmem, size = 0x12000, scoped, tag = 'internal scratch']
  #allocation2 [shape = 'bf16[4,8,8]{2,1,0:T(8,128)(2,1)}', space=vmem, size = 0x2000, scoped, tag = 'scratch operand']
  #allocation3 [shape = 'bf16[4,8,8]{2,1,0:T(8,128)(2,1)}', space=vmem, size = 0x2000, scoped, tag = 'scratch operand']
  %s0 = inlined_call_operand.vmem [shape: f32[2,8,32], index: 0, kind: input, shape index: {}]
  %s1 = inlined_call_operand.hbm [shape: f32[2,1,8], index: 1, kind: input, shape index: {}]
  %s2 = inlined_call_operand.vmem [shape: bf16[32,32], index: 2, kind: input, shape index: {}]
  %s3 = inlined_call_operand.hbm [shape: f32[1,32], index: 3, kind: input, shape index: {}]
  %s4 = inlined_call_operand.vmem [shape: bf16[32,32], index: 4, kind: input, shape index: {}]
  %s5 = inlined_call_operand.hbm [shape: f32[1,32], index: 5, kind: input, shape index: {}]
  %s6 = inlined_call_operand.hbm [shape: bf16[32,32], index: 6, kind: input, shape index: {}]
  %s7 = inlined_call_operand.hbm [shape: f32[1,32], index: 7, kind: input, shape index: {}]
  %s8 = inlined_call_operand.hbm [shape: bf16[32,32], index: 8, kind: input, shape index: {}]
  %s9 = inlined_call_operand.hbm [shape: f32[1,32], index: 9, kind: input, shape index: {}]
  %s10 = inlined_call_operand.vmem [shape: f32[1,32], index: 10, kind: input, shape index: {}]
  %s11 = inlined_call_operand.vmem [shape: f32[1,32], index: 11, kind: input, shape index: {}]
  %s12 = inlined_call_operand.vmem [shape: bf16[32,64], index: 12, kind: input, shape index: {}]
  %s13 = inlined_call_operand.vmem [shape: f32[1,64], index: 13, kind: input, shape index: {}]
  %s14 = inlined_call_operand.vmem [shape: bf16[64,32], index: 14, kind: input, shape index: {}]
  %s15 = inlined_call_operand.vmem [shape: f32[1,32], index: 15, kind: input, shape index: {}]
  %s16 = inlined_call_operand.vmem [shape: f32[1,32], index: 16, kind: input, shape index: {}]
  %s17 = inlined_call_operand.vmem [shape: f32[1,32], index: 17, kind: input, shape index: {}]
  %s18 = inlined_call_operand.hbm [shape: f32[2,8,32], index: 18, kind: output, shape index: {}]
  %s19 = sld [smem:[#allocation0]]
  $region137: #{tpu_custom_call.1} parent=0
    _
  %s21 = ssub.s32 1, %s19
  %s22 = scalar_select 0, %s21, %s19
  $region1: #{tpu_custom_call.1} parent=0
    #allocation4 [shape = 'u8[1024]{0}', space=vmem, size = 0x400, scoped, tag = 'input window, operand 1']
    #allocation5 [shape = 's32[2]{0}', space=sflag, size = 0x8, scoped, tag = 'scoped memory for tpu_custom_call.1']
    #allocation6 [shape = 's32[2]{0}', space=sflag, size = 0x8, scoped, tag = 'scoped memory for tpu_custom_call.1']
    #allocation7 [shape = 'u8[512]{0}', space=vmem, size = 0x400, scoped, tag = 'input window, operand 3, single buffered']
    #allocation8 [shape = 's32[1]{0}', space=sflag, size = 0x4, scoped, tag = 'scoped memory for tpu_custom_call.1']
    #allocation9 [shape = 'u8[512]{0}', space=vmem, size = 0x400, scoped, tag = 'input window, operand 5, single buffered']
    #allocation10 [shape = 'u8[8192]{0}', space=vmem, size = 0x2000, scoped, tag = 'input window, operand 6, single buffered']
    #allocation11 [shape = 's32[1]{0}', space=sflag, size = 0x4, scoped, tag = 'scoped memory for tpu_custom_call.1']
    #allocation12 [shape = 'u8[512]{0}', space=vmem, size = 0x400, scoped, tag = 'input window, operand 7, single buffered']
    #allocation13 [shape = 'u8[8192]{0}', space=vmem, size = 0x2000, scoped, tag = 'input window, operand 8, single buffered']
    #allocation14 [shape = 's32[1]{0}', space=sflag, size = 0x4, scoped, tag = 'scoped memory for tpu_custom_call.1']
    #allocation15 [shape = 'u8[512]{0}', space=vmem, size = 0x400, scoped, tag = 'input window, operand 9, single buffered']
    #allocation16 [shape = 'u8[8192]{0}', space=vmem, size = 0x2000, scoped, tag = 'output window, operand 0']
    %23 = vsyncpa [#allocation5], 0
    %s24 = scalar_lea.sflag [#allocation5], 1
    %25 = vsyncpa %s24, 0
    %26 = vsyncpa [#allocation8], 0
    %27 = vsyncpa [#allocation11], 0
    %28 = vsyncpa [#allocation14], 0
    %29 = vsyncpa [#allocation6], 0
    %s30 = scalar_lea.sflag [#allocation6], 1
    %31 = vsyncpa %s30, 0
    loop: start=0, step=1, limit=4
    $region2: #{tpu_custom_call.1} parent=1 // loop_pre_header
      _
    $region3: #{tpu_custom_call.1} parent=1 // loop_header
      %s33 = sphi 0, %s37
      %p34 = scmp.ge.s32.totalorder %s33, 4
      %s40 = sphi 0, %s52
      %s41 = sphi 0, %s48
      %s42 = sphi 0, %s40
      %s43 = sphi 0, %s41
      %s44 = sphi 0, %s42
      %s45 = sphi 0, %s43
      %s55 = sphi 0, %s57
      %s58 = sphi 0, %s55
      %s59 = sphi 0, %s58
      %s75 = sphi 0, %s59
      %s81 = sphi 0, %s83
      %s84 = sphi 0, %s81
      %s85 = sphi 0, %s84
      %s101 = sphi 0, %s85
      %s105 = sphi 0, %s105
      %s107 = sphi 0, %s105
      %s108 = sphi 0, %s107
      %s122 = sphi 0, %s108
      %s126 = sphi 0, %s126
      %s128 = sphi 0, %s126
      %s129 = sphi 0, %s128
      %s143 = sphi 0, %s129
      %s147 = sphi 0, %s147
      %s149 = sphi 0, %s147
      %s150 = sphi 0, %s149
      %s164 = sphi 0, %s150
      %s168 = sphi 0, %s168
      %s170 = sphi 0, %s168
      %s171 = sphi 0, %s170
      %s185 = sphi 0, %s171
      %s189 = sphi 0, %s189
      %s191 = sphi 0, %s189
      %s192 = sphi 0, %s191
      %s206 = sphi 0, %s192
      %s210 = sphi 0, %s210
      %s212 = sphi 0, %s210
      %s213 = sphi 0, %s212
      %s227 = sphi 0, %s213
      %s231 = sphi 0, %s231
      %s233 = sphi 0, %s231
      %s234 = sphi 0, %s233
      %s248 = sphi 0, %s234
      %s252 = sphi 0, %s252
      %s254 = sphi 0, %s252
      %s255 = sphi 0, %s254
      %s269 = sphi 0, %s255
      %s273 = sphi 0, %s273
      %s275 = sphi 0, %s273
      %s276 = sphi 0, %s275
      %s290 = sphi 0, %s276
      %s294 = sphi 0, %s294
      %s296 = sphi 0, %s294
      %s297 = sphi 0, %s296
      %s311 = sphi 0, %s297
      %s315 = sphi 0, %s315
      %s317 = sphi 0, %s315
      %s318 = sphi 0, %s317
      %s332 = sphi 0, %s318
      %s336 = sphi 0, %s336
      %s338 = sphi 0, %s336
      %s339 = sphi 0, %s338
      %s353 = sphi 0, %s339
      %s357 = sphi 0, %s357
      %s359 = sphi 0, %s357
      %s360 = sphi 0, %s359
      %s374 = sphi 0, %s360
      %s378 = sphi 0, %s378
      %s380 = sphi 0, %s378
      %s381 = sphi 0, %s380
      %s395 = sphi 0, %s381
      %s399 = sphi 0, %s399
      %s401 = sphi 0, %s399
      %s402 = sphi 0, %s401
      %s416 = sphi 0, %s402
      %s420 = sphi 0, %s420
      %s422 = sphi 0, %s420
      %s423 = sphi 0, %s422
      %s437 = sphi 0, %s423
      %s445 = sphi 0, %s447
      %s448 = sphi 0, %s445
      %s449 = sphi 0, %s448
      %s465 = sphi 0, %s449
    $region4: #{tpu_custom_call.1} parent=1 // loop_header_branch
      %36 = sbr.rel (%p34) target = $region8
    $region5: #{tpu_custom_call.1} parent=1 // loop_body
      %s38 = ssub.s32 %s33, 1
      %s39 = ssub.s32 %s33, 2
      %s46 = sadd.s32 1, %s41
      %p47 = scmp.ge.s32.totalorder %s46, 1
      %s48 = scalar_select %p47, 0, %s46
      %s49 = sadd.s32 1, %s40
      %s50 = scalar_select %p47, %s49, %s40
      %p51 = scmp.ge.s32.totalorder %s50, 2
      %s52 = scalar_select %p51, 0, %s50
      %s53 = ssub.s32 %s40, %s52
      %p54 = scmp.eq.s32.totalorder %s53, 0
      %s56 = sadd.s32 %s55, 1
      %s57 = scalar_select %p54, %s55, %s56
      %p60 = pneg %p54
      %p61 = scmp.eq.s32.totalorder %s33, 1
      %p62 = por %p60, %p61
      %p63 = scmp.ne.s32.totalorder %s55, %s58
      %p64 = scmp.eq.s32.totalorder %s33, 0
      %p65 = por %p63, %p64
      %p66 = scmp.ne.s32.totalorder %s55, %s58
      %p67 = scmp.eq.s32.totalorder %s38, 1
      %p68 = por %p66, %p67
      %p69 = scmp.ne.s32.totalorder %s58, %s59
      %p70 = scmp.eq.s32.totalorder %s38, 0
      %p71 = por %p69, %p70
      %p72 = scmp.ne.s32.totalorder %s58, %s59
      %p73 = scmp.eq.s32.totalorder %s39, 1
      %p74 = por %p72, %p73
      %p76 = scmp.ne.s32.totalorder %s59, %s75
      %p77 = scmp.eq.s32.totalorder %s39, 0
      %p78 = por %p76, %p77
      %s79 = ssub.s32 %s40, %s52
      %p80 = scmp.eq.s32.totalorder %s79, 0
      %s82 = sadd.s32 %s81, 1
      %s83 = scalar_select %p80, %s81, %s82
      %p86 = pneg %p80
      %p87 = scmp.eq.s32.totalorder %s33, 1
      %p88 = por %p86, %p87
      %p89 = scmp.ne.s32.totalorder %s81, %s84
      %p90 = scmp.eq.s32.totalorder %s33, 0
      %p91 = por %p89, %p90
      %p92 = scmp.ne.s32.totalorder %s81, %s84
      %p93 = scmp.eq.s32.totalorder %s38, 1
      %p94 = por %p92, %p93
      %p95 = scmp.ne.s32.totalorder %s84, %s85
      %p96 = scmp.eq.s32.totalorder %s38, 0
      %p97 = por %p95, %p96
      %p98 = scmp.ne.s32.totalorder %s84, %s85
      %p99 = scmp.eq.s32.totalorder %s39, 1
      %p100 = por %p98, %p99
      %p102 = scmp.ne.s32.totalorder %s85, %s101
      %p103 = scmp.eq.s32.totalorder %s39, 0
      %p104 = por %p102, %p103
      %s106 = sadd.s32 %s105, 1
      %p109 = scmp.eq.s32.totalorder %s33, 1
      %p110 = scmp.ne.s32.totalorder %s105, %s107
      %p111 = scmp.eq.s32.totalorder %s33, 0
      %p112 = por %p110, %p111
      %p113 = scmp.ne.s32.totalorder %s105, %s107
      %p114 = scmp.eq.s32.totalorder %s38, 1
      %p115 = por %p113, %p114
      %p116 = scmp.ne.s32.totalorder %s107, %s108
      %p117 = scmp.eq.s32.totalorder %s38, 0
      %p118 = por %p116, %p117
      %p119 = scmp.ne.s32.totalorder %s107, %s108
      %p120 = scmp.eq.s32.totalorder %s39, 1
      %p121 = por %p119, %p120
      %p123 = scmp.ne.s32.totalorder %s108, %s122
      %p124 = scmp.eq.s32.totalorder %s39, 0
      %p125 = por %p123, %p124
      %s127 = sadd.s32 %s126, 1
      %p130 = scmp.eq.s32.totalorder %s33, 1
      %p131 = scmp.ne.s32.totalorder %s126, %s128
      %p132 = scmp.eq.s32.totalorder %s33, 0
      %p133 = por %p131, %p132
      %p134 = scmp.ne.s32.totalorder %s126, %s128
      %p135 = scmp.eq.s32.totalorder %s38, 1
      %p136 = por %p134, %p135
      %p137 = scmp.ne.s32.totalorder %s128, %s129
      %p138 = scmp.eq.s32.totalorder %s38, 0
      %p139 = por %p137, %p138
      %p140 = scmp.ne.s32.totalorder %s128, %s129
      %p141 = scmp.eq.s32.totalorder %s39, 1
      %p142 = por %p140, %p141
      %p144 = scmp.ne.s32.totalorder %s129, %s143
      %p145 = scmp.eq.s32.totalorder %s39, 0
      %p146 = por %p144, %p145
      %s148 = sadd.s32 %s147, 1
      %p151 = scmp.eq.s32.totalorder %s33, 1
      %p152 = scmp.ne.s32.totalorder %s147, %s149
      %p153 = scmp.eq.s32.totalorder %s33, 0
      %p154 = por %p152, %p153
      %p155 = scmp.ne.s32.totalorder %s147, %s149
      %p156 = scmp.eq.s32.totalorder %s38, 1
      %p157 = por %p155, %p156
      %p158 = scmp.ne.s32.totalorder %s149, %s150
      %p159 = scmp.eq.s32.totalorder %s38, 0
      %p160 = por %p158, %p159
      %p161 = scmp.ne.s32.totalorder %s149, %s150
      %p162 = scmp.eq.s32.totalorder %s39, 1
      %p163 = por %p161, %p162
      %p165 = scmp.ne.s32.totalorder %s150, %s164
      %p166 = scmp.eq.s32.totalorder %s39, 0
      %p167 = por %p165, %p166
      %s169 = sadd.s32 %s168, 1
      %p172 = scmp.eq.s32.totalorder %s33, 1
      %p173 = scmp.ne.s32.totalorder %s168, %s170
      %p174 = scmp.eq.s32.totalorder %s33, 0
      %p175 = por %p173, %p174
      %p176 = scmp.ne.s32.totalorder %s168, %s170
      %p177 = scmp.eq.s32.totalorder %s38, 1
      %p178 = por %p176, %p177
      %p179 = scmp.ne.s32.totalorder %s170, %s171
      %p180 = scmp.eq.s32.totalorder %s38, 0
      %p181 = por %p179, %p180
      %p182 = scmp.ne.s32.totalorder %s170, %s171
      %p183 = scmp.eq.s32.totalorder %s39, 1
      %p184 = por %p182, %p183
      %p186 = scmp.ne.s32.totalorder %s171, %s185
      %p187 = scmp.eq.s32.totalorder %s39, 0
      %p188 = por %p186, %p187
      %s190 = sadd.s32 %s189, 1
      %p193 = scmp.eq.s32.totalorder %s33, 1
      %p194 = scmp.ne.s32.totalorder %s189, %s191
      %p195 = scmp.eq.s32.totalorder %s33, 0
      %p196 = por %p194, %p195
      %p197 = scmp.ne.s32.totalorder %s189, %s191
      %p198 = scmp.eq.s32.totalorder %s38, 1
      %p199 = por %p197, %p198
      %p200 = scmp.ne.s32.totalorder %s191, %s192
      %p201 = scmp.eq.s32.totalorder %s38, 0
      %p202 = por %p200, %p201
      %p203 = scmp.ne.s32.totalorder %s191, %s192
      %p204 = scmp.eq.s32.totalorder %s39, 1
      %p205 = por %p203, %p204
      %p207 = scmp.ne.s32.totalorder %s192, %s206
      %p208 = scmp.eq.s32.totalorder %s39, 0
      %p209 = por %p207, %p208
      %s211 = sadd.s32 %s210, 1
      %p214 = scmp.eq.s32.totalorder %s33, 1
      %p215 = scmp.ne.s32.totalorder %s210, %s212
      %p216 = scmp.eq.s32.totalorder %s33, 0
      %p217 = por %p215, %p216
      %p218 = scmp.ne.s32.totalorder %s210, %s212
      %p219 = scmp.eq.s32.totalorder %s38, 1
      %p220 = por %p218, %p219
      %p221 = scmp.ne.s32.totalorder %s212, %s213
      %p222 = scmp.eq.s32.totalorder %s38, 0
      %p223 = por %p221, %p222
      %p224 = scmp.ne.s32.totalorder %s212, %s213
      %p225 = scmp.eq.s32.totalorder %s39, 1
      %p226 = por %p224, %p225
      %p228 = scmp.ne.s32.totalorder %s213, %s227
      %p229 = scmp.eq.s32.totalorder %s39, 0
      %p230 = por %p228, %p229
      %s232 = sadd.s32 %s231, 1
      %p235 = scmp.eq.s32.totalorder %s33, 1
      %p236 = scmp.ne.s32.totalorder %s231, %s233
      %p237 = scmp.eq.s32.totalorder %s33, 0
      %p238 = por %p236, %p237
      %p239 = scmp.ne.s32.totalorder %s231, %s233
      %p240 = scmp.eq.s32.totalorder %s38, 1
      %p241 = por %p239, %p240
      %p242 = scmp.ne.s32.totalorder %s233, %s234
      %p243 = scmp.eq.s32.totalorder %s38, 0
      %p244 = por %p242, %p243
      %p245 = scmp.ne.s32.totalorder %s233, %s234
      %p246 = scmp.eq.s32.totalorder %s39, 1
      %p247 = por %p245, %p246
      %p249 = scmp.ne.s32.totalorder %s234, %s248
      %p250 = scmp.eq.s32.totalorder %s39, 0
      %p251 = por %p249, %p250
      %s253 = sadd.s32 %s252, 1
      %p256 = scmp.eq.s32.totalorder %s33, 1
      %p257 = scmp.ne.s32.totalorder %s252, %s254
      %p258 = scmp.eq.s32.totalorder %s33, 0
      %p259 = por %p257, %p258
      %p260 = scmp.ne.s32.totalorder %s252, %s254
      %p261 = scmp.eq.s32.totalorder %s38, 1
      %p262 = por %p260, %p261
      %p263 = scmp.ne.s32.totalorder %s254, %s255
      %p264 = scmp.eq.s32.totalorder %s38, 0
      %p265 = por %p263, %p264
      %p266 = scmp.ne.s32.totalorder %s254, %s255
      %p267 = scmp.eq.s32.totalorder %s39, 1
      %p268 = por %p266, %p267
      %p270 = scmp.ne.s32.totalorder %s255, %s269
      %p271 = scmp.eq.s32.totalorder %s39, 0
      %p272 = por %p270, %p271
      %s274 = sadd.s32 %s273, 1
      %p277 = scmp.eq.s32.totalorder %s33, 1
      %p278 = scmp.ne.s32.totalorder %s273, %s275
      %p279 = scmp.eq.s32.totalorder %s33, 0
      %p280 = por %p278, %p279
      %p281 = scmp.ne.s32.totalorder %s273, %s275
      %p282 = scmp.eq.s32.totalorder %s38, 1
      %p283 = por %p281, %p282
      %p284 = scmp.ne.s32.totalorder %s275, %s276
      %p285 = scmp.eq.s32.totalorder %s38, 0
      %p286 = por %p284, %p285
      %p287 = scmp.ne.s32.totalorder %s275, %s276
      %p288 = scmp.eq.s32.totalorder %s39, 1
      %p289 = por %p287, %p288
      %p291 = scmp.ne.s32.totalorder %s276, %s290
      %p292 = scmp.eq.s32.totalorder %s39, 0
      %p293 = por %p291, %p292
      %s295 = sadd.s32 %s294, 1
      %p298 = scmp.eq.s32.totalorder %s33, 1
      %p299 = scmp.ne.s32.totalorder %s294, %s296
      %p300 = scmp.eq.s32.totalorder %s33, 0
      %p301 = por %p299, %p300
      %p302 = scmp.ne.s32.totalorder %s294, %s296
      %p303 = scmp.eq.s32.totalorder %s38, 1
      %p304 = por %p302, %p303
      %p305 = scmp.ne.s32.totalorder %s296, %s297
      %p306 = scmp.eq.s32.totalorder %s38, 0
      %p307 = por %p305, %p306
      %p308 = scmp.ne.s32.totalorder %s296, %s297
      %p309 = scmp.eq.s32.totalorder %s39, 1
      %p310 = por %p308, %p309
      %p312 = scmp.ne.s32.totalorder %s297, %s311
      %p313 = scmp.eq.s32.totalorder %s39, 0
      %p314 = por %p312, %p313
      %s316 = sadd.s32 %s315, 1
      %p319 = scmp.eq.s32.totalorder %s33, 1
      %p320 = scmp.ne.s32.totalorder %s315, %s317
      %p321 = scmp.eq.s32.totalorder %s33, 0
      %p322 = por %p320, %p321
      %p323 = scmp.ne.s32.totalorder %s315, %s317
      %p324 = scmp.eq.s32.totalorder %s38, 1
      %p325 = por %p323, %p324
      %p326 = scmp.ne.s32.totalorder %s317, %s318
      %p327 = scmp.eq.s32.totalorder %s38, 0
      %p328 = por %p326, %p327
      %p329 = scmp.ne.s32.totalorder %s317, %s318
      %p330 = scmp.eq.s32.totalorder %s39, 1
      %p331 = por %p329, %p330
      %p333 = scmp.ne.s32.totalorder %s318, %s332
      %p334 = scmp.eq.s32.totalorder %s39, 0
      %p335 = por %p333, %p334
      %s337 = sadd.s32 %s336, 1
      %p340 = scmp.eq.s32.totalorder %s33, 1
      %p341 = scmp.ne.s32.totalorder %s336, %s338
      %p342 = scmp.eq.s32.totalorder %s33, 0
      %p343 = por %p341, %p342
      %p344 = scmp.ne.s32.totalorder %s336, %s338
      %p345 = scmp.eq.s32.totalorder %s38, 1
      %p346 = por %p344, %p345
      %p347 = scmp.ne.s32.totalorder %s338, %s339
      %p348 = scmp.eq.s32.totalorder %s38, 0
      %p349 = por %p347, %p348
      %p350 = scmp.ne.s32.totalorder %s338, %s339
      %p351 = scmp.eq.s32.totalorder %s39, 1
      %p352 = por %p350, %p351
      %p354 = scmp.ne.s32.totalorder %s339, %s353
      %p355 = scmp.eq.s32.totalorder %s39, 0
      %p356 = por %p354, %p355
      %s358 = sadd.s32 %s357, 1
      %p361 = scmp.eq.s32.totalorder %s33, 1
      %p362 = scmp.ne.s32.totalorder %s357, %s359
      %p363 = scmp.eq.s32.totalorder %s33, 0
      %p364 = por %p362, %p363
      %p365 = scmp.ne.s32.totalorder %s357, %s359
      %p366 = scmp.eq.s32.totalorder %s38, 1
      %p367 = por %p365, %p366
      %p368 = scmp.ne.s32.totalorder %s359, %s360
      %p369 = scmp.eq.s32.totalorder %s38, 0
      %p370 = por %p368, %p369
      %p371 = scmp.ne.s32.totalorder %s359, %s360
      %p372 = scmp.eq.s32.totalorder %s39, 1
      %p373 = por %p371, %p372
      %p375 = scmp.ne.s32.totalorder %s360, %s374
      %p376 = scmp.eq.s32.totalorder %s39, 0
      %p377 = por %p375, %p376
      %s379 = sadd.s32 %s378, 1
      %p382 = scmp.eq.s32.totalorder %s33, 1
      %p383 = scmp.ne.s32.totalorder %s378, %s380
      %p384 = scmp.eq.s32.totalorder %s33, 0
      %p385 = por %p383, %p384
      %p386 = scmp.ne.s32.totalorder %s378, %s380
      %p387 = scmp.eq.s32.totalorder %s38, 1
      %p388 = por %p386, %p387
      %p389 = scmp.ne.s32.totalorder %s380, %s381
      %p390 = scmp.eq.s32.totalorder %s38, 0
      %p391 = por %p389, %p390
      %p392 = scmp.ne.s32.totalorder %s380, %s381
      %p393 = scmp.eq.s32.totalorder %s39, 1
      %p394 = por %p392, %p393
      %p396 = scmp.ne.s32.totalorder %s381, %s395
      %p397 = scmp.eq.s32.totalorder %s39, 0
      %p398 = por %p396, %p397
      %s400 = sadd.s32 %s399, 1
      %p403 = scmp.eq.s32.totalorder %s33, 1
      %p404 = scmp.ne.s32.totalorder %s399, %s401
      %p405 = scmp.eq.s32.totalorder %s33, 0
      %p406 = por %p404, %p405
      %p407 = scmp.ne.s32.totalorder %s399, %s401
      %p408 = scmp.eq.s32.totalorder %s38, 1
      %p409 = por %p407, %p408
      %p410 = scmp.ne.s32.totalorder %s401, %s402
      %p411 = scmp.eq.s32.totalorder %s38, 0
      %p412 = por %p410, %p411
      %p413 = scmp.ne.s32.totalorder %s401, %s402
      %p414 = scmp.eq.s32.totalorder %s39, 1
      %p415 = por %p413, %p414
      %p417 = scmp.ne.s32.totalorder %s402, %s416
      %p418 = scmp.eq.s32.totalorder %s39, 0
      %p419 = por %p417, %p418
      %s421 = sadd.s32 %s420, 1
      %p424 = scmp.eq.s32.totalorder %s33, 1
      %p425 = scmp.ne.s32.totalorder %s420, %s422
      %p426 = scmp.eq.s32.totalorder %s33, 0
      %p427 = por %p425, %p426
      %p428 = scmp.ne.s32.totalorder %s420, %s422
      %p429 = scmp.eq.s32.totalorder %s38, 1
      %p430 = por %p428, %p429
      %p431 = scmp.ne.s32.totalorder %s422, %s423
      %p432 = scmp.eq.s32.totalorder %s38, 0
      %p433 = por %p431, %p432
      %p434 = scmp.ne.s32.totalorder %s422, %s423
      %p435 = scmp.eq.s32.totalorder %s39, 1
      %p436 = por %p434, %p435
      %p438 = scmp.ne.s32.totalorder %s423, %s437
      %p439 = scmp.eq.s32.totalorder %s39, 0
      %p440 = por %p438, %p439
      %s441 = ssub.s32 %s40, %s52
      %s442 = ssub.s32 %s41, %s48
      %s443 = sor.u32 %s441, %s442
      %p444 = scmp.eq.s32.totalorder %s443, 0
      %s446 = sadd.s32 %s445, 1
      %s447 = scalar_select %p444, %s445, %s446
      %p450 = pneg %p444
      %p451 = scmp.eq.s32.totalorder %s33, 1
      %p452 = por %p450, %p451
      %p453 = scmp.ne.s32.totalorder %s445, %s448
      %p454 = scmp.eq.s32.totalorder %s33, 0
      %p455 = por %p453, %p454
      %p456 = scmp.ne.s32.totalorder %s445, %s448
      %p457 = scmp.eq.s32.totalorder %s38, 1
      %p458 = por %p456, %p457
      %p459 = scmp.ne.s32.totalorder %s448, %s449
      %p460 = scmp.eq.s32.totalorder %s38, 0
      %p461 = por %p459, %p460
      %p462 = scmp.ne.s32.totalorder %s448, %s449
      %p463 = scmp.eq.s32.totalorder %s39, 1
      %p464 = por %p462, %p463
      %p466 = scmp.ne.s32.totalorder %s449, %s465
      %p467 = scmp.eq.s32.totalorder %s39, 0
      %p468 = por %p466, %p467
      %p469 = scmp.le.s32.totalorder 1, %s33
      %p470 = scmp.lt.s32.totalorder %s33, 3
      %p471 = pnand %p469, %p470
      %p472 = pneg %p471
      // Predicated region
      $region9: #{tpu_custom_call.1} parent=5 // pred_check
        _
      $region10: #{tpu_custom_call.1} parent=5 // pred_check_branch
        %474 = sbr.rel (%p471) target = $region12
      $region11: #{tpu_custom_call.1} parent=5 // pred_region
        %s475 = ssub.s32 %s33, 1
        // Predicated region
        $region13: #{tpu_custom_call.1} parent=11 // pred_check
          %p476 = pneg %p118
        $region14: #{tpu_custom_call.1} parent=11 // pred_check_branch
          %478 = sbr.rel (%p476) target = $region16
        $region15: #{tpu_custom_call.1} parent=11 // pred_region
          _
        $region16: #{tpu_custom_call.1} parent=11 // pred_fallthru
          _
        // Predicated region
        $region17: #{tpu_custom_call.1} parent=11 // pred_check
          %p479 = pneg %p139
        $region18: #{tpu_custom_call.1} parent=11 // pred_check_branch
          %481 = sbr.rel (%p479) target = $region20
        $region19: #{tpu_custom_call.1} parent=11 // pred_region
          %s483 = ssub.s32 16, 16
          %484 = vsyncadd [#allocation8], %s483
          %s486 = sshll.u32 [#allocation7], 4
          %s487 = int_to_ptr.vmem [resolvable:$true] %s486
          %489 = dma.hbm_to_vmem [thread:$0]  %s3, 16, %s487, [#allocation8]
        $region20: #{tpu_custom_call.1} parent=11 // pred_fallthru
          _
        // Predicated region
        $region21: #{tpu_custom_call.1} parent=11 // pred_check
          %p490 = pneg %p160
        $region22: #{tpu_custom_call.1} parent=11 // pred_check_branch
          %492 = sbr.rel (%p490) target = $region24
        $region23: #{tpu_custom_call.1} parent=11 // pred_region
          _
        $region24: #{tpu_custom_call.1} parent=11 // pred_fallthru
          _
        // Predicated region
        $region25: #{tpu_custom_call.1} parent=11 // pred_check
          %p493 = pneg %p181
        $region26: #{tpu_custom_call.1} parent=11 // pred_check_branch
          %495 = sbr.rel (%p493) target = $region28
        $region27: #{tpu_custom_call.1} parent=11 // pred_region
          %s497 = ssub.s32 16, 16
          %498 = vsyncadd [#allocation8], %s497
          %s500 = sshll.u32 [#allocation9], 4
          %s501 = int_to_ptr.vmem [resolvable:$true] %s500
          %503 = dma.hbm_to_vmem [thread:$0]  %s5, 16, %s501, [#allocation8]
        $region28: #{tpu_custom_call.1} parent=11 // pred_fallthru
          _
        // Predicated region
        $region29: #{tpu_custom_call.1} parent=11 // pred_check
          %p504 = pneg %p202
        $region30: #{tpu_custom_call.1} parent=11 // pred_check_branch
          %506 = sbr.rel (%p504) target = $region32
        $region31: #{tpu_custom_call.1} parent=11 // pred_region
          %s508 = ssub.s32 256, 256
          %509 = vsyncadd [#allocation11], %s508
          %s510 = sshll.u32 [#allocation10], 4
          %s511 = int_to_ptr.vmem [resolvable:$true] %s510
          %516 = dma.hbm_to_vmem [thread:$0]  %s6, 256, %s511, [#allocation11], 64, 64, 4
        $region32: #{tpu_custom_call.1} parent=11 // pred_fallthru
          _
        // Predicated region
        $region33: #{tpu_custom_call.1} parent=11 // pred_check
          %p517 = pneg %p223
        $region34: #{tpu_custom_call.1} parent=11 // pred_check_branch
          %519 = sbr.rel (%p517) target = $region36
        $region35: #{tpu_custom_call.1} parent=11 // pred_region
          %s521 = ssub.s32 16, 16
          %522 = vsyncadd [#allocation11], %s521
          %s524 = sshll.u32 [#allocation12], 4
          %s525 = int_to_ptr.vmem [resolvable:$true] %s524
          %527 = dma.hbm_to_vmem [thread:$0]  %s7, 16, %s525, [#allocation11]
        $region36: #{tpu_custom_call.1} parent=11 // pred_fallthru
          _
        // Predicated region
        $region37: #{tpu_custom_call.1} parent=11 // pred_check
          %p528 = pneg %p244
        $region38: #{tpu_custom_call.1} parent=11 // pred_check_branch
          %530 = sbr.rel (%p528) target = $region40
        $region39: #{tpu_custom_call.1} parent=11 // pred_region
          %s532 = ssub.s32 256, 256
          %533 = vsyncadd [#allocation14], %s532
          %s534 = sshll.u32 [#allocation13], 4
          %s535 = int_to_ptr.vmem [resolvable:$true] %s534
          %540 = dma.hbm_to_vmem [thread:$0]  %s8, 256, %s535, [#allocation14], 64, 64, 4
        $region40: #{tpu_custom_call.1} parent=11 // pred_fallthru
          _
        // Predicated region
        $region41: #{tpu_custom_call.1} parent=11 // pred_check
          %p541 = pneg %p265
        $region42: #{tpu_custom_call.1} parent=11 // pred_check_branch
          %543 = sbr.rel (%p541) target = $region44
        $region43: #{tpu_custom_call.1} parent=11 // pred_region
          %s545 = ssub.s32 16, 16
          %546 = vsyncadd [#allocation14], %s545
          %s548 = sshll.u32 [#allocation15], 4
          %s549 = int_to_ptr.vmem [resolvable:$true] %s548
          %551 = dma.hbm_to_vmem [thread:$0]  %s9, 16, %s549, [#allocation14]
        $region44: #{tpu_custom_call.1} parent=11 // pred_fallthru
          _
        // Predicated region
        $region45: #{tpu_custom_call.1} parent=11 // pred_check
          %p552 = pneg %p286
        $region46: #{tpu_custom_call.1} parent=11 // pred_check_branch
          %554 = sbr.rel (%p552) target = $region48
        $region47: #{tpu_custom_call.1} parent=11 // pred_region
          _
        $region48: #{tpu_custom_call.1} parent=11 // pred_fallthru
          _
        // Predicated region
        $region49: #{tpu_custom_call.1} parent=11 // pred_check
          %p555 = pneg %p307
        $region50: #{tpu_custom_call.1} parent=11 // pred_check_branch
          %557 = sbr.rel (%p555) target = $region52
        $region51: #{tpu_custom_call.1} parent=11 // pred_region
          _
        $region52: #{tpu_custom_call.1} parent=11 // pred_fallthru
          _
        // Predicated region
        $region53: #{tpu_custom_call.1} parent=11 // pred_check
          %p558 = pneg %p328
        $region54: #{tpu_custom_call.1} parent=11 // pred_check_branch
          %560 = sbr.rel (%p558) target = $region56
        $region55: #{tpu_custom_call.1} parent=11 // pred_region
          _
        $region56: #{tpu_custom_call.1} parent=11 // pred_fallthru
          _
        // Predicated region
        $region57: #{tpu_custom_call.1} parent=11 // pred_check
          %p561 = pneg %p349
        $region58: #{tpu_custom_call.1} parent=11 // pred_check_branch
          %563 = sbr.rel (%p561) target = $region60
        $region59: #{tpu_custom_call.1} parent=11 // pred_region
          _
        $region60: #{tpu_custom_call.1} parent=11 // pred_fallthru
          _
        // Predicated region
        $region61: #{tpu_custom_call.1} parent=11 // pred_check
          %p564 = pneg %p370
        $region62: #{tpu_custom_call.1} parent=11 // pred_check_branch
          %566 = sbr.rel (%p564) target = $region64
        $region63: #{tpu_custom_call.1} parent=11 // pred_region
          _
        $region64: #{tpu_custom_call.1} parent=11 // pred_fallthru
          _
        // Predicated region
        $region65: #{tpu_custom_call.1} parent=11 // pred_check
          %p567 = pneg %p391
        $region66: #{tpu_custom_call.1} parent=11 // pred_check_branch
          %569 = sbr.rel (%p567) target = $region68
        $region67: #{tpu_custom_call.1} parent=11 // pred_region
          _
        $region68: #{tpu_custom_call.1} parent=11 // pred_fallthru
          _
        // Predicated region
        $region69: #{tpu_custom_call.1} parent=11 // pred_check
          %p570 = pneg %p412
        $region70: #{tpu_custom_call.1} parent=11 // pred_check_branch
          %572 = sbr.rel (%p570) target = $region72
        $region71: #{tpu_custom_call.1} parent=11 // pred_region
          _
        $region72: #{tpu_custom_call.1} parent=11 // pred_fallthru
          _
        // Predicated region
        $region73: #{tpu_custom_call.1} parent=11 // pred_check
          %p573 = pneg %p433
        $region74: #{tpu_custom_call.1} parent=11 // pred_check_branch
          %575 = sbr.rel (%p573) target = $region76
        $region75: #{tpu_custom_call.1} parent=11 // pred_region
          _
        $region76: #{tpu_custom_call.1} parent=11 // pred_fallthru
          _
      $region12: #{tpu_custom_call.1} parent=5 // pred_fallthru
        _
      %p576 = scmp.lt.s32.totalorder %s33, 2
      // Predicated region
      $region77: #{tpu_custom_call.1} parent=5 // pred_check
        %p577 = pneg %p576
      $region78: #{tpu_custom_call.1} parent=5 // pred_check_branch
        %579 = sbr.rel (%p577) target = $region80
      $region79: #{tpu_custom_call.1} parent=5 // pred_region
        // Predicated region
        $region81: #{tpu_custom_call.1} parent=79 // pred_check
          %p580 = pneg %p65
        $region82: #{tpu_custom_call.1} parent=79 // pred_check_branch
          %582 = sbr.rel (%p580) target = $region84
        $region83: #{tpu_custom_call.1} parent=79 // pred_region
          %p583 = scmp.lt.s32.totalorder %s40, 1
          %s584 = scalar_select %p583, %s40, 1
          %s585 = smul.addr %s584, 8
          %s586 = scalar_lea.vmem %s0, %s585
        $region84: #{tpu_custom_call.1} parent=79 // pred_fallthru
          _
        // Predicated region
        $region85: #{tpu_custom_call.1} parent=79 // pred_check
          %p587 = pneg %p91
        $region86: #{tpu_custom_call.1} parent=79 // pred_check_branch
          %589 = sbr.rel (%p587) target = $region88
        $region87: #{tpu_custom_call.1} parent=79 // pred_region
          %s590 = sand.u32 %s81, 1
          %s591 = scalar_lea.sflag [#allocation5], %s590
          %s592 = sand.u32 %s81, 1
          %s593 = scalar_lea.vmem [#allocation4], %s592
          %s595 = ssub.s32 16, 16
          %596 = vsyncadd %s591, %s595
          %s597 = smul.addr %s40, 16
          %s598 = scalar_lea.hbm %s1, %s597
          %s600 = sshll.u32 %s593, 4
          %s601 = int_to_ptr.vmem [resolvable:$true] %s600
          %603 = dma.hbm_to_vmem [thread:$0]  %s598, 16, %s601, %s591
        $region88: #{tpu_custom_call.1} parent=79 // pred_fallthru
          _
      $region80: #{tpu_custom_call.1} parent=5 // pred_fallthru
        _
      %p604 = scmp.le.s32.totalorder 1, %s33
      %p605 = scmp.lt.s32.totalorder %s33, 3
      %p606 = pnand %p604, %p605
      %p607 = pneg %p606
      // Predicated region
      $region89: #{tpu_custom_call.1} parent=5 // pred_check
        _
      $region90: #{tpu_custom_call.1} parent=5 // pred_check_branch
        %609 = sbr.rel (%p606) target = $region92
      $region91: #{tpu_custom_call.1} parent=5 // pred_region
        %s610 = ssub.s32 %s33, 1
        %s611 = sand.u32 %s84, 1
        %s612 = scalar_lea.sflag [#allocation5], %s611
        %s613 = sand.u32 %s84, 1
        %s614 = scalar_lea.vmem [#allocation4], %s613
        // Predicated region
        $region93: #{tpu_custom_call.1} parent=91 // pred_check
          %p615 = pneg %p97
        $region94: #{tpu_custom_call.1} parent=91 // pred_check_branch
          %617 = sbr.rel (%p615) target = $region96
        $region95: #{tpu_custom_call.1} parent=91 // pred_region
          %618 = dma.done %s612, 16
        $region96: #{tpu_custom_call.1} parent=91 // pred_fallthru
          _
        // Predicated region
        $region97: #{tpu_custom_call.1} parent=91 // pred_check
          %p619 = pneg %p139
        $region98: #{tpu_custom_call.1} parent=91 // pred_check_branch
          %621 = sbr.rel (%p619) target = $region100
        $region99: #{tpu_custom_call.1} parent=91 // pred_region
          %622 = dma.done [#allocation8], 16
        $region100: #{tpu_custom_call.1} parent=91 // pred_fallthru
          _
        // Predicated region
        $region101: #{tpu_custom_call.1} parent=91 // pred_check
          %p623 = pneg %p181
        $region102: #{tpu_custom_call.1} parent=91 // pred_check_branch
          %625 = sbr.rel (%p623) target = $region104
        $region103: #{tpu_custom_call.1} parent=91 // pred_region
          %626 = dma.done [#allocation8], 16
        $region104: #{tpu_custom_call.1} parent=91 // pred_fallthru
          _
        // Predicated region
        $region105: #{tpu_custom_call.1} parent=91 // pred_check
          %p627 = pneg %p202
        $region106: #{tpu_custom_call.1} parent=91 // pred_check_branch
          %629 = sbr.rel (%p627) target = $region108
        $region107: #{tpu_custom_call.1} parent=91 // pred_region
          %630 = dma.done [#allocation11], 256
        $region108: #{tpu_custom_call.1} parent=91 // pred_fallthru
          _
        // Predicated region
        $region109: #{tpu_custom_call.1} parent=91 // pred_check
          %p631 = pneg %p223
        $region110: #{tpu_custom_call.1} parent=91 // pred_check_branch
          %633 = sbr.rel (%p631) target = $region112
        $region111: #{tpu_custom_call.1} parent=91 // pred_region
          %634 = dma.done [#allocation11], 16
        $region112: #{tpu_custom_call.1} parent=91 // pred_fallthru
          _
        // Predicated region
        $region113: #{tpu_custom_call.1} parent=91 // pred_check
          %p635 = pneg %p244
        $region114: #{tpu_custom_call.1} parent=91 // pred_check_branch
          %637 = sbr.rel (%p635) target = $region116
        $region115: #{tpu_custom_call.1} parent=91 // pred_region
          %638 = dma.done [#allocation14], 256
        $region116: #{tpu_custom_call.1} parent=91 // pred_fallthru
          _
        // Predicated region
        $region117: #{tpu_custom_call.1} parent=91 // pred_check
          %p639 = pneg %p265
        $region118: #{tpu_custom_call.1} parent=91 // pred_check_branch
          %641 = sbr.rel (%p639) target = $region120
        $region119: #{tpu_custom_call.1} parent=91 // pred_region
          %642 = dma.done [#allocation14], 16
        $region120: #{tpu_custom_call.1} parent=91 // pred_fallthru
          _
        %p643 = scmp.lt.s32.totalorder %s42, 1
        %s644 = scalar_select %p643, %s42, 1
        %s645 = smul.addr %s644, 8
        %s646 = scalar_lea.vmem %s0, %s645
        %p647 = pneg %p71
        %p648 = pneg %p68
        %s649 = sand.u32 %s84, 1
        %s650 = scalar_lea.sflag [#allocation5], %s649
        %s651 = sand.u32 %s84, 1
        %s652 = scalar_lea.vmem [#allocation4], %s651
        %p653 = pneg %p97
        %p654 = pneg %p94
        %p655 = pneg %p118
        %p656 = pneg %p115
        %p657 = pneg %p139
        %p658 = pneg %p136
        %p659 = pneg %p160
        %p660 = pneg %p157
        %p661 = pneg %p181
        %p662 = pneg %p178
        %p663 = pneg %p202
        %p664 = pneg %p199
        %p665 = pneg %p223
        %p666 = pneg %p220
        %p667 = pneg %p244
        %p668 = pneg %p241
        %p669 = pneg %p265
        %p670 = pneg %p262
        %p671 = pneg %p286
        %p672 = pneg %p283
        %p673 = pneg %p307
        %p674 = pneg %p304
        %p675 = pneg %p328
        %p676 = pneg %p325
        %p677 = pneg %p349
        %p678 = pneg %p346
        %p679 = pneg %p370
        %p680 = pneg %p367
        %p681 = pneg %p391
        %p682 = pneg %p388
        %p683 = pneg %p412
        %p684 = pneg %p409
        %p685 = pneg %p433
        %p686 = pneg %p430
        %p687 = pneg %p461
        %p688 = pneg %p458
        %s689 = sand.u32 %s448, 1
        %s690 = scalar_lea.sflag [#allocation6], %s689
        %s691 = sand.u32 %s448, 1
        %s692 = smul.addr %s691, 8
        %s693 = scalar_lea.vmem [#allocation16], %s692
        %p694 = scmp.lt.s32.totalorder %s42, 1
        %s695 = scalar_select %p694, %s42, 1
        %s696 = smul.addr %s695, 8
        %s697 = scalar_lea.vmem %s0, %s696
        %p699 = scmp.eq.s32.totalorder %s43, 0
        // Predicated region
        $region121: #{tpu_custom_call.1} parent=91 // pred_check
          %p700 = pneg %p699
        $region122: #{tpu_custom_call.1} parent=91 // pred_check_branch
          %702 = sbr.rel (%p700) target = $region124
        $region123: #{tpu_custom_call.1} parent=91 // pred_region
          %v703 = vld [vmem:[%s697] sm:$0xff]
          %v704 = vpack.c.bf16 %v703, %v703
          %v705 = vld [vmem:[%s4] sm:$0xf]
          %v706 = vld [vmem:[%s4 + $0x4] sm:$0xf]
          %v707 = vld [vmem:[%s4 + $0x8] sm:$0xf]
          %v708 = vld [vmem:[%s4 + $0xc] sm:$0xf]
          %v709 = vld [vmem:[#allocation9] sm:$0x1]
          %v711 = vlaneseq
          %v712 = vshrl.u32 %v711, 7
          %v713 = vsub.s32 0, %v712
          %v714 = vrot.slane %v709, %v713
          %v720 = vunpack.c.l.b16 %v705
          %v721 = vunpack.c.l.b16 %v706
          %v722 = vunpack.c.l.b16 %v707
          %v723 = vunpack.c.l.b16 %v708
          %v724 = vpack.c.b16 %v721, %v720
          %v725 = vpack.c.b16 %v723, %v722
          %vm728 = vcmask 261120
          %v730 = vsel %vm728, %v704, 0
          %732 = vmatprep.subr.bf16.mxu0 0
          %733 = vmatpush1.bf16.msra.mxu0 0
          %734 = vmatprep.subr.bf16.mxu0 0
          %735 = vmatpush1.bf16.msra.mxu0 0
          %736 = vmatprep.subr.bf16.mxu0 0
          %737 = vmatpush1.bf16.msra.mxu0 0
          %738 = vmatprep.subr.bf16.mxu0 0
          %739 = vmatpush1.bf16.msra.mxu0 0
          %740 = vmatprep.subr.bf16.mxu0 0
          %741 = vmatpush1.bf16.msra.mxu0 0
          %742 = vmatprep.subr.bf16.mxu0 0
          %743 = vmatpush1.bf16.msra.mxu0 0
          %744 = vmatprep.subr.bf16.mxu0 0
          %745 = vmatpush1.bf16.msra.mxu0 %v725
          %746 = vmatprep.subr.bf16.mxu0 0
          %747 = vmatpush1.bf16.msra.mxu0 %v724
          %748 = vmatprep.subr.bf16.mxu0 0
          %749 = vmatpush2.bf16.msra.mxu0 0
          %750 = vmatprep.subr.bf16.mxu0 0
          %751 = vmatpush2.bf16.msra.mxu0 0
          %752 = vmatprep.subr.bf16.mxu0 0
          %753 = vmatpush2.bf16.msra.mxu0 0
          %754 = vmatprep.subr.bf16.mxu0 0
          %755 = vmatpush2.bf16.msra.mxu0 0
          %756 = vmatprep.subr.bf16.mxu0 0
          %757 = vmatpush2.bf16.msra.mxu0 0
          %758 = vmatprep.subr.bf16.mxu0 0
          %759 = vmatpush2.bf16.msra.mxu0 0
          %760 = vmatprep.subr.bf16.mxu0 0
          %761 = vmatpush2.bf16.msra.mxu0 0
          %762 = vmatprep.subr.bf16.mxu0 0
          %763 = vmatpush2.bf16.msra.mxu0 0
          %764 = vmatprep.mubr.bf16.mxu0 0
          %765 = vmatmul.mubr.bf16.gmra.mxu0 %v730
          %v766 = vpop.f32.mrf.mxu0
          %v767 = vadd.f32 %v714, %v766
          %v768 = vpop.f32.mrf.mxu0
          %v769 = vpop.f32.mrf.mxu0
          %v770 = vpop.f32.mrf.mxu0
          %771 = vdwg.mxu0
          %v772 = vld [vmem:[#allocation10] sm:$0xf]
          %v773 = vld [vmem:[#allocation10 + $0x4] sm:$0xf]
          %v774 = vld [vmem:[#allocation10 + $0x8] sm:$0xf]
          %v775 = vld [vmem:[#allocation10 + $0xc] sm:$0xf]
          %v776 = vld [vmem:[#allocation12] sm:$0x1]
          %v778 = vlaneseq
          %v779 = vshrl.u32 %v778, 7
          %v780 = vsub.s32 0, %v779
          %v781 = vrot.slane %v776, %v780
          %v787 = vunpack.c.l.b16 %v772
          %v788 = vunpack.c.l.b16 %v773
          %v789 = vunpack.c.l.b16 %v774
          %v790 = vunpack.c.l.b16 %v775
          %v791 = vpack.c.b16 %v788, %v787
          %v792 = vpack.c.b16 %v790, %v789
          %795 = vmatprep.subr.bf16.mxu0 0
          %796 = vmatpush1.bf16.msra.mxu0 0
          %797 = vmatprep.subr.bf16.mxu0 0
          %798 = vmatpush1.bf16.msra.mxu0 0
          %799 = vmatprep.subr.bf16.mxu0 0
          %800 = vmatpush1.bf16.msra.mxu0 0
          %801 = vmatprep.subr.bf16.mxu0 0
          %802 = vmatpush1.bf16.msra.mxu0 0
          %803 = vmatprep.subr.bf16.mxu0 0
          %804 = vmatpush1.bf16.msra.mxu0 0
          %805 = vmatprep.subr.bf16.mxu0 0
          %806 = vmatpush1.bf16.msra.mxu0 0
          %807 = vmatprep.subr.bf16.mxu0 0
          %808 = vmatpush1.bf16.msra.mxu0 %v792
          %809 = vmatprep.subr.bf16.mxu0 0
          %810 = vmatpush1.bf16.msra.mxu0 %v791
          %811 = vmatprep.subr.bf16.mxu0 0
          %812 = vmatpush2.bf16.msra.mxu0 0
          %813 = vmatprep.subr.bf16.mxu0 0
          %814 = vmatpush2.bf16.msra.mxu0 0
          %815 = vmatprep.subr.bf16.mxu0 0
          %816 = vmatpush2.bf16.msra.mxu0 0
          %817 = vmatprep.subr.bf16.mxu0 0
          %818 = vmatpush2.bf16.msra.mxu0 0
          %819 = vmatprep.subr.bf16.mxu0 0
          %820 = vmatpush2.bf16.msra.mxu0 0
          %821 = vmatprep.subr.bf16.mxu0 0
          %822 = vmatpush2.bf16.msra.mxu0 0
          %823 = vmatprep.subr.bf16.mxu0 0
          %824 = vmatpush2.bf16.msra.mxu0 0
          %825 = vmatprep.subr.bf16.mxu0 0
          %826 = vmatpush2.bf16.msra.mxu0 0
          %827 = vmatprep.mubr.bf16.mxu0 0
          %828 = vmatmul.mubr.bf16.gmra.mxu0 %v730
          %v829 = vpop.f32.mrf.mxu0
          %v830 = vadd.f32 %v781, %v829
          %v831 = vpop.f32.mrf.mxu0
          %v832 = vpop.f32.mrf.mxu0
          %v833 = vpop.f32.mrf.mxu0
          %834 = vdwg.mxu0
          %836 = vrot.lane.b32.xlu0 %v767, 120
          %v837 = vpop.permute.xlu0 %836
          %839 = vrot.lane.b32.xlu0 %v767, 112
          %v840 = vpop.permute.xlu0 %839
          %842 = vrot.lane.b32.xlu0 %v767, 104
          %v843 = vpop.permute.xlu0 %842
          %v845 = vpack.c.bf16 %v767, %v767
          %v846 = vpack.c.bf16 %v837, %v837
          %v847 = vpack.c.bf16 %v840, %v840
          %v848 = vpack.c.bf16 %v843, %v843
          %vm849 = vcmask 60416
          %850 = vst.msk [vmem:[#allocation2] sm:$0xf] %vm849, %v845
          %851 = vst.msk [vmem:[#allocation2 + $0x4] sm:$0xf] %vm849, %v846
          %852 = vst.msk [vmem:[#allocation2 + $0x8] sm:$0xf] %vm849, %v847
          %853 = vst.msk [vmem:[#allocation2 + $0xc] sm:$0xf] %vm849, %v848
          %855 = vrot.lane.b32.xlu0 %v830, 120
          %v856 = vpop.permute.xlu0 %855
          %858 = vrot.lane.b32.xlu0 %v830, 112
          %v859 = vpop.permute.xlu0 %858
          %861 = vrot.lane.b32.xlu0 %v830, 104
          %v862 = vpop.permute.xlu0 %861
          %v864 = vpack.c.bf16 %v830, %v830
          %v865 = vpack.c.bf16 %v856, %v856
          %v866 = vpack.c.bf16 %v859, %v859
          %v867 = vpack.c.bf16 %v862, %v862
          %868 = vst.msk [vmem:[#allocation3] sm:$0xf] %vm849, %v864
          %869 = vst.msk [vmem:[#allocation3 + $0x4] sm:$0xf] %vm849, %v865
          %870 = vst.msk [vmem:[#allocation3 + $0x8] sm:$0xf] %vm849, %v866
          %871 = vst.msk [vmem:[#allocation3 + $0xc] sm:$0xf] %vm849, %v867
        $region124: #{tpu_custom_call.1} parent=91 // pred_fallthru
          _
        %s872 = smul.u32 %s43, 8
        %s873 = scalar_lea.vmem %s697, %s872
        %v874 = vld [vmem:[%s873] sm:$0xff]
        %v875 = vpack.c.bf16 %v874, %v874
        %v876 = vld [vmem:[%s2] sm:$0xf]
        %v877 = vld [vmem:[%s2 + $0x4] sm:$0xf]
        %v878 = vld [vmem:[%s2 + $0x8] sm:$0xf]
        %v879 = vld [vmem:[%s2 + $0xc] sm:$0xf]
        %v880 = vld [vmem:[#allocation7] sm:$0x1]
        %v882 = vlaneseq
        %v883 = vshrl.u32 %v882, 7
        %v884 = vsub.s32 0, %v883
        %v885 = vrot.slane %v880, %v884
        %v891 = vunpack.c.l.b16 %v876
        %v892 = vunpack.c.l.b16 %v877
        %v893 = vunpack.c.l.b16 %v878
        %v894 = vunpack.c.l.b16 %v879
        %v895 = vpack.c.b16 %v892, %v891
        %v896 = vpack.c.b16 %v894, %v893
        %vm899 = vcmask 261120
        %v901 = vsel %vm899, %v875, 0
        %903 = vmatprep.subr.bf16.mxu0 0
        %904 = vmatpush1.bf16.msra.mxu0 0
        %905 = vmatprep.subr.bf16.mxu0 0
        %906 = vmatpush1.bf16.msra.mxu0 0
        %907 = vmatprep.subr.bf16.mxu0 0
        %908 = vmatpush1.bf16.msra.mxu0 0
        %909 = vmatprep.subr.bf16.mxu0 0
        %910 = vmatpush1.bf16.msra.mxu0 0
        %911 = vmatprep.subr.bf16.mxu0 0
        %912 = vmatpush1.bf16.msra.mxu0 0
        %913 = vmatprep.subr.bf16.mxu0 0
        %914 = vmatpush1.bf16.msra.mxu0 0
        %915 = vmatprep.subr.bf16.mxu0 0
        %916 = vmatpush1.bf16.msra.mxu0 %v896
        %917 = vmatprep.subr.bf16.mxu0 0
        %918 = vmatpush1.bf16.msra.mxu0 %v895
        %919 = vmatprep.subr.bf16.mxu0 0
        %920 = vmatpush2.bf16.msra.mxu0 0
        %921 = vmatprep.subr.bf16.mxu0 0
        %922 = vmatpush2.bf16.msra.mxu0 0
        %923 = vmatprep.subr.bf16.mxu0 0
        %924 = vmatpush2.bf16.msra.mxu0 0
        %925 = vmatprep.subr.bf16.mxu0 0
        %926 = vmatpush2.bf16.msra.mxu0 0
        %927 = vmatprep.subr.bf16.mxu0 0
        %928 = vmatpush2.bf16.msra.mxu0 0
        %929 = vmatprep.subr.bf16.mxu0 0
        %930 = vmatpush2.bf16.msra.mxu0 0
        %931 = vmatprep.subr.bf16.mxu0 0
        %932 = vmatpush2.bf16.msra.mxu0 0
        %933 = vmatprep.subr.bf16.mxu0 0
        %934 = vmatpush2.bf16.msra.mxu0 0
        %935 = vmatprep.mubr.bf16.mxu0 0
        %936 = vmatmul.mubr.bf16.gmra.mxu0 %v901
        %v937 = vpop.f32.mrf.mxu0
        %v938 = vadd.f32 %v885, %v937
        %v939 = vpop.f32.mrf.mxu0
        %v940 = vpop.f32.mrf.mxu0
        %v941 = vpop.f32.mrf.mxu0
        %942 = vdwg.mxu0
        %v943 = vmul.f32 %v938, 0.35355338
        %945 = vrot.lane.b32.xlu0 %v943, 120
        %v946 = vpop.permute.xlu0 %945
        %948 = vrot.lane.b32.xlu0 %v943, 112
        %v949 = vpop.permute.xlu0 %948
        %951 = vrot.lane.b32.xlu0 %v943, 104
        %v952 = vpop.permute.xlu0 %951
        %v954 = vpack.c.bf16 %v943, %v943
        %v955 = vpack.c.bf16 %v946, %v946
        %v956 = vpack.c.bf16 %v949, %v949
        %v957 = vpack.c.bf16 %v952, %v952
        %v958 = vld [vmem:[#allocation2] sm:$0xf]
        %v959 = vld [vmem:[#allocation2 + $0x4] sm:$0xf]
        %v960 = vld [vmem:[#allocation2 + $0x8] sm:$0xf]
        %v961 = vld [vmem:[#allocation2 + $0xc] sm:$0xf]
        %v962 = vld [vmem:[%s614] sm:$0x1]
        %v963 = vsub.f32 1.0, %v962
        %v964 = vmul.f32 %v963, -10000.0
        %v966 = vlaneseq
        %v967 = vshrl.u32 %v966, 7
        %v968 = vsub.s32 0, %v967
        %v969 = vrot.slane %v964, %v968
        %vm971 = vcmask 64512
        %v973 = vsel %vm971, %v954, 0
        %v976 = vsel %vm971, %v958, 0
        %978 = vmatprep.subr.bf16.mxu0 0
        %979 = vmatpush1.bf16.xpose.msra.mxu0 0
        %980 = vmatprep.subr.bf16.mxu0 0
        %981 = vmatpush1.bf16.xpose.msra.mxu0 0
        %982 = vmatprep.subr.bf16.mxu0 0
        %983 = vmatpush1.bf16.xpose.msra.mxu0 0
        %984 = vmatprep.subr.bf16.mxu0 0
        %985 = vmatpush1.bf16.xpose.msra.mxu0 0
        %986 = vmatprep.subr.bf16.mxu0 0
        %987 = vmatpush1.bf16.xpose.msra.mxu0 0
        %988 = vmatprep.subr.bf16.mxu0 0
        %989 = vmatpush1.bf16.xpose.msra.mxu0 0
        %990 = vmatprep.subr.bf16.mxu0 0
        %991 = vmatpush1.bf16.xpose.msra.mxu0 0
        %992 = vmatprep.subr.bf16.mxu0 0
        %993 = vmatpush1.bf16.xpose.msra.mxu0 %v976
        %994 = vmatprep.subr.bf16.mxu0 0
        %995 = vmatpush2.bf16.xpose.msra.mxu0 0
        %996 = vmatprep.subr.bf16.mxu0 0
        %997 = vmatpush2.bf16.xpose.msra.mxu0 0
        %998 = vmatprep.subr.bf16.mxu0 0
        %999 = vmatpush2.bf16.xpose.msra.mxu0 0
        %1000 = vmatprep.subr.bf16.mxu0 0
        %1001 = vmatpush2.bf16.xpose.msra.mxu0 0
        %1002 = vmatprep.subr.bf16.mxu0 0
        %1003 = vmatpush2.bf16.xpose.msra.mxu0 0
        %1004 = vmatprep.subr.bf16.mxu0 0
        %1005 = vmatpush2.bf16.xpose.msra.mxu0 0
        %1006 = vmatprep.subr.bf16.mxu0 0
        %1007 = vmatpush2.bf16.xpose.msra.mxu0 0
        %1008 = vmatprep.subr.bf16.mxu0 0
        %1009 = vmatpush2.bf16.xpose.msra.mxu0 0
        %1010 = vmatprep.mubr.bf16.mxu0 0
        %1011 = vmatmul.mubr.bf16.gmra.mxu0 %v973
        %v1012 = vpop.f32.mrf.mxu0
        %v1013 = vadd.f32 %v969, %v1012
        %v1014 = vpop.f32.mrf.mxu0
        %v1015 = vpop.f32.mrf.mxu0
        %v1016 = vpop.f32.mrf.mxu0
        %1017 = vdwg.mxu0
        %v1019 = vsel %vm971, %v955, 0
        %v1022 = vsel %vm971, %v959, 0
        %1024 = vmatprep.subr.bf16.mxu0 0
        %1025 = vmatpush1.bf16.xpose.msra.mxu0 0
        %1026 = vmatprep.subr.bf16.mxu0 0
        %1027 = vmatpush1.bf16.xpose.msra.mxu0 0
        %1028 = vmatprep.subr.bf16.mxu0 0
        %1029 = vmatpush1.bf16.xpose.msra.mxu0 0
        %1030 = vmatprep.subr.bf16.mxu0 0
        %1031 = vmatpush1.bf16.xpose.msra.mxu0 0
        %1032 = vmatprep.subr.bf16.mxu0 0
        %1033 = vmatpush1.bf16.xpose.msra.mxu0 0
        %1034 = vmatprep.subr.bf16.mxu0 0
        %1035 = vmatpush1.bf16.xpose.msra.mxu0 0
        %1036 = vmatprep.subr.bf16.mxu0 0
        %1037 = vmatpush1.bf16.xpose.msra.mxu0 0
        %1038 = vmatprep.subr.bf16.mxu0 0
        %1039 = vmatpush1.bf16.xpose.msra.mxu0 %v1022
        %1040 = vmatprep.subr.bf16.mxu0 0
        %1041 = vmatpush2.bf16.xpose.msra.mxu0 0
        %1042 = vmatprep.subr.bf16.mxu0 0
        %1043 = vmatpush2.bf16.xpose.msra.mxu0 0
        %1044 = vmatprep.subr.bf16.mxu0 0
        %1045 = vmatpush2.bf16.xpose.msra.mxu0 0
        %1046 = vmatprep.subr.bf16.mxu0 0
        %1047 = vmatpush2.bf16.xpose.msra.mxu0 0
        %1048 = vmatprep.subr.bf16.mxu0 0
        %1049 = vmatpush2.bf16.xpose.msra.mxu0 0
        %1050 = vmatprep.subr.bf16.mxu0 0
        %1051 = vmatpush2.bf16.xpose.msra.mxu0 0
        %1052 = vmatprep.subr.bf16.mxu0 0
        %1053 = vmatpush2.bf16.xpose.msra.mxu0 0
        %1054 = vmatprep.subr.bf16.mxu0 0
        %1055 = vmatpush2.bf16.xpose.msra.mxu0 0
        %1056 = vmatprep.mubr.bf16.mxu0 0
        %1057 = vmatmul.mubr.bf16.gmra.mxu0 %v1019
        %v1058 = vpop.f32.mrf.mxu0
        %v1059 = vadd.f32 %v969, %v1058
        %v1060 = vpop.f32.mrf.mxu0
        %v1061 = vpop.f32.mrf.mxu0
        %v1062 = vpop.f32.mrf.mxu0
        %1063 = vdwg.mxu0
        %v1065 = vsel %vm971, %v956, 0
        %v1068 = vsel %vm971, %v960, 0
        %1070 = vmatprep.subr.bf16.mxu0 0
        %1071 = vmatpush1.bf16.xpose.msra.mxu0 0
        %1072 = vmatprep.subr.bf16.mxu0 0
        %1073 = vmatpush1.bf16.xpose.msra.mxu0 0
        %1074 = vmatprep.subr.bf16.mxu0 0
        %1075 = vmatpush1.bf16.xpose.msra.mxu0 0
        %1076 = vmatprep.subr.bf16.mxu0 0
        %1077 = vmatpush1.bf16.xpose.msra.mxu0 0
        %1078 = vmatprep.subr.bf16.mxu0 0
        %1079 = vmatpush1.bf16.xpose.msra.mxu0 0
        %1080 = vmatprep.subr.bf16.mxu0 0
        %1081 = vmatpush1.bf16.xpose.msra.mxu0 0
        %1082 = vmatprep.subr.bf16.mxu0 0
        %1083 = vmatpush1.bf16.xpose.msra.mxu0 0
        %1084 = vmatprep.subr.bf16.mxu0 0
        %1085 = vmatpush1.bf16.xpose.msra.mxu0 %v1068
        %1086 = vmatprep.subr.bf16.mxu0 0
        %1087 = vmatpush2.bf16.xpose.msra.mxu0 0
        %1088 = vmatprep.subr.bf16.mxu0 0
        %1089 = vmatpush2.bf16.xpose.msra.mxu0 0
        %1090 = vmatprep.subr.bf16.mxu0 0
        %1091 = vmatpush2.bf16.xpose.msra.mxu0 0
        %1092 = vmatprep.subr.bf16.mxu0 0
        %1093 = vmatpush2.bf16.xpose.msra.mxu0 0
        %1094 = vmatprep.subr.bf16.mxu0 0
        %1095 = vmatpush2.bf16.xpose.msra.mxu0 0
        %1096 = vmatprep.subr.bf16.mxu0 0
        %1097 = vmatpush2.bf16.xpose.msra.mxu0 0
        %1098 = vmatprep.subr.bf16.mxu0 0
        %1099 = vmatpush2.bf16.xpose.msra.mxu0 0
        %1100 = vmatprep.subr.bf16.mxu0 0
        %1101 = vmatpush2.bf16.xpose.msra.mxu0 0
        %1102 = vmatprep.mubr.bf16.mxu0 0
        %1103 = vmatmul.mubr.bf16.gmra.mxu0 %v1065
        %v1104 = vpop.f32.mrf.mxu0
        %v1105 = vadd.f32 %v969, %v1104
        %v1106 = vpop.f32.mrf.mxu0
        %v1107 = vpop.f32.mrf.mxu0
        %v1108 = vpop.f32.mrf.mxu0
        %1109 = vdwg.mxu0
        %v1111 = vsel %vm971, %v957, 0
        %v1114 = vsel %vm971, %v961, 0
        %1116 = vmatprep.subr.bf16.mxu0 0
        %1117 = vmatpush1.bf16.xpose.msra.mxu0 0
        %1118 = vmatprep.subr.bf16.mxu0 0
        %1119 = vmatpush1.bf16.xpose.msra.mxu0 0
        %1120 = vmatprep.subr.bf16.mxu0 0
        %1121 = vmatpush1.bf16.xpose.msra.mxu0 0
        %1122 = vmatprep.subr.bf16.mxu0 0
        %1123 = vmatpush1.bf16.xpose.msra.mxu0 0
        %1124 = vmatprep.subr.bf16.mxu0 0
        %1125 = vmatpush1.bf16.xpose.msra.mxu0 0
        %1126 = vmatprep.subr.bf16.mxu0 0
        %1127 = vmatpush1.bf16.xpose.msra.mxu0 0
        %1128 = vmatprep.subr.bf16.mxu0 0
        %1129 = vmatpush1.bf16.xpose.msra.mxu0 0
        %1130 = vmatprep.subr.bf16.mxu0 0
        %1131 = vmatpush1.bf16.xpose.msra.mxu0 %v1114
        %1132 = vmatprep.subr.bf16.mxu0 0
        %1133 = vmatpush2.bf16.xpose.msra.mxu0 0
        %1134 = vmatprep.subr.bf16.mxu0 0
        %1135 = vmatpush2.bf16.xpose.msra.mxu0 0
        %1136 = vmatprep.subr.bf16.mxu0 0
        %1137 = vmatpush2.bf16.xpose.msra.mxu0 0
        %1138 = vmatprep.subr.bf16.mxu0 0
        %1139 = vmatpush2.bf16.xpose.msra.mxu0 0
        %1140 = vmatprep.subr.bf16.mxu0 0
        %1141 = vmatpush2.bf16.xpose.msra.mxu0 0
        %1142 = vmatprep.subr.bf16.mxu0 0
        %1143 = vmatpush2.bf16.xpose.msra.mxu0 0
        %1144 = vmatprep.subr.bf16.mxu0 0
        %1145 = vmatpush2.bf16.xpose.msra.mxu0 0
        %1146 = vmatprep.subr.bf16.mxu0 0
        %1147 = vmatpush2.bf16.xpose.msra.mxu0 0
        %1148 = vmatprep.mubr.bf16.mxu0 0
        %1149 = vmatmul.mubr.bf16.gmra.mxu0 %v1111
        %v1150 = vpop.f32.mrf.mxu0
        %v1151 = vadd.f32 %v969, %v1150
        %v1152 = vpop.f32.mrf.mxu0
        %v1153 = vpop.f32.mrf.mxu0
        %v1154 = vpop.f32.mrf.mxu0
        %1155 = vdwg.mxu0
        %v1156 = vsel %vm971, %v1013, -inf
        %1157 = vmax.xlane.f32.xlu0 %v1156
        %v1158 = vpop.xlane.xlu0 %1157
        %v1159 = vsel %vm971, %v1059, -inf
        %1160 = vmax.xlane.f32.xlu0 %v1159
        %v1161 = vpop.xlane.xlu0 %1160
        %v1162 = vsel %vm971, %v1105, -inf
        %1163 = vmax.xlane.f32.xlu0 %v1162
        %v1164 = vpop.xlane.xlu0 %1163
        %v1165 = vsel %vm971, %v1151, -inf
        %1166 = vmax.xlane.f32.xlu0 %v1165
        %v1167 = vpop.xlane.xlu0 %1166
        %v1168 = vsub.f32 %v1013, %v1158
        %v1169 = vsub.f32 %v1059, %v1161
        %v1170 = vsub.f32 %v1105, %v1164
        %v1171 = vsub.f32 %v1151, %v1167
        %v1172 = vmul.f32 %v1168, 1.442695
        %v1173 = vpow.pop %v1172
        %v1174 = vmul.f32 %v1169, 1.442695
        %v1175 = vpow.pop %v1174
        %v1176 = vmul.f32 %v1170, 1.442695
        %v1177 = vpow.pop %v1176
        %v1178 = vmul.f32 %v1171, 1.442695
        %v1179 = vpow.pop %v1178
        %v1180 = vsel %vm971, %v1173, 0.0
        %1181 = vadd.xlane.f32.xlu0 %v1180
        %v1182 = vpop.xlane.xlu0 %1181
        %v1183 = vsel %vm971, %v1175, 0.0
        %1184 = vadd.xlane.f32.xlu0 %v1183
        %v1185 = vpop.xlane.xlu0 %1184
        %v1186 = vsel %vm971, %v1177, 0.0
        %1187 = vadd.xlane.f32.xlu0 %v1186
        %v1188 = vpop.xlane.xlu0 %1187
        %v1189 = vsel %vm971, %v1179, 0.0
        %1190 = vadd.xlane.f32.xlu0 %v1189
        %v1191 = vpop.xlane.xlu0 %1190
        %v1192 = vrcp.pop %v1182
        %v1193 = vrcp.pop %v1185
        %v1194 = vrcp.pop %v1188
        %v1195 = vrcp.pop %v1191
        %v1196 = vmul.f32 %v1173, %v1192
        %v1197 = vmul.f32 %v1175, %v1193
        %v1198 = vmul.f32 %v1177, %v1194
        %v1199 = vmul.f32 %v1179, %v1195
        %v1200 = vpack.c.bf16 %v1196, %v1196
        %v1201 = vpack.c.bf16 %v1197, %v1197
        %v1202 = vpack.c.bf16 %v1198, %v1198
        %v1203 = vpack.c.bf16 %v1199, %v1199
        %v1204 = vld [vmem:[#allocation3] sm:$0xf]
        %v1205 = vld [vmem:[#allocation3 + $0x4] sm:$0xf]
        %v1206 = vld [vmem:[#allocation3 + $0x8] sm:$0xf]
        %v1207 = vld [vmem:[#allocation3 + $0xc] sm:$0xf]
        %v1209 = vsel %vm971, %v1200, 0
        %vm1211 = vcmask 1043456
        %v1213 = vsel %vm1211, %v1204, 0
        %1215 = vmatprep.subr.bf16.mxu0 0
        %1216 = vmatpush1.bf16.msra.mxu0 0
        %1217 = vmatprep.subr.bf16.mxu0 0
        %1218 = vmatpush1.bf16.msra.mxu0 0
        %1219 = vmatprep.subr.bf16.mxu0 0
        %1220 = vmatpush1.bf16.msra.mxu0 0
        %1221 = vmatprep.subr.bf16.mxu0 0
        %1222 = vmatpush1.bf16.msra.mxu0 0
        %1223 = vmatprep.subr.bf16.mxu0 0
        %1224 = vmatpush1.bf16.msra.mxu0 0
        %1225 = vmatprep.subr.bf16.mxu0 0
        %1226 = vmatpush1.bf16.msra.mxu0 0
        %1227 = vmatprep.subr.bf16.mxu0 0
        %1228 = vmatpush1.bf16.msra.mxu0 0
        %1229 = vmatprep.subr.bf16.mxu0 0
        %1230 = vmatpush1.bf16.msra.mxu0 %v1213
        %1231 = vmatprep.subr.bf16.mxu0 0
        %1232 = vmatpush2.bf16.msra.mxu0 0
        %1233 = vmatprep.subr.bf16.mxu0 0
        %1234 = vmatpush2.bf16.msra.mxu0 0
        %1235 = vmatprep.subr.bf16.mxu0 0
        %1236 = vmatpush2.bf16.msra.mxu0 0
        %1237 = vmatprep.subr.bf16.mxu0 0
        %1238 = vmatpush2.bf16.msra.mxu0 0
        %1239 = vmatprep.subr.bf16.mxu0 0
        %1240 = vmatpush2.bf16.msra.mxu0 0
        %1241 = vmatprep.subr.bf16.mxu0 0
        %1242 = vmatpush2.bf16.msra.mxu0 0
        %1243 = vmatprep.subr.bf16.mxu0 0
        %1244 = vmatpush2.bf16.msra.mxu0 0
        %1245 = vmatprep.subr.bf16.mxu0 0
        %1246 = vmatpush2.bf16.msra.mxu0 0
        %1247 = vmatprep.mubr.bf16.mxu0 0
        %1248 = vmatmul.mubr.bf16.gmra.mxu0 %v1209
        %v1249 = vpop.f32.mrf.mxu0
        %v1250 = vadd.f32 0.0, %v1249
        %v1251 = vpop.f32.mrf.mxu0
        %v1252 = vpop.f32.mrf.mxu0
        %v1253 = vpop.f32.mrf.mxu0
        %1254 = vdwg.mxu0
        %v1256 = vsel %vm971, %v1201, 0
        %v1259 = vsel %vm1211, %v1205, 0
        %1261 = vmatprep.subr.bf16.mxu0 0
        %1262 = vmatpush1.bf16.msra.mxu0 0
        %1263 = vmatprep.subr.bf16.mxu0 0
        %1264 = vmatpush1.bf16.msra.mxu0 0
        %1265 = vmatprep.subr.bf16.mxu0 0
        %1266 = vmatpush1.bf16.msra.mxu0 0
        %1267 = vmatprep.subr.bf16.mxu0 0
        %1268 = vmatpush1.bf16.msra.mxu0 0
        %1269 = vmatprep.subr.bf16.mxu0 0
        %1270 = vmatpush1.bf16.msra.mxu0 0
        %1271 = vmatprep.subr.bf16.mxu0 0
        %1272 = vmatpush1.bf16.msra.mxu0 0
        %1273 = vmatprep.subr.bf16.mxu0 0
        %1274 = vmatpush1.bf16.msra.mxu0 0
        %1275 = vmatprep.subr.bf16.mxu0 0
        %1276 = vmatpush1.bf16.msra.mxu0 %v1259
        %1277 = vmatprep.subr.bf16.mxu0 0
        %1278 = vmatpush2.bf16.msra.mxu0 0
        %1279 = vmatprep.subr.bf16.mxu0 0
        %1280 = vmatpush2.bf16.msra.mxu0 0
        %1281 = vmatprep.subr.bf16.mxu0 0
        %1282 = vmatpush2.bf16.msra.mxu0 0
        %1283 = vmatprep.subr.bf16.mxu0 0
        %1284 = vmatpush2.bf16.msra.mxu0 0
        %1285 = vmatprep.subr.bf16.mxu0 0
        %1286 = vmatpush2.bf16.msra.mxu0 0
        %1287 = vmatprep.subr.bf16.mxu0 0
        %1288 = vmatpush2.bf16.msra.mxu0 0
        %1289 = vmatprep.subr.bf16.mxu0 0
        %1290 = vmatpush2.bf16.msra.mxu0 0
        %1291 = vmatprep.subr.bf16.mxu0 0
        %1292 = vmatpush2.bf16.msra.mxu0 0
        %1293 = vmatprep.mubr.bf16.mxu0 0
        %1294 = vmatmul.mubr.bf16.gmra.mxu0 %v1256
        %v1295 = vpop.f32.mrf.mxu0
        %v1296 = vadd.f32 0.0, %v1295
        %v1297 = vpop.f32.mrf.mxu0
        %v1298 = vpop.f32.mrf.mxu0
        %v1299 = vpop.f32.mrf.mxu0
        %1300 = vdwg.mxu0
        %v1302 = vsel %vm971, %v1202, 0
        %v1305 = vsel %vm1211, %v1206, 0
        %1307 = vmatprep.subr.bf16.mxu0 0
        %1308 = vmatpush1.bf16.msra.mxu0 0
        %1309 = vmatprep.subr.bf16.mxu0 0
        %1310 = vmatpush1.bf16.msra.mxu0 0
        %1311 = vmatprep.subr.bf16.mxu0 0
        %1312 = vmatpush1.bf16.msra.mxu0 0
        %1313 = vmatprep.subr.bf16.mxu0 0
        %1314 = vmatpush1.bf16.msra.mxu0 0
        %1315 = vmatprep.subr.bf16.mxu0 0
        %1316 = vmatpush1.bf16.msra.mxu0 0
        %1317 = vmatprep.subr.bf16.mxu0 0
        %1318 = vmatpush1.bf16.msra.mxu0 0
        %1319 = vmatprep.subr.bf16.mxu0 0
        %1320 = vmatpush1.bf16.msra.mxu0 0
        %1321 = vmatprep.subr.bf16.mxu0 0
        %1322 = vmatpush1.bf16.msra.mxu0 %v1305
        %1323 = vmatprep.subr.bf16.mxu0 0
        %1324 = vmatpush2.bf16.msra.mxu0 0
        %1325 = vmatprep.subr.bf16.mxu0 0
        %1326 = vmatpush2.bf16.msra.mxu0 0
        %1327 = vmatprep.subr.bf16.mxu0 0
        %1328 = vmatpush2.bf16.msra.mxu0 0
        %1329 = vmatprep.subr.bf16.mxu0 0
        %1330 = vmatpush2.bf16.msra.mxu0 0
        %1331 = vmatprep.subr.bf16.mxu0 0
        %1332 = vmatpush2.bf16.msra.mxu0 0
        %1333 = vmatprep.subr.bf16.mxu0 0
        %1334 = vmatpush2.bf16.msra.mxu0 0
        %1335 = vmatprep.subr.bf16.mxu0 0
        %1336 = vmatpush2.bf16.msra.mxu0 0
        %1337 = vmatprep.subr.bf16.mxu0 0
        %1338 = vmatpush2.bf16.msra.mxu0 0
        %1339 = vmatprep.mubr.bf16.mxu0 0
        %1340 = vmatmul.mubr.bf16.gmra.mxu0 %v1302
        %v1341 = vpop.f32.mrf.mxu0
        %v1342 = vadd.f32 0.0, %v1341
        %v1343 = vpop.f32.mrf.mxu0
        %v1344 = vpop.f32.mrf.mxu0
        %v1345 = vpop.f32.mrf.mxu0
        %1346 = vdwg.mxu0
        %v1348 = vsel %vm971, %v1203, 0
        %v1351 = vsel %vm1211, %v1207, 0
        %1353 = vmatprep.subr.bf16.mxu0 0
        %1354 = vmatpush1.bf16.msra.mxu0 0
        %1355 = vmatprep.subr.bf16.mxu0 0
        %1356 = vmatpush1.bf16.msra.mxu0 0
        %1357 = vmatprep.subr.bf16.mxu0 0
        %1358 = vmatpush1.bf16.msra.mxu0 0
        %1359 = vmatprep.subr.bf16.mxu0 0
        %1360 = vmatpush1.bf16.msra.mxu0 0
        %1361 = vmatprep.subr.bf16.mxu0 0
        %1362 = vmatpush1.bf16.msra.mxu0 0
        %1363 = vmatprep.subr.bf16.mxu0 0
        %1364 = vmatpush1.bf16.msra.mxu0 0
        %1365 = vmatprep.subr.bf16.mxu0 0
        %1366 = vmatpush1.bf16.msra.mxu0 0
        %1367 = vmatprep.subr.bf16.mxu0 0
        %1368 = vmatpush1.bf16.msra.mxu0 %v1351
        %1369 = vmatprep.subr.bf16.mxu0 0
        %1370 = vmatpush2.bf16.msra.mxu0 0
        %1371 = vmatprep.subr.bf16.mxu0 0
        %1372 = vmatpush2.bf16.msra.mxu0 0
        %1373 = vmatprep.subr.bf16.mxu0 0
        %1374 = vmatpush2.bf16.msra.mxu0 0
        %1375 = vmatprep.subr.bf16.mxu0 0
        %1376 = vmatpush2.bf16.msra.mxu0 0
        %1377 = vmatprep.subr.bf16.mxu0 0
        %1378 = vmatpush2.bf16.msra.mxu0 0
        %1379 = vmatprep.subr.bf16.mxu0 0
        %1380 = vmatpush2.bf16.msra.mxu0 0
        %1381 = vmatprep.subr.bf16.mxu0 0
        %1382 = vmatpush2.bf16.msra.mxu0 0
        %1383 = vmatprep.subr.bf16.mxu0 0
        %1384 = vmatpush2.bf16.msra.mxu0 0
        %1385 = vmatprep.mubr.bf16.mxu0 0
        %1386 = vmatmul.mubr.bf16.gmra.mxu0 %v1348
        %v1387 = vpop.f32.mrf.mxu0
        %v1388 = vadd.f32 0.0, %v1387
        %v1389 = vpop.f32.mrf.mxu0
        %v1390 = vpop.f32.mrf.mxu0
        %v1391 = vpop.f32.mrf.mxu0
        %1392 = vdwg.mxu0
        %1394 = vrot.lane.b32.xlu0 %v1296, 8
        %v1395 = vpop.permute.xlu0 %1394
        %1398 = vrot.lane.b32.xlu0 %v1342, 16
        %v1399 = vpop.permute.xlu0 %1398
        %1402 = vrot.lane.b32.xlu0 %v1388, 24
        %v1403 = vpop.permute.xlu0 %1402
        %v1405 = vsel %vm971, %v1250, %v1395
        %vm1406 = vcmask 130048
        %v1407 = vsel %vm1406, %v1405, %v1399
        %vm1408 = vcmask 195584
        %v1409 = vsel %vm1408, %v1407, %v1403
        %v1410 = vpack.c.bf16 %v1409, %v1409
        %v1411 = vld [vmem:[#allocation13] sm:$0xf]
        %v1412 = vld [vmem:[#allocation13 + $0x4] sm:$0xf]
        %v1413 = vld [vmem:[#allocation13 + $0x8] sm:$0xf]
        %v1414 = vld [vmem:[#allocation13 + $0xc] sm:$0xf]
        %v1415 = vld [vmem:[#allocation15] sm:$0x1]
        %v1417 = vlaneseq
        %v1418 = vshrl.u32 %v1417, 7
        %v1419 = vsub.s32 0, %v1418
        %v1420 = vrot.slane %v1415, %v1419
        %v1426 = vunpack.c.l.b16 %v1411
        %v1427 = vunpack.c.l.b16 %v1412
        %v1428 = vunpack.c.l.b16 %v1413
        %v1429 = vunpack.c.l.b16 %v1414
        %v1430 = vpack.c.b16 %v1427, %v1426
        %v1431 = vpack.c.b16 %v1429, %v1428
        %v1435 = vsel %vm899, %v1410, 0
        %1437 = vmatprep.subr.bf16.mxu0 0
        %1438 = vmatpush1.bf16.msra.mxu0 0
        %1439 = vmatprep.subr.bf16.mxu0 0
        %1440 = vmatpush1.bf16.msra.mxu0 0
        %1441 = vmatprep.subr.bf16.mxu0 0
        %1442 = vmatpush1.bf16.msra.mxu0 0
        %1443 = vmatprep.subr.bf16.mxu0 0
        %1444 = vmatpush1.bf16.msra.mxu0 0
        %1445 = vmatprep.subr.bf16.mxu0 0
        %1446 = vmatpush1.bf16.msra.mxu0 0
        %1447 = vmatprep.subr.bf16.mxu0 0
        %1448 = vmatpush1.bf16.msra.mxu0 0
        %1449 = vmatprep.subr.bf16.mxu0 0
        %1450 = vmatpush1.bf16.msra.mxu0 %v1431
        %1451 = vmatprep.subr.bf16.mxu0 0
        %1452 = vmatpush1.bf16.msra.mxu0 %v1430
        %1453 = vmatprep.subr.bf16.mxu0 0
        %1454 = vmatpush2.bf16.msra.mxu0 0
        %1455 = vmatprep.subr.bf16.mxu0 0
        %1456 = vmatpush2.bf16.msra.mxu0 0
        %1457 = vmatprep.subr.bf16.mxu0 0
        %1458 = vmatpush2.bf16.msra.mxu0 0
        %1459 = vmatprep.subr.bf16.mxu0 0
        %1460 = vmatpush2.bf16.msra.mxu0 0
        %1461 = vmatprep.subr.bf16.mxu0 0
        %1462 = vmatpush2.bf16.msra.mxu0 0
        %1463 = vmatprep.subr.bf16.mxu0 0
        %1464 = vmatpush2.bf16.msra.mxu0 0
        %1465 = vmatprep.subr.bf16.mxu0 0
        %1466 = vmatpush2.bf16.msra.mxu0 0
        %1467 = vmatprep.subr.bf16.mxu0 0
        %1468 = vmatpush2.bf16.msra.mxu0 0
        %1469 = vmatprep.mubr.bf16.mxu0 0
        %1470 = vmatmul.mubr.bf16.gmra.mxu0 %v1435
        %v1471 = vpop.f32.mrf.mxu0
        %v1472 = vadd.f32 %v1420, %v1471
        %v1473 = vpop.f32.mrf.mxu0
        %v1474 = vpop.f32.mrf.mxu0
        %v1475 = vpop.f32.mrf.mxu0
        %1476 = vdwg.mxu0
        %v1477 = vadd.f32 %v1472, %v874
        %v1478 = vld [vmem:[%s10] sm:$0x1]
        %v1479 = vld [vmem:[%s11] sm:$0x1]
        %v1480 = vsel %vm899, %v1477, 0.0
        %1481 = vadd.xlane.f32.xlu0 %v1480
        %v1482 = vpop.xlane.xlu0 %1481
        %v1483 = vrcp.pop 32.0
        %v1484 = vmul.f32 %v1482, %v1483
        %v1485 = vsub.f32 %v1477, %v1484
        %v1486 = vmul.f32 %v1485, %v1485
        %v1487 = vsel %vm899, %v1486, 0.0
        %1488 = vadd.xlane.f32.xlu0 %v1487
        %v1489 = vpop.xlane.xlu0 %1488
        %v1490 = vmul.f32 %v1489, %v1483
        %v1491 = vadd.f32 %v1490, 1e-12
        %v1492 = vrsqrt.pop %v1491
        %v1493 = vmul.f32 %v1485, %v1492
        %v1495 = vlaneseq
        %v1496 = vshrl.u32 %v1495, 7
        %v1497 = vsub.s32 0, %v1496
        %v1498 = vrot.slane %v1478, %v1497
        %v1500 = vmul.f32 %v1493, %v1498
        %v1502 = vlaneseq
        %v1503 = vshrl.u32 %v1502, 7
        %v1504 = vsub.s32 0, %v1503
        %v1505 = vrot.slane %v1479, %v1504
        %v1507 = vadd.f32 %v1500, %v1505
        %v1508 = vpack.c.bf16 %v1507, %v1507
        %v1509 = vld [vmem:[%s12] sm:$0xf]
        %v1510 = vld [vmem:[%s12 + $0x4] sm:$0xf]
        %v1511 = vld [vmem:[%s12 + $0x8] sm:$0xf]
        %v1512 = vld [vmem:[%s12 + $0xc] sm:$0xf]
        %v1513 = vld [vmem:[%s13] sm:$0x1]
        %v1515 = vlaneseq
        %v1516 = vshrl.u32 %v1515, 7
        %v1517 = vsub.s32 0, %v1516
        %v1518 = vrot.slane %v1513, %v1517
        %v1524 = vunpack.c.l.b16 %v1509
        %v1525 = vunpack.c.l.b16 %v1510
        %v1526 = vunpack.c.l.b16 %v1511
        %v1527 = vunpack.c.l.b16 %v1512
        %v1528 = vpack.c.b16 %v1525, %v1524
        %v1529 = vpack.c.b16 %v1527, %v1526
        %v1533 = vsel %vm899, %v1508, 0
        %1535 = vmatprep.subr.bf16.mxu0 0
        %1536 = vmatpush1.bf16.msra.mxu0 0
        %1537 = vmatprep.subr.bf16.mxu0 0
        %1538 = vmatpush1.bf16.msra.mxu0 0
        %1539 = vmatprep.subr.bf16.mxu0 0
        %1540 = vmatpush1.bf16.msra.mxu0 0
        %1541 = vmatprep.subr.bf16.mxu0 0
        %1542 = vmatpush1.bf16.msra.mxu0 0
        %1543 = vmatprep.subr.bf16.mxu0 0
        %1544 = vmatpush1.bf16.msra.mxu0 0
        %1545 = vmatprep.subr.bf16.mxu0 0
        %1546 = vmatpush1.bf16.msra.mxu0 0
        %1547 = vmatprep.subr.bf16.mxu0 0
        %1548 = vmatpush1.bf16.msra.mxu0 %v1529
        %1549 = vmatprep.subr.bf16.mxu0 0
        %1550 = vmatpush1.bf16.msra.mxu0 %v1528
        %1551 = vmatprep.subr.bf16.mxu0 0
        %1552 = vmatpush2.bf16.msra.mxu0 0
        %1553 = vmatprep.subr.bf16.mxu0 0
        %1554 = vmatpush2.bf16.msra.mxu0 0
        %1555 = vmatprep.subr.bf16.mxu0 0
        %1556 = vmatpush2.bf16.msra.mxu0 0
        %1557 = vmatprep.subr.bf16.mxu0 0
        %1558 = vmatpush2.bf16.msra.mxu0 0
        %1559 = vmatprep.subr.bf16.mxu0 0
        %1560 = vmatpush2.bf16.msra.mxu0 0
        %1561 = vmatprep.subr.bf16.mxu0 0
        %1562 = vmatpush2.bf16.msra.mxu0 0
        %1563 = vmatprep.subr.bf16.mxu0 0
        %1564 = vmatpush2.bf16.msra.mxu0 0
        %1565 = vmatprep.subr.bf16.mxu0 0
        %1566 = vmatpush2.bf16.msra.mxu0 0
        %1567 = vmatprep.mubr.bf16.mxu0 0
        %1568 = vmatmul.mubr.bf16.gmra.mxu0 %v1533
        %v1569 = vpop.f32.mrf.mxu0
        %v1570 = vadd.f32 %v1518, %v1569
        %v1571 = vpop.f32.mrf.mxu0
        %v1572 = vpop.f32.mrf.mxu0
        %v1573 = vpop.f32.mrf.mxu0
        %1574 = vdwg.mxu0
        %v1575 = vmul.f32 %v1570, 0.5
        %v1576 = vmul.f32 %v1570, 0.044715
        %v1577 = vmul.f32 %v1576, %v1570
        %v1578 = vmul.f32 %v1577, %v1570
        %v1579 = vadd.f32 %v1570, %v1578
        %v1580 = vmul.f32 %v1579, 0.7978846
        %v1581 = vtanh.pop %v1580
        %v1582 = vadd.f32 %v1581, 1.0
        %v1583 = vmul.f32 %v1575, %v1582
        %v1584 = vpack.c.bf16 %v1583, %v1583
        %v1585 = vld [vmem:[%s14] sm:$0xf]
        %v1586 = vld [vmem:[%s14 + $0x4] sm:$0xf]
        %v1587 = vld [vmem:[%s14 + $0x8] sm:$0xf]
        %v1588 = vld [vmem:[%s14 + $0xc] sm:$0xf]
        %v1589 = vld [vmem:[%s14 + $0x10] sm:$0xf]
        %v1590 = vld [vmem:[%s14 + $0x14] sm:$0xf]
        %v1591 = vld [vmem:[%s14 + $0x18] sm:$0xf]
        %v1592 = vld [vmem:[%s14 + $0x1c] sm:$0xf]
        %v1593 = vld [vmem:[%s15] sm:$0x1]
        %v1595 = vlaneseq
        %v1596 = vshrl.u32 %v1595, 7
        %v1597 = vsub.s32 0, %v1596
        %v1598 = vrot.slane %v1593, %v1597
        %v1608 = vunpack.c.l.b16 %v1585
        %v1609 = vunpack.c.l.b16 %v1586
        %v1610 = vunpack.c.l.b16 %v1587
        %v1611 = vunpack.c.l.b16 %v1588
        %v1612 = vunpack.c.l.b16 %v1589
        %v1613 = vunpack.c.l.b16 %v1590
        %v1614 = vunpack.c.l.b16 %v1591
        %v1615 = vunpack.c.l.b16 %v1592
        %v1616 = vpack.c.b16 %v1609, %v1608
        %v1617 = vpack.c.b16 %v1611, %v1610
        %v1618 = vpack.c.b16 %v1613, %v1612
        %v1619 = vpack.c.b16 %v1615, %v1614
        %vm1624 = vcmask 523264
        %v1626 = vsel %vm1624, %v1584, 0
        %1628 = vmatprep.subr.bf16.mxu0 0
        %1629 = vmatpush1.bf16.msra.mxu0 0
        %1630 = vmatprep.subr.bf16.mxu0 0
        %1631 = vmatpush1.bf16.msra.mxu0 0
        %1632 = vmatprep.subr.bf16.mxu0 0
        %1633 = vmatpush1.bf16.msra.mxu0 0
        %1634 = vmatprep.subr.bf16.mxu0 0
        %1635 = vmatpush1.bf16.msra.mxu0 0
        %1636 = vmatprep.subr.bf16.mxu0 0
        %1637 = vmatpush1.bf16.msra.mxu0 %v1619
        %1638 = vmatprep.subr.bf16.mxu0 0
        %1639 = vmatpush1.bf16.msra.mxu0 %v1618
        %1640 = vmatprep.subr.bf16.mxu0 0
        %1641 = vmatpush1.bf16.msra.mxu0 %v1617
        %1642 = vmatprep.subr.bf16.mxu0 0
        %1643 = vmatpush1.bf16.msra.mxu0 %v1616
        %1644 = vmatprep.subr.bf16.mxu0 0
        %1645 = vmatpush2.bf16.msra.mxu0 0
        %1646 = vmatprep.subr.bf16.mxu0 0
        %1647 = vmatpush2.bf16.msra.mxu0 0
        %1648 = vmatprep.subr.bf16.mxu0 0
        %1649 = vmatpush2.bf16.msra.mxu0 0
        %1650 = vmatprep.subr.bf16.mxu0 0
        %1651 = vmatpush2.bf16.msra.mxu0 0
        %1652 = vmatprep.subr.bf16.mxu0 0
        %1653 = vmatpush2.bf16.msra.mxu0 0
        %1654 = vmatprep.subr.bf16.mxu0 0
        %1655 = vmatpush2.bf16.msra.mxu0 0
        %1656 = vmatprep.subr.bf16.mxu0 0
        %1657 = vmatpush2.bf16.msra.mxu0 0
        %1658 = vmatprep.subr.bf16.mxu0 0
        %1659 = vmatpush2.bf16.msra.mxu0 0
        %1660 = vmatprep.mubr.bf16.mxu0 0
        %1661 = vmatmul.mubr.bf16.gmra.mxu0 %v1626
        %v1662 = vpop.f32.mrf.mxu0
        %v1663 = vadd.f32 %v1598, %v1662
        %v1664 = vpop.f32.mrf.mxu0
        %v1665 = vpop.f32.mrf.mxu0
        %v1666 = vpop.f32.mrf.mxu0
        %1667 = vdwg.mxu0
        %v1668 = vadd.f32 %v1663, %v1507
        %v1669 = vld [vmem:[%s16] sm:$0x1]
        %v1670 = vld [vmem:[%s17] sm:$0x1]
        %v1671 = vsel %vm899, %v1668, 0.0
        %1672 = vadd.xlane.f32.xlu0 %v1671
        %v1673 = vpop.xlane.xlu0 %1672
        %v1674 = vmul.f32 %v1673, %v1483
        %v1675 = vsub.f32 %v1668, %v1674
        %v1676 = vmul.f32 %v1675, %v1675
        %v1677 = vsel %vm899, %v1676, 0.0
        %1678 = vadd.xlane.f32.xlu0 %v1677
        %v1679 = vpop.xlane.xlu0 %1678
        %v1680 = vmul.f32 %v1679, %v1483
        %v1681 = vadd.f32 %v1680, 1e-12
        %v1682 = vrsqrt.pop %v1681
        %v1683 = vmul.f32 %v1675, %v1682
        %v1685 = vlaneseq
        %v1686 = vshrl.u32 %v1685, 7
        %v1687 = vsub.s32 0, %v1686
        %v1688 = vrot.slane %v1669, %v1687
        %v1690 = vmul.f32 %v1683, %v1688
        %v1692 = vlaneseq
        %v1693 = vshrl.u32 %v1692, 7
        %v1694 = vsub.s32 0, %v1693
        %v1695 = vrot.slane %v1670, %v1694
        %v1697 = vadd.f32 %v1690, %v1695
        %1698 = vst.msk [vmem:[%s693] sm:$0xff] %vm899, %v1697
        %s1699 = sand.u32 %s448, 1
        %s1700 = scalar_lea.sflag [#allocation6], %s1699
        %s1701 = sand.u32 %s448, 1
        %s1702 = smul.addr %s1701, 8
        %s1703 = scalar_lea.vmem [#allocation16], %s1702
        // Predicated region
        $region125: #{tpu_custom_call.1} parent=91 // pred_check
          %p1704 = pneg %p458
        $region126: #{tpu_custom_call.1} parent=91 // pred_check_branch
          %1706 = sbr.rel (%p1704) target = $region128
        $region127: #{tpu_custom_call.1} parent=91 // pred_region
          %s1708 = ssub.s32 128, 128
          %1709 = vsyncadd %s1700, %s1708
          %s1710 = sadd.s32 %s43, %s42
          %s1711 = smul.addr %s1710, 128
          %s1712 = scalar_lea.hbm %s18, %s1711
          %s1714 = sshll.u32 %s1703, 4
          %s1715 = int_to_ptr.vmem [resolvable:$true] %s1714
          %1717 = dma.vmem_to_hbm [thread:$0]  %s1715, 128, %s1712, %s1700
        $region128: #{tpu_custom_call.1} parent=91 // pred_fallthru
          _
      $region92: #{tpu_custom_call.1} parent=5 // pred_fallthru
        _
      %p1718 = scmp.le.s32.totalorder 2, %s33
      // Predicated region
      $region129: #{tpu_custom_call.1} parent=5 // pred_check
        %p1719 = pneg %p1718
      $region130: #{tpu_custom_call.1} parent=5 // pred_check_branch
        %1721 = sbr.rel (%p1719) target = $region132
      $region131: #{tpu_custom_call.1} parent=5 // pred_region
        %s1722 = ssub.s32 %s33, 2
        // Predicated region
        $region133: #{tpu_custom_call.1} parent=131 // pred_check
          %p1723 = pneg %p464
        $region134: #{tpu_custom_call.1} parent=131 // pred_check_branch
          %1725 = sbr.rel (%p1723) target = $region136
        $region135: #{tpu_custom_call.1} parent=131 // pred_region
          %s1726 = sand.u32 %s449, 1
          %s1727 = scalar_lea.sflag [#allocation6], %s1726
          %s1728 = sand.u32 %s449, 1
          %s1729 = smul.addr %s1728, 8
          %s1730 = scalar_lea.vmem [#allocation16], %s1729
          %1731 = dma.done %s1727, 128
        $region136: #{tpu_custom_call.1} parent=131 // pred_fallthru
          _
      $region132: #{tpu_custom_call.1} parent=5 // pred_fallthru
        _
    $region6: #{tpu_custom_call.1} parent=1 // loop_footer
      %s37 = sadd.s32 1, %s33
    $region7: #{tpu_custom_call.1} parent=1 // loop_footer_branch
      %32 = sbr.rel target = $region3
    $region8: #{tpu_custom_call.1} parent=1 // loop_exit
      _
    %1732 = vsyncpa [#allocation5], 1
    %s1733 = scalar_lea.sflag [#allocation5], 1
    %1734 = vsyncpa %s1733, 1
    %1735 = vsyncpa [#allocation8], 1
    %1736 = vsyncpa [#allocation11], 1
    %1737 = vsyncpa [#allocation14], 1
    %1738 = vsyncpa [#allocation6], 1
    %s1739 = scalar_lea.sflag [#allocation6], 1
    %1740 = vsyncpa %s1739, 1

</llo_original>
